<compile_context>
chip_gen: v6e
topology: v6e:2x2x1
jax: 0.10.0
libtpu: 0.0.40
codegen_flags: <defaults>
</compile_context>

<pallas_src>
import functools

import jax
import jax.numpy as jnp
from jax.experimental import pallas as pl
from jax.experimental.pallas import tpu as pltpu


# ---------------------------------------------------------------------------
# small in-kernel helpers
# ---------------------------------------------------------------------------
def _layer_norm(x, w, b, eps=1e-5):
    mu = jnp.mean(x, axis=-1, keepdims=True)
    xc = x - mu
    var = jnp.mean(xc * xc, axis=-1, keepdims=True)
    return xc * jax.lax.rsqrt(var + eps) * w + b


def _gelu_tanh(x):
    # tanh-approximate GELU: the tanh goes to the (otherwise idle) EUP slot.
    c = 0.7978845608028654  # sqrt(2/pi)
    return 0.5 * x * (1.0 + jnp.tanh(c * (x + 0.044715 * x * x * x)))


# ---------------------------------------------------------------------------
# Fused AttentionBlock kernel: one grid step = Bt batch elements
# ---------------------------------------------------------------------------
def _attention_block_kernel(
    xk_ref, xq_ref, pp_ref,
    w_q_ref, w_k_ref, w_v_ref, w_proj_ref, w_fc1_ref, w_fc2_ref,
    o_ref, *, num_heads, slots):
    f32, bf16 = jnp.float32, jnp.bfloat16
    H = num_heads
    Bt, Nk, Ck = xk_ref.shape
    _, Nq, Cq = xq_ref.shape
    D = w_proj_ref.shape[2]

    def param(name):
        off, n = slots[name]                      # static offsets (128-aligned)
        return pp_ref[:, off:off + n]             # (1, n) f32, broadcasts over rows

    # ---- norm1_k / norm1_q (f32, whole (Bt, N, C) block) ---------------------
    xk_n = _layer_norm(xk_ref[...].astype(f32), param("ln_k_w"), param("ln_k_b"))
    xq_n = _layer_norm(xq_ref[...].astype(f32), param("ln_q_w"), param("ln_q_b"))

    # ---- head-major q/k/v projections (qkv_bias=False -> no bias adds) ------
    # Replicate activations across heads and the (host-side head-major) weights
    # across the batch tile so one batched matmul (batch = Bt*H) lands directly
    # in head-major layout: no lane slicing, no stacks, no transposes.
    def heads_batched(x):                         # (Bt, n, c) -> (Bt*H, n, c) bf16
        b, n, c = x.shape
        xb = jnp.broadcast_to(x.astype(bf16)[:, None], (b, H, n, c))
        return xb.reshape(b * H, n, c)

    def tile_w(w_ref):                            # (H, c, d) -> (Bt*H, c, d) bf16
        w = w_ref[...]
        wb = jnp.broadcast_to(w[None], (Bt,) + w.shape)
        return wb.reshape((Bt * H,) + w.shape[1:])

    xq_h = heads_batched(xq_n)                    # (Bt*H, Nq, Cq)
    xk_h = heads_batched(xk_n)                    # (Bt*H, Nk, Ck)

    # softmax scale is pre-folded into w_q host-side
    qh = jnp.einsum("bnc,bcd->bnd", xq_h, tile_w(w_q_ref),
                    preferred_element_type=f32).astype(bf16)   # (Bt*H, Nq, hd)
    kh = jnp.einsum("bnc,bcd->bnd", xk_h, tile_w(w_k_ref),
                    preferred_element_type=f32).astype(bf16)   # (Bt*H, Nk, hd)
    vh = jnp.einsum("bnc,bcd->bnd", xk_h, tile_w(w_v_ref),
                    preferred_element_type=f32).astype(bf16)   # (Bt*H, Nk, hd)

    # ---- attention core, batched over (Bt*H) --------------------------------
    s = jnp.einsum("bqd,bkd->bqk", qh, kh,
                   preferred_element_type=f32)                 # (Bt*H, Nq, Nk)
    m = jnp.max(s, axis=-1, keepdims=True)
    e = jnp.exp(s - m)
    p = e * pl.reciprocal(jnp.sum(e, axis=-1, keepdims=True), approx=True)
    oh = jnp.einsum("bqk,bkd->bqd", p.astype(bf16), vh,
                    preferred_element_type=f32)                # (Bt*H, Nq, hd)

    # ---- head merge fused into the output projection ------------------------
    # w_proj_ref is (H, hd, D) host-side; sum over heads == concat-then-matmul.
    ctx = jnp.einsum("bqd,bde->bqe", oh.astype(bf16), tile_w(w_proj_ref),
                     preferred_element_type=f32)               # (Bt*H, Nq, D)
    attn = jnp.sum(ctx.reshape(Bt, H, Nq, D), axis=1) + param("b_proj")  # (Bt,Nq,D)

    # ---- residual MLP branch on row-folded 2-D tiles -------------------------
    x2 = attn.reshape(Bt * Nq, D)                 # tile-aligned fold (Nq % 8 == 0)
    xn = _layer_norm(x2, param("ln2_w"), param("ln2_b"))
    h1 = jnp.dot(xn.astype(bf16), w_fc1_ref[...],
                 preferred_element_type=f32) + param("b_fc1")
    h1 = _gelu_tanh(h1)
    h2 = jnp.dot(h1.astype(bf16), w_fc2_ref[...],
                 preferred_element_type=f32) + param("b_fc2")

    out = x2 + h2                                 # (Bt*Nq, D)
    o_ref[...] = out.reshape(Bt, Nq, D).astype(o_ref.dtype)


# ---------------------------------------------------------------------------
# host-side helpers
# ---------------------------------------------------------------------------
def _pack_params(named):
    """Pack 1-D params into one (1, P) f32 buffer, each padded to 128 lanes."""
    LANE = 128
    parts, slots, off = [], {}, 0
    for name, v in named:
        v = jnp.asarray(v, jnp.float32).reshape(-1)
        n = int(v.shape[0])
        pad = (-n) % LANE
        parts.append(jnp.pad(v, (0, pad)))
        slots[name] = (off, n)
        off += n + pad
    return jnp.concatenate(parts).reshape(1, -1), slots


def _pick_block_b(B):
    """Largest divisor of B that is <= 8 and leaves >= 2 grid steps (v7x: 2 TCs)."""
    best = 1
    for d in range(1, min(B, 8) + 1):
        if B % d == 0 and (B == 1 or B // d >= 2):
            best = d
    return best


# ---------------------------------------------------------------------------
# Wrapper: single fused pallas_call, grid = (B // Bt,)
# ---------------------------------------------------------------------------
def attention_block_forward(xk, xq, params, num_heads, scale, block_b=None):
    B, Nk, Ck = xk.shape
    _, Nq, Cq = xq.shape
    D = params["w_proj"].shape[1]
    H = num_heads
    hd = D // H

    Bt = block_b if block_b is not None else _pick_block_b(B)
    assert B % Bt == 0

    bf16 = jnp.bfloat16

    # ---- host-side weight prep: head-major layouts, bf16, scale folded ------
    w_q_h = (params["w_q"] * scale).reshape(Cq, H, hd).transpose(1, 0, 2).astype(bf16)
    w_kv = params["w_kv"]
    w_k_h = w_kv[:, :D].reshape(Ck, H, hd).transpose(1, 0, 2).astype(bf16)
    w_v_h = w_kv[:, D:].reshape(Ck, H, hd).transpose(1, 0, 2).astype(bf16)
    w_proj_h = params["w_proj"].reshape(H, hd, D).astype(bf16)
    w_fc1 = params["w_fc1"].astype(bf16)
    w_fc2 = params["w_fc2"].astype(bf16)

    packed, slots = _pack_params([
        ("ln_k_w", params["ln_k_w"]), ("ln_k_b", params["ln_k_b"]),
        ("ln_q_w", params["ln_q_w"]), ("ln_q_b", params["ln_q_b"]),
        ("b_proj", params["b_proj"]),
        ("ln2_w", params["ln2_w"]), ("ln2_b", params["ln2_b"]),
        ("b_fc1", params["b_fc1"]), ("b_fc2", params["b_fc2"]),
    ])

    kernel = functools.partial(_attention_block_kernel, num_heads=H, slots=slots)

    def full(shape):                 # whole (un-batched) parameter block
        return pl.BlockSpec(shape, lambda b: (0,) * len(shape))

    return pl.pallas_call(
        kernel,
        out_shape=jax.ShapeDtypeStruct((B, Nq, D), jnp.float32),
        grid_spec=pltpu.PrefetchScalarGridSpec(
            num_scalar_prefetch=0,
            grid=(B // Bt,),
            in_specs=[
                pl.BlockSpec((Bt, Nk, Ck), lambda b: (b, 0, 0)),   # xk
                pl.BlockSpec((Bt, Nq, Cq), lambda b: (b, 0, 0)),   # xq
                full(packed.shape),                                 # packed vectors
                full(w_q_h.shape), full(w_k_h.shape), full(w_v_h.shape),
                full(w_proj_h.shape), full(w_fc1.shape), full(w_fc2.shape),
            ],
            out_specs=pl.BlockSpec((Bt, Nq, D), lambda b: (b, 0, 0)),
        ),
        compiler_params=pltpu.CompilerParams(
            dimension_semantics=("parallel",),        # >= 2 steps -> both v7x TCs
            vmem_limit_bytes=32 * 1024 * 1024,        # explicit (v7x-safe) limit
        ),
    )(xk, xq, packed, w_q_h, w_k_h, w_v_h, w_proj_h, w_fc1, w_fc2)


# ---------------------------------------------------------------------------
# Pure-JAX f32 reference (faithful to the PyTorch module) for correctness
# ---------------------------------------------------------------------------
def attention_block_ref(xk, xq, params, num_heads, scale):
    def ln(x, w, b, eps=1e-5):
        mu = jnp.mean(x, axis=-1, keepdims=True)
        var = jnp.mean((x - mu) ** 2, axis=-1, keepdims=True)
        return (x - mu) / jnp.sqrt(var + eps) * w + b

    B, Nk, Ck = xk.shape
    _, Nq, Cq = xq.shape
    D = params["w_q"].shape[1]
    H = num_heads
    hd = D // H

    xk_n = ln(xk, params["ln_k_w"], params["ln_k_b"])
    xq_n = ln(xq, params["ln_q_w"], params["ln_q_b"])
    q = (xq_n @ params["w_q"]).reshape(B, Nq, H, hd).transpose(0, 2, 1, 3)
    kv = (xk_n @ params["w_kv"]).reshape(B, Nk, 2, H, hd).transpose(2, 0, 3, 1, 4)
    k, v = kv[0], kv[1]
    s = jnp.einsum("bhqd,bhkd->bhqk", q, k) * scale
    p = jax.nn.softmax(s, axis=-1)
    o = jnp.einsum("bhqk,bhkd->bhqd", p, v).transpose(0, 2, 1, 3).reshape(B, Nq, D)
    attn_out = o @ params["w_proj"] + params["b_proj"]
    xn = ln(attn_out, params["ln2_w"], params["ln2_b"])
    h1 = jax.nn.gelu(xn @ params["w_fc1"] + params["b_fc1"], approximate=False)
    mlp_out = h1 @ params["w_fc2"] + params["b_fc2"]
    return attn_out + mlp_out


if __name__ == "__main__":
    key = jax.random.PRNGKey(0)
    B, Nk, Nq = 2, 16, 8
    in_dim_k, in_dim_q, out_dim, num_heads = 32, 32, 64, 8
    mlp_ratio = 2.0
    hidden = int(out_dim * mlp_ratio)
    head_dim = out_dim // num_heads
    scale = head_dim ** -0.5

    keys = jax.random.split(key, 16)
    xk = jax.random.normal(keys[0], (B, Nk, in_dim_k), jnp.float32)
    xq = jax.random.normal(keys[1], (B, Nq, in_dim_q), jnp.float32)

    # deterministic synthetic parameters; linear weights stored as (C_in, C_out)
    # (i.e. the transpose of the torch nn.Linear weight)
    params = {
        "ln_k_w": 1.0 + 0.1 * jax.random.normal(keys[2], (in_dim_k,), jnp.float32),
        "ln_k_b": 0.05 * jax.random.normal(keys[3], (in_dim_k,), jnp.float32),
        "ln_q_w": 1.0 + 0.1 * jax.random.normal(keys[4], (in_dim_q,), jnp.float32),
        "ln_q_b": 0.05 * jax.random.normal(keys[5], (in_dim_q,), jnp.float32),
        "w_q": 0.05 * jax.random.normal(keys[6], (in_dim_q, out_dim), jnp.float32),
        "w_kv": 0.05 * jax.random.normal(keys[7], (in_dim_k, 2 * out_dim), jnp.float32),
        "w_proj": 0.05 * jax.random.normal(keys[8], (out_dim, out_dim), jnp.float32),
        "b_proj": 0.05 * jax.random.normal(keys[9], (out_dim,), jnp.float32),
        "ln2_w": 1.0 + 0.1 * jax.random.normal(keys[10], (out_dim,), jnp.float32),
        "ln2_b": 0.05 * jax.random.normal(keys[11], (out_dim,), jnp.float32),
        "w_fc1": 0.05 * jax.random.normal(keys[12], (out_dim, hidden), jnp.float32),
        "b_fc1": 0.05 * jax.random.normal(keys[13], (hidden,), jnp.float32),
        "w_fc2": 0.05 * jax.random.normal(keys[14], (hidden, out_dim), jnp.float32),
        "b_fc2": 0.05 * jax.random.normal(keys[15], (out_dim,), jnp.float32),
    }

    out = attention_block_forward(xk, xq, params, num_heads, scale)
    out = jax.block_until_ready(out)

    ref = attention_block_ref(xk, xq, params, num_heads, scale)
    assert out.shape == (B, Nq, out_dim)
    max_err = float(jnp.max(jnp.abs(out - ref)))
    # tolerance relaxed vs. the f32/erf reference: bf16 MXU operands,
    # approx reciprocal softmax, and tanh-approximate GELU (per perf review).
    assert jnp.allclose(out, ref, atol=3e-2, rtol=3e-2), f"max abs err {max_err}"

    print("KERNEL_OK")
</pallas_src>

<mosaic_0001>
module attributes {stable_mosaic.version = 11 : i64} {
  func.func @_attention_block_kernel(%arg0: i32, %arg1: memref<1x16x32xf32, #tpu.memory_space<vmem>>, %arg2: memref<1x8x32xf32, #tpu.memory_space<vmem>>, %arg3: memref<1x1152xf32, #tpu.memory_space<vmem>>, %arg4: memref<8x32x8xbf16, #tpu.memory_space<vmem>>, %arg5: memref<8x32x8xbf16, #tpu.memory_space<vmem>>, %arg6: memref<8x32x8xbf16, #tpu.memory_space<vmem>>, %arg7: memref<8x8x64xbf16, #tpu.memory_space<vmem>>, %arg8: memref<64x128xbf16, #tpu.memory_space<vmem>>, %arg9: memref<128x64xbf16, #tpu.memory_space<vmem>>, %arg10: memref<1x8x64xf32, #tpu.memory_space<vmem>>) attributes {dimension_semantics = [#tpu.dimension_semantics<parallel>], iteration_bounds = array<i64: 2>, scalar_prefetch = 0 : i64, scratch_operands = 0 : i64, tpu.core_type = #tpu.core_type<tc>, window_params = [{transform_indices = @transform_0, window_bounds = array<i64: 1, 16, 32>}, {transform_indices = @transform_1, window_bounds = array<i64: 1, 8, 32>}, {pipeline_mode = #tpu.pipeline_mode<synchronous>, transform_indices = @transform_2, window_bounds = array<i64: 1, 1152>}, {pipeline_mode = #tpu.pipeline_mode<synchronous>, transform_indices = @transform_3, window_bounds = array<i64: 8, 32, 8>}, {pipeline_mode = #tpu.pipeline_mode<synchronous>, transform_indices = @transform_4, window_bounds = array<i64: 8, 32, 8>}, {pipeline_mode = #tpu.pipeline_mode<synchronous>, transform_indices = @transform_5, window_bounds = array<i64: 8, 32, 8>}, {pipeline_mode = #tpu.pipeline_mode<synchronous>, transform_indices = @transform_6, window_bounds = array<i64: 8, 8, 64>}, {pipeline_mode = #tpu.pipeline_mode<synchronous>, transform_indices = @transform_7, window_bounds = array<i64: 64, 128>}, {pipeline_mode = #tpu.pipeline_mode<synchronous>, transform_indices = @transform_8, window_bounds = array<i64: 128, 64>}, {transform_indices = @transform_9, window_bounds = array<i64: 1, 8, 64>}]} {
    %c0 = arith.constant 0 : index
    %c0_0 = arith.constant 0 : index
    %c0_1 = arith.constant 0 : index
    %0 = vector.load %arg1[%c0, %c0_0, %c0_1] : memref<1x16x32xf32, #tpu.memory_space<vmem>>, vector<1x16x32xf32>
    %c0_2 = arith.constant 0 : index
    %c0_3 = arith.constant 0 : index
    %1 = vector.load %arg3[%c0_2, %c0_3] : memref<1x1152xf32, #tpu.memory_space<vmem>>, vector<1x32xf32>
    %c0_4 = arith.constant 0 : index
    %c128 = arith.constant 128 : index
    %2 = vector.load %arg3[%c0_4, %c128] : memref<1x1152xf32, #tpu.memory_space<vmem>>, vector<1x32xf32>
    %cst = arith.constant dense<0.000000e+00> : vector<1x16xf32>
    %3 = vector.multi_reduction <add>, %0, %cst [2] : vector<1x16x32xf32> to vector<1x16xf32>
    %4 = vector.shape_cast %3 : vector<1x16xf32> to vector<1x16x1xf32>
    %cst_5 = arith.constant 3.200000e+01 : f32
    %5 = vector.broadcast %cst_5 : f32 to vector<1x16x1xf32>
    %6 = arith.divf %4, %5 : vector<1x16x1xf32>
    %7 = vector.broadcast %6 : vector<1x16x1xf32> to vector<1x16x32xf32>
    %8 = arith.subf %0, %7 : vector<1x16x32xf32>
    %9 = arith.mulf %8, %8 : vector<1x16x32xf32>
    %cst_6 = arith.constant dense<0.000000e+00> : vector<1x16xf32>
    %10 = vector.multi_reduction <add>, %9, %cst_6 [2] : vector<1x16x32xf32> to vector<1x16xf32>
    %11 = vector.shape_cast %10 : vector<1x16xf32> to vector<1x16x1xf32>
    %cst_7 = arith.constant 3.200000e+01 : f32
    %12 = vector.broadcast %cst_7 : f32 to vector<1x16x1xf32>
    %13 = arith.divf %11, %12 : vector<1x16x1xf32>
    %cst_8 = arith.constant 9.99999974E-6 : f32
    %14 = vector.broadcast %cst_8 : f32 to vector<1x16x1xf32>
    %15 = arith.addf %13, %14 : vector<1x16x1xf32>
    %16 = math.rsqrt %15 : vector<1x16x1xf32>
    %17 = vector.broadcast %16 : vector<1x16x1xf32> to vector<1x16x32xf32>
    %18 = arith.mulf %8, %17 : vector<1x16x32xf32>
    %19 = vector.shape_cast %1 : vector<1x32xf32> to vector<1x1x32xf32>
    %20 = vector.broadcast %19 : vector<1x1x32xf32> to vector<1x16x32xf32>
    %21 = arith.mulf %18, %20 : vector<1x16x32xf32>
    %22 = vector.shape_cast %2 : vector<1x32xf32> to vector<1x1x32xf32>
    %23 = vector.broadcast %22 : vector<1x1x32xf32> to vector<1x16x32xf32>
    %24 = arith.addf %21, %23 : vector<1x16x32xf32>
    %c0_9 = arith.constant 0 : index
    %c0_10 = arith.constant 0 : index
    %c0_11 = arith.constant 0 : index
    %25 = vector.load %arg2[%c0_9, %c0_10, %c0_11] : memref<1x8x32xf32, #tpu.memory_space<vmem>>, vector<1x8x32xf32>
    %c0_12 = arith.constant 0 : index
    %c256 = arith.constant 256 : index
    %26 = vector.load %arg3[%c0_12, %c256] : memref<1x1152xf32, #tpu.memory_space<vmem>>, vector<1x32xf32>
    %c0_13 = arith.constant 0 : index
    %c384 = arith.constant 384 : index
    %27 = vector.load %arg3[%c0_13, %c384] : memref<1x1152xf32, #tpu.memory_space<vmem>>, vector<1x32xf32>
    %cst_14 = arith.constant dense<0.000000e+00> : vector<1x8xf32>
    %28 = vector.multi_reduction <add>, %25, %cst_14 [2] : vector<1x8x32xf32> to vector<1x8xf32>
    %29 = vector.shape_cast %28 : vector<1x8xf32> to vector<1x8x1xf32>
    %cst_15 = arith.constant 3.200000e+01 : f32
    %30 = vector.broadcast %cst_15 : f32 to vector<1x8x1xf32>
    %31 = arith.divf %29, %30 : vector<1x8x1xf32>
    %32 = vector.broadcast %31 : vector<1x8x1xf32> to vector<1x8x32xf32>
    %33 = arith.subf %25, %32 : vector<1x8x32xf32>
    %34 = arith.mulf %33, %33 : vector<1x8x32xf32>
    %cst_16 = arith.constant dense<0.000000e+00> : vector<1x8xf32>
    %35 = vector.multi_reduction <add>, %34, %cst_16 [2] : vector<1x8x32xf32> to vector<1x8xf32>
    %36 = vector.shape_cast %35 : vector<1x8xf32> to vector<1x8x1xf32>
    %cst_17 = arith.constant 3.200000e+01 : f32
    %37 = vector.broadcast %cst_17 : f32 to vector<1x8x1xf32>
    %38 = arith.divf %36, %37 : vector<1x8x1xf32>
    %cst_18 = arith.constant 9.99999974E-6 : f32
    %39 = vector.broadcast %cst_18 : f32 to vector<1x8x1xf32>
    %40 = arith.addf %38, %39 : vector<1x8x1xf32>
    %41 = math.rsqrt %40 : vector<1x8x1xf32>
    %42 = vector.broadcast %41 : vector<1x8x1xf32> to vector<1x8x32xf32>
    %43 = arith.mulf %33, %42 : vector<1x8x32xf32>
    %44 = vector.shape_cast %26 : vector<1x32xf32> to vector<1x1x32xf32>
    %45 = vector.broadcast %44 : vector<1x1x32xf32> to vector<1x8x32xf32>
    %46 = arith.mulf %43, %45 : vector<1x8x32xf32>
    %47 = vector.shape_cast %27 : vector<1x32xf32> to vector<1x1x32xf32>
    %48 = vector.broadcast %47 : vector<1x1x32xf32> to vector<1x8x32xf32>
    %49 = arith.addf %46, %48 : vector<1x8x32xf32>
    %50 = arith.truncf %49 : vector<1x8x32xf32> to vector<1x8x32xbf16>
    %51 = vector.shape_cast %50 : vector<1x8x32xbf16> to vector<1x1x8x32xbf16>
    %52 = vector.shape_cast %51 : vector<1x1x8x32xbf16> to vector<1x1x8x32xbf16>
    %53 = vector.broadcast %52 : vector<1x1x8x32xbf16> to vector<1x8x8x32xbf16>
    %54 = vector.shape_cast %53 : vector<1x8x8x32xbf16> to vector<8x8x32xbf16>
    %55 = arith.truncf %24 : vector<1x16x32xf32> to vector<1x16x32xbf16>
    %56 = vector.shape_cast %55 : vector<1x16x32xbf16> to vector<1x1x16x32xbf16>
    %57 = vector.shape_cast %56 : vector<1x1x16x32xbf16> to vector<1x1x16x32xbf16>
    %58 = vector.broadcast %57 : vector<1x1x16x32xbf16> to vector<1x8x16x32xbf16>
    %59 = vector.shape_cast %58 : vector<1x8x16x32xbf16> to vector<8x16x32xbf16>
    %c0_19 = arith.constant 0 : index
    %c0_20 = arith.constant 0 : index
    %c0_21 = arith.constant 0 : index
    %60 = vector.load %arg4[%c0_19, %c0_20, %c0_21] : memref<8x32x8xbf16, #tpu.memory_space<vmem>>, vector<8x32x8xbf16>
    %61 = vector.shape_cast %60 : vector<8x32x8xbf16> to vector<1x8x32x8xbf16>
    %62 = vector.shape_cast %61 : vector<1x8x32x8xbf16> to vector<8x32x8xbf16>
    "tpu.trace_start"() <{level = 10 : i32, message = "bnc,bcd->bnd"}> : () -> ()
    %cst_22 = arith.constant dense<0.000000e+00> : vector<8x8x8xf32>
    %63 = tpu.matmul %54, %62, %cst_22 {dimension_numbers = #tpu.dot_dimension_numbers<[2], [1], [1], [2], [0, 0, 0, 1, 1, 2], [0], [0]>} : vector<8x8x32xbf16>, vector<8x32x8xbf16>, vector<8x8x8xf32> -> vector<8x8x8xf32>
    "tpu.trace_stop"() : () -> ()
    %64 = arith.truncf %63 : vector<8x8x8xf32> to vector<8x8x8xbf16>
    %c0_23 = arith.constant 0 : index
    %c0_24 = arith.constant 0 : index
    %c0_25 = arith.constant 0 : index
    %65 = vector.load %arg5[%c0_23, %c0_24, %c0_25] : memref<8x32x8xbf16, #tpu.memory_space<vmem>>, vector<8x32x8xbf16>
    %66 = vector.shape_cast %65 : vector<8x32x8xbf16> to vector<1x8x32x8xbf16>
    %67 = vector.shape_cast %66 : vector<1x8x32x8xbf16> to vector<8x32x8xbf16>
    "tpu.trace_start"() <{level = 10 : i32, message = "bnc,bcd->bnd"}> : () -> ()
    %cst_26 = arith.constant dense<0.000000e+00> : vector<8x16x8xf32>
    %68 = tpu.matmul %59, %67, %cst_26 {dimension_numbers = #tpu.dot_dimension_numbers<[2], [1], [1], [2], [0, 0, 0, 1, 1, 2], [0], [0]>} : vector<8x16x32xbf16>, vector<8x32x8xbf16>, vector<8x16x8xf32> -> vector<8x16x8xf32>
    "tpu.trace_stop"() : () -> ()
    %69 = arith.truncf %68 : vector<8x16x8xf32> to vector<8x16x8xbf16>
    %c0_27 = arith.constant 0 : index
    %c0_28 = arith.constant 0 : index
    %c0_29 = arith.constant 0 : index
    %70 = vector.load %arg6[%c0_27, %c0_28, %c0_29] : memref<8x32x8xbf16, #tpu.memory_space<vmem>>, vector<8x32x8xbf16>
    %71 = vector.shape_cast %70 : vector<8x32x8xbf16> to vector<1x8x32x8xbf16>
    %72 = vector.shape_cast %71 : vector<1x8x32x8xbf16> to vector<8x32x8xbf16>
    "tpu.trace_start"() <{level = 10 : i32, message = "bnc,bcd->bnd"}> : () -> ()
    %cst_30 = arith.constant dense<0.000000e+00> : vector<8x16x8xf32>
    %73 = tpu.matmul %59, %72, %cst_30 {dimension_numbers = #tpu.dot_dimension_numbers<[2], [1], [1], [2], [0, 0, 0, 1, 1, 2], [0], [0]>} : vector<8x16x32xbf16>, vector<8x32x8xbf16>, vector<8x16x8xf32> -> vector<8x16x8xf32>
    "tpu.trace_stop"() : () -> ()
    %74 = arith.truncf %73 : vector<8x16x8xf32> to vector<8x16x8xbf16>
    "tpu.trace_start"() <{level = 10 : i32, message = "bqd,bkd->bqk"}> : () -> ()
    %cst_31 = arith.constant dense<0.000000e+00> : vector<8x8x16xf32>
    %75 = tpu.matmul %64, %69, %cst_31 {dimension_numbers = #tpu.dot_dimension_numbers<[2], [2], [1], [1], [0, 0, 0, 1, 1, 1], [0], [0]>} : vector<8x8x8xbf16>, vector<8x16x8xbf16>, vector<8x8x16xf32> -> vector<8x8x16xf32>
    "tpu.trace_stop"() : () -> ()
    %cst_32 = arith.constant dense<0xFF800000> : vector<8x8xf32>
    %76 = vector.multi_reduction <maximumf>, %75, %cst_32 [2] : vector<8x8x16xf32> to vector<8x8xf32>
    %77 = vector.shape_cast %76 : vector<8x8xf32> to vector<8x8x1xf32>
    %78 = vector.broadcast %77 : vector<8x8x1xf32> to vector<8x8x16xf32>
    %79 = arith.subf %75, %78 : vector<8x8x16xf32>
    %80 = math.exp %79 : vector<8x8x16xf32>
    %cst_33 = arith.constant dense<0.000000e+00> : vector<8x8xf32>
    %81 = vector.multi_reduction <add>, %80, %cst_33 [2] : vector<8x8x16xf32> to vector<8x8xf32>
    %82 = vector.shape_cast %81 : vector<8x8xf32> to vector<8x8x1xf32>
    %83 = tpu.reciprocal %82 {approx = true} : vector<8x8x1xf32> -> vector<8x8x1xf32>
    %84 = vector.broadcast %83 : vector<8x8x1xf32> to vector<8x8x16xf32>
    %85 = arith.mulf %80, %84 : vector<8x8x16xf32>
    %86 = arith.truncf %85 : vector<8x8x16xf32> to vector<8x8x16xbf16>
    "tpu.trace_start"() <{level = 10 : i32, message = "bqk,bkd->bqd"}> : () -> ()
    %cst_34 = arith.constant dense<0.000000e+00> : vector<8x8x8xf32>
    %87 = tpu.matmul %86, %74, %cst_34 {dimension_numbers = #tpu.dot_dimension_numbers<[2], [1], [1], [2], [0, 0, 0, 1, 1, 2], [0], [0]>} : vector<8x8x16xbf16>, vector<8x16x8xbf16>, vector<8x8x8xf32> -> vector<8x8x8xf32>
    "tpu.trace_stop"() : () -> ()
    %88 = arith.truncf %87 : vector<8x8x8xf32> to vector<8x8x8xbf16>
    %c0_35 = arith.constant 0 : index
    %c0_36 = arith.constant 0 : index
    %c0_37 = arith.constant 0 : index
    %89 = vector.load %arg7[%c0_35, %c0_36, %c0_37] : memref<8x8x64xbf16, #tpu.memory_space<vmem>>, vector<8x8x64xbf16>
    %90 = vector.shape_cast %89 : vector<8x8x64xbf16> to vector<1x8x8x64xbf16>
    %91 = vector.shape_cast %90 : vector<1x8x8x64xbf16> to vector<8x8x64xbf16>
    "tpu.trace_start"() <{level = 10 : i32, message = "bqd,bde->bqe"}> : () -> ()
    %cst_38 = arith.constant dense<0.000000e+00> : vector<8x8x64xf32>
    %92 = tpu.matmul %88, %91, %cst_38 {dimension_numbers = #tpu.dot_dimension_numbers<[2], [1], [1], [2], [0, 0, 0, 1, 1, 2], [0], [0]>} : vector<8x8x8xbf16>, vector<8x8x64xbf16>, vector<8x8x64xf32> -> vector<8x8x64xf32>
    "tpu.trace_stop"() : () -> ()
    %93 = vector.shape_cast %92 : vector<8x8x64xf32> to vector<1x8x8x64xf32>
    %cst_39 = arith.constant dense<0.000000e+00> : vector<1x8x64xf32>
    %94 = vector.multi_reduction <add>, %93, %cst_39 [1] : vector<1x8x8x64xf32> to vector<1x8x64xf32>
    %c0_40 = arith.constant 0 : index
    %c512 = arith.constant 512 : index
    %95 = vector.load %arg3[%c0_40, %c512] : memref<1x1152xf32, #tpu.memory_space<vmem>>, vector<1x64xf32>
    %96 = vector.shape_cast %95 : vector<1x64xf32> to vector<1x1x64xf32>
    %97 = vector.broadcast %96 : vector<1x1x64xf32> to vector<1x8x64xf32>
    %98 = arith.addf %94, %97 : vector<1x8x64xf32>
    %99 = vector.shape_cast %98 : vector<1x8x64xf32> to vector<8x64xf32>
    %c0_41 = arith.constant 0 : index
    %c640 = arith.constant 640 : index
    %100 = vector.load %arg3[%c0_41, %c640] : memref<1x1152xf32, #tpu.memory_space<vmem>>, vector<1x64xf32>
    %c0_42 = arith.constant 0 : index
    %c768 = arith.constant 768 : index
    %101 = vector.load %arg3[%c0_42, %c768] : memref<1x1152xf32, #tpu.memory_space<vmem>>, vector<1x64xf32>
    %cst_43 = arith.constant dense<0.000000e+00> : vector<8xf32>
    %102 = vector.multi_reduction <add>, %99, %cst_43 [1] : vector<8x64xf32> to vector<8xf32>
    %103 = vector.shape_cast %102 : vector<8xf32> to vector<8x1xf32>
    %cst_44 = arith.constant 6.400000e+01 : f32
    %104 = vector.broadcast %cst_44 : f32 to vector<8x1xf32>
    %105 = arith.divf %103, %104 : vector<8x1xf32>
    %106 = vector.broadcast %105 : vector<8x1xf32> to vector<8x64xf32>
    %107 = arith.subf %99, %106 : vector<8x64xf32>
    %108 = arith.mulf %107, %107 : vector<8x64xf32>
    %cst_45 = arith.constant dense<0.000000e+00> : vector<8xf32>
    %109 = vector.multi_reduction <add>, %108, %cst_45 [1] : vector<8x64xf32> to vector<8xf32>
    %110 = vector.shape_cast %109 : vector<8xf32> to vector<8x1xf32>
    %cst_46 = arith.constant 6.400000e+01 : f32
    %111 = vector.broadcast %cst_46 : f32 to vector<8x1xf32>
    %112 = arith.divf %110, %111 : vector<8x1xf32>
    %cst_47 = arith.constant 9.99999974E-6 : f32
    %113 = vector.broadcast %cst_47 : f32 to vector<8x1xf32>
    %114 = arith.addf %112, %113 : vector<8x1xf32>
    %115 = math.rsqrt %114 : vector<8x1xf32>
    %116 = vector.broadcast %115 : vector<8x1xf32> to vector<8x64xf32>
    %117 = arith.mulf %107, %116 : vector<8x64xf32>
    %118 = vector.broadcast %100 : vector<1x64xf32> to vector<8x64xf32>
    %119 = arith.mulf %117, %118 : vector<8x64xf32>
    %120 = vector.broadcast %101 : vector<1x64xf32> to vector<8x64xf32>
    %121 = arith.addf %119, %120 : vector<8x64xf32>
    %122 = arith.truncf %121 : vector<8x64xf32> to vector<8x64xbf16>
    %c0_48 = arith.constant 0 : index
    %c0_49 = arith.constant 0 : index
    %123 = vector.load %arg8[%c0_48, %c0_49] : memref<64x128xbf16, #tpu.memory_space<vmem>>, vector<64x128xbf16>
    %cst_50 = arith.constant dense<0.000000e+00> : vector<8x128xf32>
    %124 = tpu.matmul %122, %123, %cst_50 {dimension_numbers = #tpu.dot_dimension_numbers<[1], [0], [0], [1], [0, 0, 1, 1], [], []>} : vector<8x64xbf16>, vector<64x128xbf16>, vector<8x128xf32> -> vector<8x128xf32>
    %c0_51 = arith.constant 0 : index
    %c896 = arith.constant 896 : index
    %125 = vector.load %arg3[%c0_51, %c896] : memref<1x1152xf32, #tpu.memory_space<vmem>>, vector<1x128xf32>
    %126 = vector.broadcast %125 : vector<1x128xf32> to vector<8x128xf32>
    %127 = arith.addf %124, %126 : vector<8x128xf32>
    %cst_52 = arith.constant 5.000000e-01 : f32
    %128 = vector.broadcast %cst_52 : f32 to vector<8x128xf32>
    %129 = arith.mulf %128, %127 : vector<8x128xf32>
    %cst_53 = arith.constant 4.471500e-02 : f32
    %130 = vector.broadcast %cst_53 : f32 to vector<8x128xf32>
    %131 = arith.mulf %130, %127 : vector<8x128xf32>
    %132 = arith.mulf %131, %127 : vector<8x128xf32>
    %133 = arith.mulf %132, %127 : vector<8x128xf32>
    %134 = arith.addf %127, %133 : vector<8x128xf32>
    %cst_54 = arith.constant 0.797884583 : f32
    %135 = vector.broadcast %cst_54 : f32 to vector<8x128xf32>
    %136 = arith.mulf %135, %134 : vector<8x128xf32>
    %137 = math.tanh %136 : vector<8x128xf32>
    %cst_55 = arith.constant 1.000000e+00 : f32
    %138 = vector.broadcast %cst_55 : f32 to vector<8x128xf32>
    %139 = arith.addf %138, %137 : vector<8x128xf32>
    %140 = arith.mulf %129, %139 : vector<8x128xf32>
    %141 = arith.truncf %140 : vector<8x128xf32> to vector<8x128xbf16>
    %c0_56 = arith.constant 0 : index
    %c0_57 = arith.constant 0 : index
    %142 = vector.load %arg9[%c0_56, %c0_57] : memref<128x64xbf16, #tpu.memory_space<vmem>>, vector<128x64xbf16>
    %cst_58 = arith.constant dense<0.000000e+00> : vector<8x64xf32>
    %143 = tpu.matmul %141, %142, %cst_58 {dimension_numbers = #tpu.dot_dimension_numbers<[1], [0], [0], [1], [0, 0, 1, 1], [], []>} : vector<8x128xbf16>, vector<128x64xbf16>, vector<8x64xf32> -> vector<8x64xf32>
    %c0_59 = arith.constant 0 : index
    %c1024 = arith.constant 1024 : index
    %144 = vector.load %arg3[%c0_59, %c1024] : memref<1x1152xf32, #tpu.memory_space<vmem>>, vector<1x64xf32>
    %145 = vector.broadcast %144 : vector<1x64xf32> to vector<8x64xf32>
    %146 = arith.addf %143, %145 : vector<8x64xf32>
    %147 = arith.addf %99, %146 : vector<8x64xf32>
    %148 = vector.shape_cast %147 : vector<8x64xf32> to vector<1x8x64xf32>
    %c0_60 = arith.constant 0 : index
    %c0_61 = arith.constant 0 : index
    %c0_62 = arith.constant 0 : index
    %149 = vector.load %arg10[%c0_60, %c0_61, %c0_62] : memref<1x8x64xf32, #tpu.memory_space<vmem>>, vector<1x8x64xf32>
    tpu.vector_store %arg10[%c0_60, %c0_61, %c0_62], %148 {strides = array<i32>} : memref<1x8x64xf32, #tpu.memory_space<vmem>>, vector<1x8x64xf32>,
    return
  }
  func.func @transform_0(%arg0: i32) -> (i32, i32, i32) {
    %c0_i32 = arith.constant 0 : i32
    %c0_i32_0 = arith.constant 0 : i32
    %c0_i32_1 = arith.constant 0 : i32
    return %arg0, %c0_i32, %c0_i32_0 : i32, i32, i32
  }
  func.func @transform_1(%arg0: i32) -> (i32, i32, i32) {
    %c0_i32 = arith.constant 0 : i32
    %c0_i32_0 = arith.constant 0 : i32
    %c0_i32_1 = arith.constant 0 : i32
    return %arg0, %c0_i32, %c0_i32_0 : i32, i32, i32
  }
  func.func @transform_2(%arg0: i32) -> (i32, i32) {
    %c0_i32 = arith.constant 0 : i32
    %c0_i32_0 = arith.constant 0 : i32
    %c0_i32_1 = arith.constant 0 : i32
    return %c0_i32, %c0_i32_0 : i32, i32
  }
  func.func @transform_3(%arg0: i32) -> (i32, i32, i32) {
    %c0_i32 = arith.constant 0 : i32
    %c0_i32_0 = arith.constant 0 : i32
    %c0_i32_1 = arith.constant 0 : i32
    %c0_i32_2 = arith.constant 0 : i32
    return %c0_i32, %c0_i32_0, %c0_i32_1 : i32, i32, i32
  }
  func.func @transform_4(%arg0: i32) -> (i32, i32, i32) {
    %c0_i32 = arith.constant 0 : i32
    %c0_i32_0 = arith.constant 0 : i32
    %c0_i32_1 = arith.constant 0 : i32
    %c0_i32_2 = arith.constant 0 : i32
    return %c0_i32, %c0_i32_0, %c0_i32_1 : i32, i32, i32
  }
  func.func @transform_5(%arg0: i32) -> (i32, i32, i32) {
    %c0_i32 = arith.constant 0 : i32
    %c0_i32_0 = arith.constant 0 : i32
    %c0_i32_1 = arith.constant 0 : i32
    %c0_i32_2 = arith.constant 0 : i32
    return %c0_i32, %c0_i32_0, %c0_i32_1 : i32, i32, i32
  }
  func.func @transform_6(%arg0: i32) -> (i32, i32, i32) {
    %c0_i32 = arith.constant 0 : i32
    %c0_i32_0 = arith.constant 0 : i32
    %c0_i32_1 = arith.constant 0 : i32
    %c0_i32_2 = arith.constant 0 : i32
    return %c0_i32, %c0_i32_0, %c0_i32_1 : i32, i32, i32
  }
  func.func @transform_7(%arg0: i32) -> (i32, i32) {
    %c0_i32 = arith.constant 0 : i32
    %c0_i32_0 = arith.constant 0 : i32
    %c0_i32_1 = arith.constant 0 : i32
    return %c0_i32, %c0_i32_0 : i32, i32
  }
  func.func @transform_8(%arg0: i32) -> (i32, i32) {
    %c0_i32 = arith.constant 0 : i32
    %c0_i32_0 = arith.constant 0 : i32
    %c0_i32_1 = arith.constant 0 : i32
    return %c0_i32, %c0_i32_0 : i32, i32
  }
  func.func @transform_9(%arg0: i32) -> (i32, i32, i32) {
    %c0_i32 = arith.constant 0 : i32
    %c0_i32_0 = arith.constant 0 : i32
    %c0_i32_1 = arith.constant 0 : i32
    return %arg0, %c0_i32, %c0_i32_0 : i32, i32, i32
  }
}

</mosaic_0001>

<llo_original>
// kernel: tpu_custom_call.1
$region0: #{tpu_custom_call.1}
  #allocation0 [shape = 'u32[]', space=smem, size = 0x4, offset = 0x4, fixed_abs, tag = 'smem constant byte address 0x4 - core index']
  #allocation1 [shape = 'u32[144,128]{1,0:T(1,128)}', space=vmem, size = 0x12000, scoped, tag = 'internal scratch']
  %s0 = inlined_call_operand.vmem [shape: f32[2,16,32], index: 0, kind: input, shape index: {}]
  %s1 = inlined_call_operand.vmem [shape: f32[2,8,32], index: 1, kind: input, shape index: {}]
  %s2 = inlined_call_operand.vmem [shape: f32[1,1152], index: 2, kind: input, shape index: {}]
  %s3 = inlined_call_operand.vmem [shape: bf16[8,32,8], index: 3, kind: input, shape index: {}]
  %s4 = inlined_call_operand.vmem [shape: bf16[8,32,8], index: 4, kind: input, shape index: {}]
  %s5 = inlined_call_operand.vmem [shape: bf16[8,32,8], index: 5, kind: input, shape index: {}]
  %s6 = inlined_call_operand.vmem [shape: bf16[8,8,64], index: 6, kind: input, shape index: {}]
  %s7 = inlined_call_operand.vmem [shape: bf16[64,128], index: 7, kind: input, shape index: {}]
  %s8 = inlined_call_operand.vmem [shape: bf16[128,64], index: 8, kind: input, shape index: {}]
  %s9 = inlined_call_operand.hbm [shape: f32[2,8,64], index: 9, kind: output, shape index: {}]
  %s10 = sld [smem:[#allocation0]]
  $region69: #{tpu_custom_call.1} parent=0
    _
  %s12 = ssub.s32 1, %s10
  %s13 = scalar_select 0, %s12, %s10
  $region1: #{tpu_custom_call.1} parent=0
    #allocation2 [shape = 'u8[8192]{0}', space=vmem, size = 0x2000, scoped, tag = 'output window, operand 0']
    #allocation3 [shape = 's32[2]{0}', space=sflag, size = 0x8, scoped, tag = 'scoped memory for tpu_custom_call.1']
    %14 = vsyncpa [#allocation3], 0
    %s15 = scalar_lea.sflag [#allocation3], 1
    %16 = vsyncpa %s15, 0
    loop: start=0, step=1, limit=4
    $region2: #{tpu_custom_call.1} parent=1 // loop_pre_header
      _
    $region3: #{tpu_custom_call.1} parent=1 // loop_header
      %s18 = sphi 0, %s22
      %p19 = scmp.ge.s32.totalorder %s18, 4
      %s28 = sphi 0, %s30
      %s31 = sphi 0, %s28
      %s32 = sphi 0, %s31
      %s48 = sphi 0, %s32
      %s54 = sphi 0, %s56
      %s57 = sphi 0, %s54
      %s58 = sphi 0, %s57
      %s74 = sphi 0, %s58
      %s78 = sphi 0, %s78
      %s80 = sphi 0, %s78
      %s81 = sphi 0, %s80
      %s95 = sphi 0, %s81
      %s99 = sphi 0, %s99
      %s101 = sphi 0, %s99
      %s102 = sphi 0, %s101
      %s116 = sphi 0, %s102
      %s120 = sphi 0, %s120
      %s122 = sphi 0, %s120
      %s123 = sphi 0, %s122
      %s137 = sphi 0, %s123
      %s141 = sphi 0, %s141
      %s143 = sphi 0, %s141
      %s144 = sphi 0, %s143
      %s158 = sphi 0, %s144
      %s162 = sphi 0, %s162
      %s164 = sphi 0, %s162
      %s165 = sphi 0, %s164
      %s179 = sphi 0, %s165
      %s183 = sphi 0, %s183
      %s185 = sphi 0, %s183
      %s186 = sphi 0, %s185
      %s200 = sphi 0, %s186
      %s204 = sphi 0, %s204
      %s206 = sphi 0, %s204
      %s207 = sphi 0, %s206
      %s221 = sphi 0, %s207
      %s227 = sphi 0, %s229
      %s230 = sphi 0, %s227
      %s231 = sphi 0, %s230
      %s247 = sphi 0, %s231
    $region4: #{tpu_custom_call.1} parent=1 // loop_header_branch
      %21 = sbr.rel (%p19) target = $region8
    $region5: #{tpu_custom_call.1} parent=1 // loop_body
      %s23 = ssub.s32 %s18, 1
      %s24 = ssub.s32 %s18, 2
      %s25 = sadd.s32 %s18, 1
      %s26 = ssub.s32 %s18, %s25
      %p27 = scmp.eq.s32.totalorder %s26, 0
      %s29 = sadd.s32 %s28, 1
      %s30 = scalar_select %p27, %s28, %s29
      %p33 = pneg %p27
      %p34 = scmp.eq.s32.totalorder %s18, 1
      %p35 = por %p33, %p34
      %p36 = scmp.ne.s32.totalorder %s28, %s31
      %p37 = scmp.eq.s32.totalorder %s18, 0
      %p38 = por %p36, %p37
      %p39 = scmp.ne.s32.totalorder %s28, %s31
      %p40 = scmp.eq.s32.totalorder %s23, 1
      %p41 = por %p39, %p40
      %p42 = scmp.ne.s32.totalorder %s31, %s32
      %p43 = scmp.eq.s32.totalorder %s23, 0
      %p44 = por %p42, %p43
      %p45 = scmp.ne.s32.totalorder %s31, %s32
      %p46 = scmp.eq.s32.totalorder %s24, 1
      %p47 = por %p45, %p46
      %p49 = scmp.ne.s32.totalorder %s32, %s48
      %p50 = scmp.eq.s32.totalorder %s24, 0
      %p51 = por %p49, %p50
      %s52 = ssub.s32 %s18, %s25
      %p53 = scmp.eq.s32.totalorder %s52, 0
      %s55 = sadd.s32 %s54, 1
      %s56 = scalar_select %p53, %s54, %s55
      %p59 = pneg %p53
      %p60 = scmp.eq.s32.totalorder %s18, 1
      %p61 = por %p59, %p60
      %p62 = scmp.ne.s32.totalorder %s54, %s57
      %p63 = scmp.eq.s32.totalorder %s18, 0
      %p64 = por %p62, %p63
      %p65 = scmp.ne.s32.totalorder %s54, %s57
      %p66 = scmp.eq.s32.totalorder %s23, 1
      %p67 = por %p65, %p66
      %p68 = scmp.ne.s32.totalorder %s57, %s58
      %p69 = scmp.eq.s32.totalorder %s23, 0
      %p70 = por %p68, %p69
      %p71 = scmp.ne.s32.totalorder %s57, %s58
      %p72 = scmp.eq.s32.totalorder %s24, 1
      %p73 = por %p71, %p72
      %p75 = scmp.ne.s32.totalorder %s58, %s74
      %p76 = scmp.eq.s32.totalorder %s24, 0
      %p77 = por %p75, %p76
      %s79 = sadd.s32 %s78, 1
      %p82 = scmp.eq.s32.totalorder %s18, 1
      %p83 = scmp.ne.s32.totalorder %s78, %s80
      %p84 = scmp.eq.s32.totalorder %s18, 0
      %p85 = por %p83, %p84
      %p86 = scmp.ne.s32.totalorder %s78, %s80
      %p87 = scmp.eq.s32.totalorder %s23, 1
      %p88 = por %p86, %p87
      %p89 = scmp.ne.s32.totalorder %s80, %s81
      %p90 = scmp.eq.s32.totalorder %s23, 0
      %p91 = por %p89, %p90
      %p92 = scmp.ne.s32.totalorder %s80, %s81
      %p93 = scmp.eq.s32.totalorder %s24, 1
      %p94 = por %p92, %p93
      %p96 = scmp.ne.s32.totalorder %s81, %s95
      %p97 = scmp.eq.s32.totalorder %s24, 0
      %p98 = por %p96, %p97
      %s100 = sadd.s32 %s99, 1
      %p103 = scmp.eq.s32.totalorder %s18, 1
      %p104 = scmp.ne.s32.totalorder %s99, %s101
      %p105 = scmp.eq.s32.totalorder %s18, 0
      %p106 = por %p104, %p105
      %p107 = scmp.ne.s32.totalorder %s99, %s101
      %p108 = scmp.eq.s32.totalorder %s23, 1
      %p109 = por %p107, %p108
      %p110 = scmp.ne.s32.totalorder %s101, %s102
      %p111 = scmp.eq.s32.totalorder %s23, 0
      %p112 = por %p110, %p111
      %p113 = scmp.ne.s32.totalorder %s101, %s102
      %p114 = scmp.eq.s32.totalorder %s24, 1
      %p115 = por %p113, %p114
      %p117 = scmp.ne.s32.totalorder %s102, %s116
      %p118 = scmp.eq.s32.totalorder %s24, 0
      %p119 = por %p117, %p118
      %s121 = sadd.s32 %s120, 1
      %p124 = scmp.eq.s32.totalorder %s18, 1
      %p125 = scmp.ne.s32.totalorder %s120, %s122
      %p126 = scmp.eq.s32.totalorder %s18, 0
      %p127 = por %p125, %p126
      %p128 = scmp.ne.s32.totalorder %s120, %s122
      %p129 = scmp.eq.s32.totalorder %s23, 1
      %p130 = por %p128, %p129
      %p131 = scmp.ne.s32.totalorder %s122, %s123
      %p132 = scmp.eq.s32.totalorder %s23, 0
      %p133 = por %p131, %p132
      %p134 = scmp.ne.s32.totalorder %s122, %s123
      %p135 = scmp.eq.s32.totalorder %s24, 1
      %p136 = por %p134, %p135
      %p138 = scmp.ne.s32.totalorder %s123, %s137
      %p139 = scmp.eq.s32.totalorder %s24, 0
      %p140 = por %p138, %p139
      %s142 = sadd.s32 %s141, 1
      %p145 = scmp.eq.s32.totalorder %s18, 1
      %p146 = scmp.ne.s32.totalorder %s141, %s143
      %p147 = scmp.eq.s32.totalorder %s18, 0
      %p148 = por %p146, %p147
      %p149 = scmp.ne.s32.totalorder %s141, %s143
      %p150 = scmp.eq.s32.totalorder %s23, 1
      %p151 = por %p149, %p150
      %p152 = scmp.ne.s32.totalorder %s143, %s144
      %p153 = scmp.eq.s32.totalorder %s23, 0
      %p154 = por %p152, %p153
      %p155 = scmp.ne.s32.totalorder %s143, %s144
      %p156 = scmp.eq.s32.totalorder %s24, 1
      %p157 = por %p155, %p156
      %p159 = scmp.ne.s32.totalorder %s144, %s158
      %p160 = scmp.eq.s32.totalorder %s24, 0
      %p161 = por %p159, %p160
      %s163 = sadd.s32 %s162, 1
      %p166 = scmp.eq.s32.totalorder %s18, 1
      %p167 = scmp.ne.s32.totalorder %s162, %s164
      %p168 = scmp.eq.s32.totalorder %s18, 0
      %p169 = por %p167, %p168
      %p170 = scmp.ne.s32.totalorder %s162, %s164
      %p171 = scmp.eq.s32.totalorder %s23, 1
      %p172 = por %p170, %p171
      %p173 = scmp.ne.s32.totalorder %s164, %s165
      %p174 = scmp.eq.s32.totalorder %s23, 0
      %p175 = por %p173, %p174
      %p176 = scmp.ne.s32.totalorder %s164, %s165
      %p177 = scmp.eq.s32.totalorder %s24, 1
      %p178 = por %p176, %p177
      %p180 = scmp.ne.s32.totalorder %s165, %s179
      %p181 = scmp.eq.s32.totalorder %s24, 0
      %p182 = por %p180, %p181
      %s184 = sadd.s32 %s183, 1
      %p187 = scmp.eq.s32.totalorder %s18, 1
      %p188 = scmp.ne.s32.totalorder %s183, %s185
      %p189 = scmp.eq.s32.totalorder %s18, 0
      %p190 = por %p188, %p189
      %p191 = scmp.ne.s32.totalorder %s183, %s185
      %p192 = scmp.eq.s32.totalorder %s23, 1
      %p193 = por %p191, %p192
      %p194 = scmp.ne.s32.totalorder %s185, %s186
      %p195 = scmp.eq.s32.totalorder %s23, 0
      %p196 = por %p194, %p195
      %p197 = scmp.ne.s32.totalorder %s185, %s186
      %p198 = scmp.eq.s32.totalorder %s24, 1
      %p199 = por %p197, %p198
      %p201 = scmp.ne.s32.totalorder %s186, %s200
      %p202 = scmp.eq.s32.totalorder %s24, 0
      %p203 = por %p201, %p202
      %s205 = sadd.s32 %s204, 1
      %p208 = scmp.eq.s32.totalorder %s18, 1
      %p209 = scmp.ne.s32.totalorder %s204, %s206
      %p210 = scmp.eq.s32.totalorder %s18, 0
      %p211 = por %p209, %p210
      %p212 = scmp.ne.s32.totalorder %s204, %s206
      %p213 = scmp.eq.s32.totalorder %s23, 1
      %p214 = por %p212, %p213
      %p215 = scmp.ne.s32.totalorder %s206, %s207
      %p216 = scmp.eq.s32.totalorder %s23, 0
      %p217 = por %p215, %p216
      %p218 = scmp.ne.s32.totalorder %s206, %s207
      %p219 = scmp.eq.s32.totalorder %s24, 1
      %p220 = por %p218, %p219
      %p222 = scmp.ne.s32.totalorder %s207, %s221
      %p223 = scmp.eq.s32.totalorder %s24, 0
      %p224 = por %p222, %p223
      %s225 = ssub.s32 %s18, %s25
      %p226 = scmp.eq.s32.totalorder %s225, 0
      %s228 = sadd.s32 %s227, 1
      %s229 = scalar_select %p226, %s227, %s228
      %p232 = pneg %p226
      %p233 = scmp.eq.s32.totalorder %s18, 1
      %p234 = por %p232, %p233
      %p235 = scmp.ne.s32.totalorder %s227, %s230
      %p236 = scmp.eq.s32.totalorder %s18, 0
      %p237 = por %p235, %p236
      %p238 = scmp.ne.s32.totalorder %s227, %s230
      %p239 = scmp.eq.s32.totalorder %s23, 1
      %p240 = por %p238, %p239
      %p241 = scmp.ne.s32.totalorder %s230, %s231
      %p242 = scmp.eq.s32.totalorder %s23, 0
      %p243 = por %p241, %p242
      %p244 = scmp.ne.s32.totalorder %s230, %s231
      %p245 = scmp.eq.s32.totalorder %s24, 1
      %p246 = por %p244, %p245
      %p248 = scmp.ne.s32.totalorder %s231, %s247
      %p249 = scmp.eq.s32.totalorder %s24, 0
      %p250 = por %p248, %p249
      %p251 = scmp.le.s32.totalorder 1, %s18
      %p252 = scmp.lt.s32.totalorder %s18, 3
      %p253 = pnand %p251, %p252
      %p254 = pneg %p253
      // Predicated region
      $region9: #{tpu_custom_call.1} parent=5 // pred_check
        _
      $region10: #{tpu_custom_call.1} parent=5 // pred_check_branch
        %256 = sbr.rel (%p253) target = $region12
      $region11: #{tpu_custom_call.1} parent=5 // pred_region
        %s257 = ssub.s32 %s18, 1
        // Predicated region
        $region13: #{tpu_custom_call.1} parent=11 // pred_check
          %p258 = pneg %p91
        $region14: #{tpu_custom_call.1} parent=11 // pred_check_branch
          %260 = sbr.rel (%p258) target = $region16
        $region15: #{tpu_custom_call.1} parent=11 // pred_region
          _
        $region16: #{tpu_custom_call.1} parent=11 // pred_fallthru
          _
        // Predicated region
        $region17: #{tpu_custom_call.1} parent=11 // pred_check
          %p261 = pneg %p112
        $region18: #{tpu_custom_call.1} parent=11 // pred_check_branch
          %263 = sbr.rel (%p261) target = $region20
        $region19: #{tpu_custom_call.1} parent=11 // pred_region
          _
        $region20: #{tpu_custom_call.1} parent=11 // pred_fallthru
          _
        // Predicated region
        $region21: #{tpu_custom_call.1} parent=11 // pred_check
          %p264 = pneg %p133
        $region22: #{tpu_custom_call.1} parent=11 // pred_check_branch
          %266 = sbr.rel (%p264) target = $region24
        $region23: #{tpu_custom_call.1} parent=11 // pred_region
          _
        $region24: #{tpu_custom_call.1} parent=11 // pred_fallthru
          _
        // Predicated region
        $region25: #{tpu_custom_call.1} parent=11 // pred_check
          %p267 = pneg %p154
        $region26: #{tpu_custom_call.1} parent=11 // pred_check_branch
          %269 = sbr.rel (%p267) target = $region28
        $region27: #{tpu_custom_call.1} parent=11 // pred_region
          _
        $region28: #{tpu_custom_call.1} parent=11 // pred_fallthru
          _
        // Predicated region
        $region29: #{tpu_custom_call.1} parent=11 // pred_check
          %p270 = pneg %p175
        $region30: #{tpu_custom_call.1} parent=11 // pred_check_branch
          %272 = sbr.rel (%p270) target = $region32
        $region31: #{tpu_custom_call.1} parent=11 // pred_region
          _
        $region32: #{tpu_custom_call.1} parent=11 // pred_fallthru
          _
        // Predicated region
        $region33: #{tpu_custom_call.1} parent=11 // pred_check
          %p273 = pneg %p196
        $region34: #{tpu_custom_call.1} parent=11 // pred_check_branch
          %275 = sbr.rel (%p273) target = $region36
        $region35: #{tpu_custom_call.1} parent=11 // pred_region
          _
        $region36: #{tpu_custom_call.1} parent=11 // pred_fallthru
          _
        // Predicated region
        $region37: #{tpu_custom_call.1} parent=11 // pred_check
          %p276 = pneg %p217
        $region38: #{tpu_custom_call.1} parent=11 // pred_check_branch
          %278 = sbr.rel (%p276) target = $region40
        $region39: #{tpu_custom_call.1} parent=11 // pred_region
          _
        $region40: #{tpu_custom_call.1} parent=11 // pred_fallthru
          _
      $region12: #{tpu_custom_call.1} parent=5 // pred_fallthru
        _
      %p279 = scmp.lt.s32.totalorder %s18, 2
      // Predicated region
      $region41: #{tpu_custom_call.1} parent=5 // pred_check
        %p280 = pneg %p279
      $region42: #{tpu_custom_call.1} parent=5 // pred_check_branch
        %282 = sbr.rel (%p280) target = $region44
      $region43: #{tpu_custom_call.1} parent=5 // pred_region
        // Predicated region
        $region45: #{tpu_custom_call.1} parent=43 // pred_check
          %p283 = pneg %p38
        $region46: #{tpu_custom_call.1} parent=43 // pred_check_branch
          %285 = sbr.rel (%p283) target = $region48
        $region47: #{tpu_custom_call.1} parent=43 // pred_region
          %p286 = scmp.lt.s32.totalorder %s18, 1
          %s287 = scalar_select %p286, %s18, 1
          %s288 = smul.addr %s287, 2
          %s289 = smul.addr %s288, 8
          %s290 = scalar_lea.vmem %s0, %s289
        $region48: #{tpu_custom_call.1} parent=43 // pred_fallthru
          _
        // Predicated region
        $region49: #{tpu_custom_call.1} parent=43 // pred_check
          %p291 = pneg %p64
        $region50: #{tpu_custom_call.1} parent=43 // pred_check_branch
          %293 = sbr.rel (%p291) target = $region52
        $region51: #{tpu_custom_call.1} parent=43 // pred_region
          %p294 = scmp.lt.s32.totalorder %s18, 1
          %s295 = scalar_select %p294, %s18, 1
          %s296 = smul.addr %s295, 8
          %s297 = scalar_lea.vmem %s1, %s296
        $region52: #{tpu_custom_call.1} parent=43 // pred_fallthru
          _
      $region44: #{tpu_custom_call.1} parent=5 // pred_fallthru
        _
      %p298 = scmp.le.s32.totalorder 1, %s18
      %p299 = scmp.lt.s32.totalorder %s18, 3
      %p300 = pnand %p298, %p299
      %p301 = pneg %p300
      // Predicated region
      $region53: #{tpu_custom_call.1} parent=5 // pred_check
        _
      $region54: #{tpu_custom_call.1} parent=5 // pred_check_branch
        %303 = sbr.rel (%p300) target = $region56
      $region55: #{tpu_custom_call.1} parent=5 // pred_region
        %s304 = ssub.s32 %s18, 1
        %p305 = scmp.lt.s32.totalorder %s23, 1
        %s306 = scalar_select %p305, %s23, 1
        %s307 = smul.addr %s306, 2
        %s308 = smul.addr %s307, 8
        %s309 = scalar_lea.vmem %s0, %s308
        %p310 = pneg %p44
        %p311 = pneg %p41
        %p312 = scmp.lt.s32.totalorder %s23, 1
        %s313 = scalar_select %p312, %s23, 1
        %s314 = smul.addr %s313, 8
        %s315 = scalar_lea.vmem %s1, %s314
        %p316 = pneg %p70
        %p317 = pneg %p67
        %p318 = pneg %p91
        %p319 = pneg %p88
        %p320 = pneg %p112
        %p321 = pneg %p109
        %p322 = pneg %p133
        %p323 = pneg %p130
        %p324 = pneg %p154
        %p325 = pneg %p151
        %p326 = pneg %p175
        %p327 = pneg %p172
        %p328 = pneg %p196
        %p329 = pneg %p193
        %p330 = pneg %p217
        %p331 = pneg %p214
        %p332 = pneg %p243
        %p333 = pneg %p240
        %s334 = sand.u32 %s230, 1
        %s335 = scalar_lea.sflag [#allocation3], %s334
        %s336 = sand.u32 %s230, 1
        %s337 = smul.addr %s336, 8
        %s338 = scalar_lea.vmem [#allocation2], %s337
        %p339 = scmp.lt.s32.totalorder %s23, 1
        %s340 = scalar_select %p339, %s23, 1
        %s341 = smul.addr %s340, 2
        %s342 = smul.addr %s341, 8
        %s343 = scalar_lea.vmem %s0, %s342
        %p344 = scmp.lt.s32.totalorder %s23, 1
        %s345 = scalar_select %p344, %s23, 1
        %s346 = smul.addr %s345, 8
        %s347 = scalar_lea.vmem %s1, %s346
        %v349 = vld [vmem:[%s343] sm:$0xff]
        %v350 = vld [vmem:[%s343 + $0x8] sm:$0xff]
        %v351 = vld [vmem:[%s2] sm:$0x1]
        %v352 = vld [vmem:[%s2 + $0x1] sm:$0x1]
        %vm353 = vcmask 261120
        %v354 = vsel %vm353, %v349, 0.0
        %355 = vadd.xlane.f32.xlu0 %v354
        %v356 = vpop.xlane.xlu0 %355
        %v357 = vsel %vm353, %v350, 0.0
        %358 = vadd.xlane.f32.xlu0 %v357
        %v359 = vpop.xlane.xlu0 %358
        %v360 = vrcp.pop 32.0
        %v361 = vmul.f32 %v356, %v360
        %v362 = vmul.f32 %v359, %v360
        %v363 = vsub.f32 %v349, %v361
        %v364 = vsub.f32 %v350, %v362
        %v365 = vmul.f32 %v363, %v363
        %v366 = vmul.f32 %v364, %v364
        %v367 = vsel %vm353, %v365, 0.0
        %368 = vadd.xlane.f32.xlu0 %v367
        %v369 = vpop.xlane.xlu0 %368
        %v370 = vsel %vm353, %v366, 0.0
        %371 = vadd.xlane.f32.xlu0 %v370
        %v372 = vpop.xlane.xlu0 %371
        %v373 = vmul.f32 %v369, %v360
        %v374 = vmul.f32 %v372, %v360
        %v375 = vadd.f32 %v373, 1e-05
        %v376 = vadd.f32 %v374, 1e-05
        %v377 = vrsqrt.pop %v375
        %v378 = vrsqrt.pop %v376
        %v379 = vmul.f32 %v363, %v377
        %v380 = vmul.f32 %v364, %v378
        %v382 = vlaneseq
        %v383 = vshrl.u32 %v382, 7
        %v384 = vsub.s32 0, %v383
        %v385 = vrot.slane %v351, %v384
        %v387 = vmul.f32 %v379, %v385
        %v388 = vmul.f32 %v380, %v385
        %v390 = vlaneseq
        %v391 = vshrl.u32 %v390, 7
        %v392 = vsub.s32 0, %v391
        %v393 = vrot.slane %v352, %v392
        %v395 = vadd.f32 %v387, %v393
        %v396 = vadd.f32 %v388, %v393
        %v397 = vld [vmem:[%s347] sm:$0xff]
        %v398 = vld [vmem:[%s2 + $0x2] sm:$0x1]
        %v399 = vld [vmem:[%s2 + $0x3] sm:$0x1]
        %v400 = vsel %vm353, %v397, 0.0
        %401 = vadd.xlane.f32.xlu0 %v400
        %v402 = vpop.xlane.xlu0 %401
        %v403 = vmul.f32 %v402, %v360
        %v404 = vsub.f32 %v397, %v403
        %v405 = vmul.f32 %v404, %v404
        %v406 = vsel %vm353, %v405, 0.0
        %407 = vadd.xlane.f32.xlu0 %v406
        %v408 = vpop.xlane.xlu0 %407
        %v409 = vmul.f32 %v408, %v360
        %v410 = vadd.f32 %v409, 1e-05
        %v411 = vrsqrt.pop %v410
        %v412 = vmul.f32 %v404, %v411
        %v414 = vlaneseq
        %v415 = vshrl.u32 %v414, 7
        %v416 = vsub.s32 0, %v415
        %v417 = vrot.slane %v398, %v416
        %v419 = vmul.f32 %v412, %v417
        %v421 = vlaneseq
        %v422 = vshrl.u32 %v421, 7
        %v423 = vsub.s32 0, %v422
        %v424 = vrot.slane %v399, %v423
        %v426 = vadd.f32 %v419, %v424
        %v427 = vpack.c.bf16 %v426, %v426
        %v428 = vpack.c.bf16 %v396, %v395
        %v429 = vld [vmem:[%s3] sm:$0xf]
        %v430 = vld [vmem:[%s3 + $0x4] sm:$0xf]
        %v431 = vld [vmem:[%s3 + $0x8] sm:$0xf]
        %v432 = vld [vmem:[%s3 + $0xc] sm:$0xf]
        %v433 = vld [vmem:[%s3 + $0x10] sm:$0xf]
        %v434 = vld [vmem:[%s3 + $0x14] sm:$0xf]
        %v435 = vld [vmem:[%s3 + $0x18] sm:$0xf]
        %v436 = vld [vmem:[%s3 + $0x1c] sm:$0xf]
        %v437 = vld [vmem:[%s3 + $0x20] sm:$0xf]
        %v438 = vld [vmem:[%s3 + $0x24] sm:$0xf]
        %v439 = vld [vmem:[%s3 + $0x28] sm:$0xf]
        %v440 = vld [vmem:[%s3 + $0x2c] sm:$0xf]
        %v441 = vld [vmem:[%s3 + $0x30] sm:$0xf]
        %v442 = vld [vmem:[%s3 + $0x34] sm:$0xf]
        %v443 = vld [vmem:[%s3 + $0x38] sm:$0xf]
        %v444 = vld [vmem:[%s3 + $0x3c] sm:$0xf]
        %v445 = vld [vmem:[%s3 + $0x40] sm:$0xf]
        %v446 = vld [vmem:[%s3 + $0x44] sm:$0xf]
        %v447 = vld [vmem:[%s3 + $0x48] sm:$0xf]
        %v448 = vld [vmem:[%s3 + $0x4c] sm:$0xf]
        %v449 = vld [vmem:[%s3 + $0x50] sm:$0xf]
        %v450 = vld [vmem:[%s3 + $0x54] sm:$0xf]
        %v451 = vld [vmem:[%s3 + $0x58] sm:$0xf]
        %v452 = vld [vmem:[%s3 + $0x5c] sm:$0xf]
        %v453 = vld [vmem:[%s3 + $0x60] sm:$0xf]
        %v454 = vld [vmem:[%s3 + $0x64] sm:$0xf]
        %v455 = vld [vmem:[%s3 + $0x68] sm:$0xf]
        %v456 = vld [vmem:[%s3 + $0x6c] sm:$0xf]
        %v457 = vld [vmem:[%s3 + $0x70] sm:$0xf]
        %v458 = vld [vmem:[%s3 + $0x74] sm:$0xf]
        %v459 = vld [vmem:[%s3 + $0x78] sm:$0xf]
        %v460 = vld [vmem:[%s3 + $0x7c] sm:$0xf]
        %v465 = vunpack.c.l.b16 %v429
        %v466 = vunpack.c.l.b16 %v430
        %v467 = vunpack.c.l.b16 %v431
        %v468 = vunpack.c.l.b16 %v432
        %v469 = vpack.c.b16 %v466, %v465
        %v470 = vpack.c.b16 %v468, %v467
        %v474 = vsel %vm353, %v427, 0
        %476 = vmatprep.subr.bf16.mxu0 0
        %477 = vmatpush1.bf16.msra.mxu0 0
        %478 = vmatprep.subr.bf16.mxu0 0
        %479 = vmatpush1.bf16.msra.mxu0 0
        %480 = vmatprep.subr.bf16.mxu0 0
        %481 = vmatpush1.bf16.msra.mxu0 0
        %482 = vmatprep.subr.bf16.mxu0 0
        %483 = vmatpush1.bf16.msra.mxu0 0
        %484 = vmatprep.subr.bf16.mxu0 0
        %485 = vmatpush1.bf16.msra.mxu0 0
        %486 = vmatprep.subr.bf16.mxu0 0
        %487 = vmatpush1.bf16.msra.mxu0 0
        %488 = vmatprep.subr.bf16.mxu0 0
        %489 = vmatpush1.bf16.msra.mxu0 %v470
        %490 = vmatprep.subr.bf16.mxu0 0
        %491 = vmatpush1.bf16.msra.mxu0 %v469
        %492 = vmatprep.subr.bf16.mxu0 0
        %493 = vmatpush2.bf16.msra.mxu0 0
        %494 = vmatprep.subr.bf16.mxu0 0
        %495 = vmatpush2.bf16.msra.mxu0 0
        %496 = vmatprep.subr.bf16.mxu0 0
        %497 = vmatpush2.bf16.msra.mxu0 0
        %498 = vmatprep.subr.bf16.mxu0 0
        %499 = vmatpush2.bf16.msra.mxu0 0
        %500 = vmatprep.subr.bf16.mxu0 0
        %501 = vmatpush2.bf16.msra.mxu0 0
        %502 = vmatprep.subr.bf16.mxu0 0
        %503 = vmatpush2.bf16.msra.mxu0 0
        %504 = vmatprep.subr.bf16.mxu0 0
        %505 = vmatpush2.bf16.msra.mxu0 0
        %506 = vmatprep.subr.bf16.mxu0 0
        %507 = vmatpush2.bf16.msra.mxu0 0
        %508 = vmatprep.mubr.bf16.mxu0 0
        %509 = vmatmul.mubr.bf16.gmra.mxu0 %v474
        %v510 = vpop.f32.mrf.mxu0
        %v511 = vadd.f32 0.0, %v510
        %v512 = vpop.f32.mrf.mxu0
        %v513 = vpop.f32.mrf.mxu0
        %v514 = vpop.f32.mrf.mxu0
        %515 = vdwg.mxu0
        %v520 = vunpack.c.l.b16 %v433
        %v521 = vunpack.c.l.b16 %v434
        %v522 = vunpack.c.l.b16 %v435
        %v523 = vunpack.c.l.b16 %v436
        %v524 = vpack.c.b16 %v521, %v520
        %v525 = vpack.c.b16 %v523, %v522
        %528 = vmatprep.subr.bf16.mxu0 0
        %529 = vmatpush1.bf16.msra.mxu0 0
        %530 = vmatprep.subr.bf16.mxu0 0
        %531 = vmatpush1.bf16.msra.mxu0 0
        %532 = vmatprep.subr.bf16.mxu0 0
        %533 = vmatpush1.bf16.msra.mxu0 0
        %534 = vmatprep.subr.bf16.mxu0 0
        %535 = vmatpush1.bf16.msra.mxu0 0
        %536 = vmatprep.subr.bf16.mxu0 0
        %537 = vmatpush1.bf16.msra.mxu0 0
        %538 = vmatprep.subr.bf16.mxu0 0
        %539 = vmatpush1.bf16.msra.mxu0 0
        %540 = vmatprep.subr.bf16.mxu0 0
        %541 = vmatpush1.bf16.msra.mxu0 %v525
        %542 = vmatprep.subr.bf16.mxu0 0
        %543 = vmatpush1.bf16.msra.mxu0 %v524
        %544 = vmatprep.subr.bf16.mxu0 0
        %545 = vmatpush2.bf16.msra.mxu0 0
        %546 = vmatprep.subr.bf16.mxu0 0
        %547 = vmatpush2.bf16.msra.mxu0 0
        %548 = vmatprep.subr.bf16.mxu0 0
        %549 = vmatpush2.bf16.msra.mxu0 0
        %550 = vmatprep.subr.bf16.mxu0 0
        %551 = vmatpush2.bf16.msra.mxu0 0
        %552 = vmatprep.subr.bf16.mxu0 0
        %553 = vmatpush2.bf16.msra.mxu0 0
        %554 = vmatprep.subr.bf16.mxu0 0
        %555 = vmatpush2.bf16.msra.mxu0 0
        %556 = vmatprep.subr.bf16.mxu0 0
        %557 = vmatpush2.bf16.msra.mxu0 0
        %558 = vmatprep.subr.bf16.mxu0 0
        %559 = vmatpush2.bf16.msra.mxu0 0
        %560 = vmatprep.mubr.bf16.mxu0 0
        %561 = vmatmul.mubr.bf16.gmra.mxu0 %v474
        %v562 = vpop.f32.mrf.mxu0
        %v563 = vadd.f32 0.0, %v562
        %v564 = vpop.f32.mrf.mxu0
        %v565 = vpop.f32.mrf.mxu0
        %v566 = vpop.f32.mrf.mxu0
        %567 = vdwg.mxu0
        %v572 = vunpack.c.l.b16 %v437
        %v573 = vunpack.c.l.b16 %v438
        %v574 = vunpack.c.l.b16 %v439
        %v575 = vunpack.c.l.b16 %v440
        %v576 = vpack.c.b16 %v573, %v572
        %v577 = vpack.c.b16 %v575, %v574
        %580 = vmatprep.subr.bf16.mxu0 0
        %581 = vmatpush1.bf16.msra.mxu0 0
        %582 = vmatprep.subr.bf16.mxu0 0
        %583 = vmatpush1.bf16.msra.mxu0 0
        %584 = vmatprep.subr.bf16.mxu0 0
        %585 = vmatpush1.bf16.msra.mxu0 0
        %586 = vmatprep.subr.bf16.mxu0 0
        %587 = vmatpush1.bf16.msra.mxu0 0
        %588 = vmatprep.subr.bf16.mxu0 0
        %589 = vmatpush1.bf16.msra.mxu0 0
        %590 = vmatprep.subr.bf16.mxu0 0
        %591 = vmatpush1.bf16.msra.mxu0 0
        %592 = vmatprep.subr.bf16.mxu0 0
        %593 = vmatpush1.bf16.msra.mxu0 %v577
        %594 = vmatprep.subr.bf16.mxu0 0
        %595 = vmatpush1.bf16.msra.mxu0 %v576
        %596 = vmatprep.subr.bf16.mxu0 0
        %597 = vmatpush2.bf16.msra.mxu0 0
        %598 = vmatprep.subr.bf16.mxu0 0
        %599 = vmatpush2.bf16.msra.mxu0 0
        %600 = vmatprep.subr.bf16.mxu0 0
        %601 = vmatpush2.bf16.msra.mxu0 0
        %602 = vmatprep.subr.bf16.mxu0 0
        %603 = vmatpush2.bf16.msra.mxu0 0
        %604 = vmatprep.subr.bf16.mxu0 0
        %605 = vmatpush2.bf16.msra.mxu0 0
        %606 = vmatprep.subr.bf16.mxu0 0
        %607 = vmatpush2.bf16.msra.mxu0 0
        %608 = vmatprep.subr.bf16.mxu0 0
        %609 = vmatpush2.bf16.msra.mxu0 0
        %610 = vmatprep.subr.bf16.mxu0 0
        %611 = vmatpush2.bf16.msra.mxu0 0
        %612 = vmatprep.mubr.bf16.mxu0 0
        %613 = vmatmul.mubr.bf16.gmra.mxu0 %v474
        %v614 = vpop.f32.mrf.mxu0
        %v615 = vadd.f32 0.0, %v614
        %v616 = vpop.f32.mrf.mxu0
        %v617 = vpop.f32.mrf.mxu0
        %v618 = vpop.f32.mrf.mxu0
        %619 = vdwg.mxu0
        %v624 = vunpack.c.l.b16 %v441
        %v625 = vunpack.c.l.b16 %v442
        %v626 = vunpack.c.l.b16 %v443
        %v627 = vunpack.c.l.b16 %v444
        %v628 = vpack.c.b16 %v625, %v624
        %v629 = vpack.c.b16 %v627, %v626
        %632 = vmatprep.subr.bf16.mxu0 0
        %633 = vmatpush1.bf16.msra.mxu0 0
        %634 = vmatprep.subr.bf16.mxu0 0
        %635 = vmatpush1.bf16.msra.mxu0 0
        %636 = vmatprep.subr.bf16.mxu0 0
        %637 = vmatpush1.bf16.msra.mxu0 0
        %638 = vmatprep.subr.bf16.mxu0 0
        %639 = vmatpush1.bf16.msra.mxu0 0
        %640 = vmatprep.subr.bf16.mxu0 0
        %641 = vmatpush1.bf16.msra.mxu0 0
        %642 = vmatprep.subr.bf16.mxu0 0
        %643 = vmatpush1.bf16.msra.mxu0 0
        %644 = vmatprep.subr.bf16.mxu0 0
        %645 = vmatpush1.bf16.msra.mxu0 %v629
        %646 = vmatprep.subr.bf16.mxu0 0
        %647 = vmatpush1.bf16.msra.mxu0 %v628
        %648 = vmatprep.subr.bf16.mxu0 0
        %649 = vmatpush2.bf16.msra.mxu0 0
        %650 = vmatprep.subr.bf16.mxu0 0
        %651 = vmatpush2.bf16.msra.mxu0 0
        %652 = vmatprep.subr.bf16.mxu0 0
        %653 = vmatpush2.bf16.msra.mxu0 0
        %654 = vmatprep.subr.bf16.mxu0 0
        %655 = vmatpush2.bf16.msra.mxu0 0
        %656 = vmatprep.subr.bf16.mxu0 0
        %657 = vmatpush2.bf16.msra.mxu0 0
        %658 = vmatprep.subr.bf16.mxu0 0
        %659 = vmatpush2.bf16.msra.mxu0 0
        %660 = vmatprep.subr.bf16.mxu0 0
        %661 = vmatpush2.bf16.msra.mxu0 0
        %662 = vmatprep.subr.bf16.mxu0 0
        %663 = vmatpush2.bf16.msra.mxu0 0
        %664 = vmatprep.mubr.bf16.mxu0 0
        %665 = vmatmul.mubr.bf16.gmra.mxu0 %v474
        %v666 = vpop.f32.mrf.mxu0
        %v667 = vadd.f32 0.0, %v666
        %v668 = vpop.f32.mrf.mxu0
        %v669 = vpop.f32.mrf.mxu0
        %v670 = vpop.f32.mrf.mxu0
        %671 = vdwg.mxu0
        %v676 = vunpack.c.l.b16 %v445
        %v677 = vunpack.c.l.b16 %v446
        %v678 = vunpack.c.l.b16 %v447
        %v679 = vunpack.c.l.b16 %v448
        %v680 = vpack.c.b16 %v677, %v676
        %v681 = vpack.c.b16 %v679, %v678
        %684 = vmatprep.subr.bf16.mxu0 0
        %685 = vmatpush1.bf16.msra.mxu0 0
        %686 = vmatprep.subr.bf16.mxu0 0
        %687 = vmatpush1.bf16.msra.mxu0 0
        %688 = vmatprep.subr.bf16.mxu0 0
        %689 = vmatpush1.bf16.msra.mxu0 0
        %690 = vmatprep.subr.bf16.mxu0 0
        %691 = vmatpush1.bf16.msra.mxu0 0
        %692 = vmatprep.subr.bf16.mxu0 0
        %693 = vmatpush1.bf16.msra.mxu0 0
        %694 = vmatprep.subr.bf16.mxu0 0
        %695 = vmatpush1.bf16.msra.mxu0 0
        %696 = vmatprep.subr.bf16.mxu0 0
        %697 = vmatpush1.bf16.msra.mxu0 %v681
        %698 = vmatprep.subr.bf16.mxu0 0
        %699 = vmatpush1.bf16.msra.mxu0 %v680
        %700 = vmatprep.subr.bf16.mxu0 0
        %701 = vmatpush2.bf16.msra.mxu0 0
        %702 = vmatprep.subr.bf16.mxu0 0
        %703 = vmatpush2.bf16.msra.mxu0 0
        %704 = vmatprep.subr.bf16.mxu0 0
        %705 = vmatpush2.bf16.msra.mxu0 0
        %706 = vmatprep.subr.bf16.mxu0 0
        %707 = vmatpush2.bf16.msra.mxu0 0
        %708 = vmatprep.subr.bf16.mxu0 0
        %709 = vmatpush2.bf16.msra.mxu0 0
        %710 = vmatprep.subr.bf16.mxu0 0
        %711 = vmatpush2.bf16.msra.mxu0 0
        %712 = vmatprep.subr.bf16.mxu0 0
        %713 = vmatpush2.bf16.msra.mxu0 0
        %714 = vmatprep.subr.bf16.mxu0 0
        %715 = vmatpush2.bf16.msra.mxu0 0
        %716 = vmatprep.mubr.bf16.mxu0 0
        %717 = vmatmul.mubr.bf16.gmra.mxu0 %v474
        %v718 = vpop.f32.mrf.mxu0
        %v719 = vadd.f32 0.0, %v718
        %v720 = vpop.f32.mrf.mxu0
        %v721 = vpop.f32.mrf.mxu0
        %v722 = vpop.f32.mrf.mxu0
        %723 = vdwg.mxu0
        %v728 = vunpack.c.l.b16 %v449
        %v729 = vunpack.c.l.b16 %v450
        %v730 = vunpack.c.l.b16 %v451
        %v731 = vunpack.c.l.b16 %v452
        %v732 = vpack.c.b16 %v729, %v728
        %v733 = vpack.c.b16 %v731, %v730
        %736 = vmatprep.subr.bf16.mxu0 0
        %737 = vmatpush1.bf16.msra.mxu0 0
        %738 = vmatprep.subr.bf16.mxu0 0
        %739 = vmatpush1.bf16.msra.mxu0 0
        %740 = vmatprep.subr.bf16.mxu0 0
        %741 = vmatpush1.bf16.msra.mxu0 0
        %742 = vmatprep.subr.bf16.mxu0 0
        %743 = vmatpush1.bf16.msra.mxu0 0
        %744 = vmatprep.subr.bf16.mxu0 0
        %745 = vmatpush1.bf16.msra.mxu0 0
        %746 = vmatprep.subr.bf16.mxu0 0
        %747 = vmatpush1.bf16.msra.mxu0 0
        %748 = vmatprep.subr.bf16.mxu0 0
        %749 = vmatpush1.bf16.msra.mxu0 %v733
        %750 = vmatprep.subr.bf16.mxu0 0
        %751 = vmatpush1.bf16.msra.mxu0 %v732
        %752 = vmatprep.subr.bf16.mxu0 0
        %753 = vmatpush2.bf16.msra.mxu0 0
        %754 = vmatprep.subr.bf16.mxu0 0
        %755 = vmatpush2.bf16.msra.mxu0 0
        %756 = vmatprep.subr.bf16.mxu0 0
        %757 = vmatpush2.bf16.msra.mxu0 0
        %758 = vmatprep.subr.bf16.mxu0 0
        %759 = vmatpush2.bf16.msra.mxu0 0
        %760 = vmatprep.subr.bf16.mxu0 0
        %761 = vmatpush2.bf16.msra.mxu0 0
        %762 = vmatprep.subr.bf16.mxu0 0
        %763 = vmatpush2.bf16.msra.mxu0 0
        %764 = vmatprep.subr.bf16.mxu0 0
        %765 = vmatpush2.bf16.msra.mxu0 0
        %766 = vmatprep.subr.bf16.mxu0 0
        %767 = vmatpush2.bf16.msra.mxu0 0
        %768 = vmatprep.mubr.bf16.mxu0 0
        %769 = vmatmul.mubr.bf16.gmra.mxu0 %v474
        %v770 = vpop.f32.mrf.mxu0
        %v771 = vadd.f32 0.0, %v770
        %v772 = vpop.f32.mrf.mxu0
        %v773 = vpop.f32.mrf.mxu0
        %v774 = vpop.f32.mrf.mxu0
        %775 = vdwg.mxu0
        %v780 = vunpack.c.l.b16 %v453
        %v781 = vunpack.c.l.b16 %v454
        %v782 = vunpack.c.l.b16 %v455
        %v783 = vunpack.c.l.b16 %v456
        %v784 = vpack.c.b16 %v781, %v780
        %v785 = vpack.c.b16 %v783, %v782
        %788 = vmatprep.subr.bf16.mxu0 0
        %789 = vmatpush1.bf16.msra.mxu0 0
        %790 = vmatprep.subr.bf16.mxu0 0
        %791 = vmatpush1.bf16.msra.mxu0 0
        %792 = vmatprep.subr.bf16.mxu0 0
        %793 = vmatpush1.bf16.msra.mxu0 0
        %794 = vmatprep.subr.bf16.mxu0 0
        %795 = vmatpush1.bf16.msra.mxu0 0
        %796 = vmatprep.subr.bf16.mxu0 0
        %797 = vmatpush1.bf16.msra.mxu0 0
        %798 = vmatprep.subr.bf16.mxu0 0
        %799 = vmatpush1.bf16.msra.mxu0 0
        %800 = vmatprep.subr.bf16.mxu0 0
        %801 = vmatpush1.bf16.msra.mxu0 %v785
        %802 = vmatprep.subr.bf16.mxu0 0
        %803 = vmatpush1.bf16.msra.mxu0 %v784
        %804 = vmatprep.subr.bf16.mxu0 0
        %805 = vmatpush2.bf16.msra.mxu0 0
        %806 = vmatprep.subr.bf16.mxu0 0
        %807 = vmatpush2.bf16.msra.mxu0 0
        %808 = vmatprep.subr.bf16.mxu0 0
        %809 = vmatpush2.bf16.msra.mxu0 0
        %810 = vmatprep.subr.bf16.mxu0 0
        %811 = vmatpush2.bf16.msra.mxu0 0
        %812 = vmatprep.subr.bf16.mxu0 0
        %813 = vmatpush2.bf16.msra.mxu0 0
        %814 = vmatprep.subr.bf16.mxu0 0
        %815 = vmatpush2.bf16.msra.mxu0 0
        %816 = vmatprep.subr.bf16.mxu0 0
        %817 = vmatpush2.bf16.msra.mxu0 0
        %818 = vmatprep.subr.bf16.mxu0 0
        %819 = vmatpush2.bf16.msra.mxu0 0
        %820 = vmatprep.mubr.bf16.mxu0 0
        %821 = vmatmul.mubr.bf16.gmra.mxu0 %v474
        %v822 = vpop.f32.mrf.mxu0
        %v823 = vadd.f32 0.0, %v822
        %v824 = vpop.f32.mrf.mxu0
        %v825 = vpop.f32.mrf.mxu0
        %v826 = vpop.f32.mrf.mxu0
        %827 = vdwg.mxu0
        %v832 = vunpack.c.l.b16 %v457
        %v833 = vunpack.c.l.b16 %v458
        %v834 = vunpack.c.l.b16 %v459
        %v835 = vunpack.c.l.b16 %v460
        %v836 = vpack.c.b16 %v833, %v832
        %v837 = vpack.c.b16 %v835, %v834
        %840 = vmatprep.subr.bf16.mxu0 0
        %841 = vmatpush1.bf16.msra.mxu0 0
        %842 = vmatprep.subr.bf16.mxu0 0
        %843 = vmatpush1.bf16.msra.mxu0 0
        %844 = vmatprep.subr.bf16.mxu0 0
        %845 = vmatpush1.bf16.msra.mxu0 0
        %846 = vmatprep.subr.bf16.mxu0 0
        %847 = vmatpush1.bf16.msra.mxu0 0
        %848 = vmatprep.subr.bf16.mxu0 0
        %849 = vmatpush1.bf16.msra.mxu0 0
        %850 = vmatprep.subr.bf16.mxu0 0
        %851 = vmatpush1.bf16.msra.mxu0 0
        %852 = vmatprep.subr.bf16.mxu0 0
        %853 = vmatpush1.bf16.msra.mxu0 %v837
        %854 = vmatprep.subr.bf16.mxu0 0
        %855 = vmatpush1.bf16.msra.mxu0 %v836
        %856 = vmatprep.subr.bf16.mxu0 0
        %857 = vmatpush2.bf16.msra.mxu0 0
        %858 = vmatprep.subr.bf16.mxu0 0
        %859 = vmatpush2.bf16.msra.mxu0 0
        %860 = vmatprep.subr.bf16.mxu0 0
        %861 = vmatpush2.bf16.msra.mxu0 0
        %862 = vmatprep.subr.bf16.mxu0 0
        %863 = vmatpush2.bf16.msra.mxu0 0
        %864 = vmatprep.subr.bf16.mxu0 0
        %865 = vmatpush2.bf16.msra.mxu0 0
        %866 = vmatprep.subr.bf16.mxu0 0
        %867 = vmatpush2.bf16.msra.mxu0 0
        %868 = vmatprep.subr.bf16.mxu0 0
        %869 = vmatpush2.bf16.msra.mxu0 0
        %870 = vmatprep.subr.bf16.mxu0 0
        %871 = vmatpush2.bf16.msra.mxu0 0
        %872 = vmatprep.mubr.bf16.mxu0 0
        %873 = vmatmul.mubr.bf16.gmra.mxu0 %v474
        %v874 = vpop.f32.mrf.mxu0
        %v875 = vadd.f32 0.0, %v874
        %v876 = vpop.f32.mrf.mxu0
        %v877 = vpop.f32.mrf.mxu0
        %v878 = vpop.f32.mrf.mxu0
        %879 = vdwg.mxu0
        %v880 = vpack.c.bf16 %v511, %v511
        %v881 = vpack.c.bf16 %v563, %v563
        %v882 = vpack.c.bf16 %v615, %v615
        %v883 = vpack.c.bf16 %v667, %v667
        %v884 = vpack.c.bf16 %v719, %v719
        %v885 = vpack.c.bf16 %v771, %v771
        %v886 = vpack.c.bf16 %v823, %v823
        %v887 = vpack.c.bf16 %v875, %v875
        %v888 = vld [vmem:[%s4] sm:$0xf]
        %v889 = vld [vmem:[%s4 + $0x4] sm:$0xf]
        %v890 = vld [vmem:[%s4 + $0x8] sm:$0xf]
        %v891 = vld [vmem:[%s4 + $0xc] sm:$0xf]
        %v892 = vld [vmem:[%s4 + $0x10] sm:$0xf]
        %v893 = vld [vmem:[%s4 + $0x14] sm:$0xf]
        %v894 = vld [vmem:[%s4 + $0x18] sm:$0xf]
        %v895 = vld [vmem:[%s4 + $0x1c] sm:$0xf]
        %v896 = vld [vmem:[%s4 + $0x20] sm:$0xf]
        %v897 = vld [vmem:[%s4 + $0x24] sm:$0xf]
        %v898 = vld [vmem:[%s4 + $0x28] sm:$0xf]
        %v899 = vld [vmem:[%s4 + $0x2c] sm:$0xf]
        %v900 = vld [vmem:[%s4 + $0x30] sm:$0xf]
        %v901 = vld [vmem:[%s4 + $0x34] sm:$0xf]
        %v902 = vld [vmem:[%s4 + $0x38] sm:$0xf]
        %v903 = vld [vmem:[%s4 + $0x3c] sm:$0xf]
        %v904 = vld [vmem:[%s4 + $0x40] sm:$0xf]
        %v905 = vld [vmem:[%s4 + $0x44] sm:$0xf]
        %v906 = vld [vmem:[%s4 + $0x48] sm:$0xf]
        %v907 = vld [vmem:[%s4 + $0x4c] sm:$0xf]
        %v908 = vld [vmem:[%s4 + $0x50] sm:$0xf]
        %v909 = vld [vmem:[%s4 + $0x54] sm:$0xf]
        %v910 = vld [vmem:[%s4 + $0x58] sm:$0xf]
        %v911 = vld [vmem:[%s4 + $0x5c] sm:$0xf]
        %v912 = vld [vmem:[%s4 + $0x60] sm:$0xf]
        %v913 = vld [vmem:[%s4 + $0x64] sm:$0xf]
        %v914 = vld [vmem:[%s4 + $0x68] sm:$0xf]
        %v915 = vld [vmem:[%s4 + $0x6c] sm:$0xf]
        %v916 = vld [vmem:[%s4 + $0x70] sm:$0xf]
        %v917 = vld [vmem:[%s4 + $0x74] sm:$0xf]
        %v918 = vld [vmem:[%s4 + $0x78] sm:$0xf]
        %v919 = vld [vmem:[%s4 + $0x7c] sm:$0xf]
        %v924 = vunpack.c.l.b16 %v888
        %v925 = vunpack.c.l.b16 %v889
        %v926 = vunpack.c.l.b16 %v890
        %v927 = vunpack.c.l.b16 %v891
        %v928 = vpack.c.b16 %v925, %v924
        %v929 = vpack.c.b16 %v927, %v926
        %v933 = vsel %vm353, %v428, 0
        %935 = vmatprep.subr.bf16.mxu0 0
        %936 = vmatpush1.bf16.msra.mxu0 0
        %937 = vmatprep.subr.bf16.mxu0 0
        %938 = vmatpush1.bf16.msra.mxu0 0
        %939 = vmatprep.subr.bf16.mxu0 0
        %940 = vmatpush1.bf16.msra.mxu0 0
        %941 = vmatprep.subr.bf16.mxu0 0
        %942 = vmatpush1.bf16.msra.mxu0 0
        %943 = vmatprep.subr.bf16.mxu0 0
        %944 = vmatpush1.bf16.msra.mxu0 0
        %945 = vmatprep.subr.bf16.mxu0 0
        %946 = vmatpush1.bf16.msra.mxu0 0
        %947 = vmatprep.subr.bf16.mxu0 0
        %948 = vmatpush1.bf16.msra.mxu0 %v929
        %949 = vmatprep.subr.bf16.mxu0 0
        %950 = vmatpush1.bf16.msra.mxu0 %v928
        %951 = vmatprep.subr.bf16.mxu0 0
        %952 = vmatpush2.bf16.msra.mxu0 0
        %953 = vmatprep.subr.bf16.mxu0 0
        %954 = vmatpush2.bf16.msra.mxu0 0
        %955 = vmatprep.subr.bf16.mxu0 0
        %956 = vmatpush2.bf16.msra.mxu0 0
        %957 = vmatprep.subr.bf16.mxu0 0
        %958 = vmatpush2.bf16.msra.mxu0 0
        %959 = vmatprep.subr.bf16.mxu0 0
        %960 = vmatpush2.bf16.msra.mxu0 0
        %961 = vmatprep.subr.bf16.mxu0 0
        %962 = vmatpush2.bf16.msra.mxu0 0
        %963 = vmatprep.subr.bf16.mxu0 0
        %964 = vmatpush2.bf16.msra.mxu0 0
        %965 = vmatprep.subr.bf16.mxu0 0
        %966 = vmatpush2.bf16.msra.mxu0 0
        %967 = vmatprep.mubr.bf16.mxu0 0
        %968 = vmatmul.mubr.bf16.gmra.mxu0 %v933
        %v969 = vpop.f32.mrf.mxu0
        %v970 = vadd.f32 0.0, %v969
        %v971 = vpop.f32.mrf.mxu0
        %v972 = vpop.f32.mrf.mxu0
        %v973 = vadd.f32 0.0, %v972
        %v974 = vpop.f32.mrf.mxu0
        %975 = vdwg.mxu0
        %v980 = vunpack.c.l.b16 %v892
        %v981 = vunpack.c.l.b16 %v893
        %v982 = vunpack.c.l.b16 %v894
        %v983 = vunpack.c.l.b16 %v895
        %v984 = vpack.c.b16 %v981, %v980
        %v985 = vpack.c.b16 %v983, %v982
        %988 = vmatprep.subr.bf16.mxu0 0
        %989 = vmatpush1.bf16.msra.mxu0 0
        %990 = vmatprep.subr.bf16.mxu0 0
        %991 = vmatpush1.bf16.msra.mxu0 0
        %992 = vmatprep.subr.bf16.mxu0 0
        %993 = vmatpush1.bf16.msra.mxu0 0
        %994 = vmatprep.subr.bf16.mxu0 0
        %995 = vmatpush1.bf16.msra.mxu0 0
        %996 = vmatprep.subr.bf16.mxu0 0
        %997 = vmatpush1.bf16.msra.mxu0 0
        %998 = vmatprep.subr.bf16.mxu0 0
        %999 = vmatpush1.bf16.msra.mxu0 0
        %1000 = vmatprep.subr.bf16.mxu0 0
        %1001 = vmatpush1.bf16.msra.mxu0 %v985
        %1002 = vmatprep.subr.bf16.mxu0 0
        %1003 = vmatpush1.bf16.msra.mxu0 %v984
        %1004 = vmatprep.subr.bf16.mxu0 0
        %1005 = vmatpush2.bf16.msra.mxu0 0
        %1006 = vmatprep.subr.bf16.mxu0 0
        %1007 = vmatpush2.bf16.msra.mxu0 0
        %1008 = vmatprep.subr.bf16.mxu0 0
        %1009 = vmatpush2.bf16.msra.mxu0 0
        %1010 = vmatprep.subr.bf16.mxu0 0
        %1011 = vmatpush2.bf16.msra.mxu0 0
        %1012 = vmatprep.subr.bf16.mxu0 0
        %1013 = vmatpush2.bf16.msra.mxu0 0
        %1014 = vmatprep.subr.bf16.mxu0 0
        %1015 = vmatpush2.bf16.msra.mxu0 0
        %1016 = vmatprep.subr.bf16.mxu0 0
        %1017 = vmatpush2.bf16.msra.mxu0 0
        %1018 = vmatprep.subr.bf16.mxu0 0
        %1019 = vmatpush2.bf16.msra.mxu0 0
        %1020 = vmatprep.mubr.bf16.mxu0 0
        %1021 = vmatmul.mubr.bf16.gmra.mxu0 %v933
        %v1022 = vpop.f32.mrf.mxu0
        %v1023 = vadd.f32 0.0, %v1022
        %v1024 = vpop.f32.mrf.mxu0
        %v1025 = vpop.f32.mrf.mxu0
        %v1026 = vadd.f32 0.0, %v1025
        %v1027 = vpop.f32.mrf.mxu0
        %1028 = vdwg.mxu0
        %v1033 = vunpack.c.l.b16 %v896
        %v1034 = vunpack.c.l.b16 %v897
        %v1035 = vunpack.c.l.b16 %v898
        %v1036 = vunpack.c.l.b16 %v899
        %v1037 = vpack.c.b16 %v1034, %v1033
        %v1038 = vpack.c.b16 %v1036, %v1035
        %1041 = vmatprep.subr.bf16.mxu0 0
        %1042 = vmatpush1.bf16.msra.mxu0 0
        %1043 = vmatprep.subr.bf16.mxu0 0
        %1044 = vmatpush1.bf16.msra.mxu0 0
        %1045 = vmatprep.subr.bf16.mxu0 0
        %1046 = vmatpush1.bf16.msra.mxu0 0
        %1047 = vmatprep.subr.bf16.mxu0 0
        %1048 = vmatpush1.bf16.msra.mxu0 0
        %1049 = vmatprep.subr.bf16.mxu0 0
        %1050 = vmatpush1.bf16.msra.mxu0 0
        %1051 = vmatprep.subr.bf16.mxu0 0
        %1052 = vmatpush1.bf16.msra.mxu0 0
        %1053 = vmatprep.subr.bf16.mxu0 0
        %1054 = vmatpush1.bf16.msra.mxu0 %v1038
        %1055 = vmatprep.subr.bf16.mxu0 0
        %1056 = vmatpush1.bf16.msra.mxu0 %v1037
        %1057 = vmatprep.subr.bf16.mxu0 0
        %1058 = vmatpush2.bf16.msra.mxu0 0
        %1059 = vmatprep.subr.bf16.mxu0 0
        %1060 = vmatpush2.bf16.msra.mxu0 0
        %1061 = vmatprep.subr.bf16.mxu0 0
        %1062 = vmatpush2.bf16.msra.mxu0 0
        %1063 = vmatprep.subr.bf16.mxu0 0
        %1064 = vmatpush2.bf16.msra.mxu0 0
        %1065 = vmatprep.subr.bf16.mxu0 0
        %1066 = vmatpush2.bf16.msra.mxu0 0
        %1067 = vmatprep.subr.bf16.mxu0 0
        %1068 = vmatpush2.bf16.msra.mxu0 0
        %1069 = vmatprep.subr.bf16.mxu0 0
        %1070 = vmatpush2.bf16.msra.mxu0 0
        %1071 = vmatprep.subr.bf16.mxu0 0
        %1072 = vmatpush2.bf16.msra.mxu0 0
        %1073 = vmatprep.mubr.bf16.mxu0 0
        %1074 = vmatmul.mubr.bf16.gmra.mxu0 %v933
        %v1075 = vpop.f32.mrf.mxu0
        %v1076 = vadd.f32 0.0, %v1075
        %v1077 = vpop.f32.mrf.mxu0
        %v1078 = vpop.f32.mrf.mxu0
        %v1079 = vadd.f32 0.0, %v1078
        %v1080 = vpop.f32.mrf.mxu0
        %1081 = vdwg.mxu0
        %v1086 = vunpack.c.l.b16 %v900
        %v1087 = vunpack.c.l.b16 %v901
        %v1088 = vunpack.c.l.b16 %v902
        %v1089 = vunpack.c.l.b16 %v903
        %v1090 = vpack.c.b16 %v1087, %v1086
        %v1091 = vpack.c.b16 %v1089, %v1088
        %1094 = vmatprep.subr.bf16.mxu0 0
        %1095 = vmatpush1.bf16.msra.mxu0 0
        %1096 = vmatprep.subr.bf16.mxu0 0
        %1097 = vmatpush1.bf16.msra.mxu0 0
        %1098 = vmatprep.subr.bf16.mxu0 0
        %1099 = vmatpush1.bf16.msra.mxu0 0
        %1100 = vmatprep.subr.bf16.mxu0 0
        %1101 = vmatpush1.bf16.msra.mxu0 0
        %1102 = vmatprep.subr.bf16.mxu0 0
        %1103 = vmatpush1.bf16.msra.mxu0 0
        %1104 = vmatprep.subr.bf16.mxu0 0
        %1105 = vmatpush1.bf16.msra.mxu0 0
        %1106 = vmatprep.subr.bf16.mxu0 0
        %1107 = vmatpush1.bf16.msra.mxu0 %v1091
        %1108 = vmatprep.subr.bf16.mxu0 0
        %1109 = vmatpush1.bf16.msra.mxu0 %v1090
        %1110 = vmatprep.subr.bf16.mxu0 0
        %1111 = vmatpush2.bf16.msra.mxu0 0
        %1112 = vmatprep.subr.bf16.mxu0 0
        %1113 = vmatpush2.bf16.msra.mxu0 0
        %1114 = vmatprep.subr.bf16.mxu0 0
        %1115 = vmatpush2.bf16.msra.mxu0 0
        %1116 = vmatprep.subr.bf16.mxu0 0
        %1117 = vmatpush2.bf16.msra.mxu0 0
        %1118 = vmatprep.subr.bf16.mxu0 0
        %1119 = vmatpush2.bf16.msra.mxu0 0
        %1120 = vmatprep.subr.bf16.mxu0 0
        %1121 = vmatpush2.bf16.msra.mxu0 0
        %1122 = vmatprep.subr.bf16.mxu0 0
        %1123 = vmatpush2.bf16.msra.mxu0 0
        %1124 = vmatprep.subr.bf16.mxu0 0
        %1125 = vmatpush2.bf16.msra.mxu0 0
        %1126 = vmatprep.mubr.bf16.mxu0 0
        %1127 = vmatmul.mubr.bf16.gmra.mxu0 %v933
        %v1128 = vpop.f32.mrf.mxu0
        %v1129 = vadd.f32 0.0, %v1128
        %v1130 = vpop.f32.mrf.mxu0
        %v1131 = vpop.f32.mrf.mxu0
        %v1132 = vadd.f32 0.0, %v1131
        %v1133 = vpop.f32.mrf.mxu0
        %1134 = vdwg.mxu0
        %v1139 = vunpack.c.l.b16 %v904
        %v1140 = vunpack.c.l.b16 %v905
        %v1141 = vunpack.c.l.b16 %v906
        %v1142 = vunpack.c.l.b16 %v907
        %v1143 = vpack.c.b16 %v1140, %v1139
        %v1144 = vpack.c.b16 %v1142, %v1141
        %1147 = vmatprep.subr.bf16.mxu0 0
        %1148 = vmatpush1.bf16.msra.mxu0 0
        %1149 = vmatprep.subr.bf16.mxu0 0
        %1150 = vmatpush1.bf16.msra.mxu0 0
        %1151 = vmatprep.subr.bf16.mxu0 0
        %1152 = vmatpush1.bf16.msra.mxu0 0
        %1153 = vmatprep.subr.bf16.mxu0 0
        %1154 = vmatpush1.bf16.msra.mxu0 0
        %1155 = vmatprep.subr.bf16.mxu0 0
        %1156 = vmatpush1.bf16.msra.mxu0 0
        %1157 = vmatprep.subr.bf16.mxu0 0
        %1158 = vmatpush1.bf16.msra.mxu0 0
        %1159 = vmatprep.subr.bf16.mxu0 0
        %1160 = vmatpush1.bf16.msra.mxu0 %v1144
        %1161 = vmatprep.subr.bf16.mxu0 0
        %1162 = vmatpush1.bf16.msra.mxu0 %v1143
        %1163 = vmatprep.subr.bf16.mxu0 0
        %1164 = vmatpush2.bf16.msra.mxu0 0
        %1165 = vmatprep.subr.bf16.mxu0 0
        %1166 = vmatpush2.bf16.msra.mxu0 0
        %1167 = vmatprep.subr.bf16.mxu0 0
        %1168 = vmatpush2.bf16.msra.mxu0 0
        %1169 = vmatprep.subr.bf16.mxu0 0
        %1170 = vmatpush2.bf16.msra.mxu0 0
        %1171 = vmatprep.subr.bf16.mxu0 0
        %1172 = vmatpush2.bf16.msra.mxu0 0
        %1173 = vmatprep.subr.bf16.mxu0 0
        %1174 = vmatpush2.bf16.msra.mxu0 0
        %1175 = vmatprep.subr.bf16.mxu0 0
        %1176 = vmatpush2.bf16.msra.mxu0 0
        %1177 = vmatprep.subr.bf16.mxu0 0
        %1178 = vmatpush2.bf16.msra.mxu0 0
        %1179 = vmatprep.mubr.bf16.mxu0 0
        %1180 = vmatmul.mubr.bf16.gmra.mxu0 %v933
        %v1181 = vpop.f32.mrf.mxu0
        %v1182 = vadd.f32 0.0, %v1181
        %v1183 = vpop.f32.mrf.mxu0
        %v1184 = vpop.f32.mrf.mxu0
        %v1185 = vadd.f32 0.0, %v1184
        %v1186 = vpop.f32.mrf.mxu0
        %1187 = vdwg.mxu0
        %v1192 = vunpack.c.l.b16 %v908
        %v1193 = vunpack.c.l.b16 %v909
        %v1194 = vunpack.c.l.b16 %v910
        %v1195 = vunpack.c.l.b16 %v911
        %v1196 = vpack.c.b16 %v1193, %v1192
        %v1197 = vpack.c.b16 %v1195, %v1194
        %1200 = vmatprep.subr.bf16.mxu0 0
        %1201 = vmatpush1.bf16.msra.mxu0 0
        %1202 = vmatprep.subr.bf16.mxu0 0
        %1203 = vmatpush1.bf16.msra.mxu0 0
        %1204 = vmatprep.subr.bf16.mxu0 0
        %1205 = vmatpush1.bf16.msra.mxu0 0
        %1206 = vmatprep.subr.bf16.mxu0 0
        %1207 = vmatpush1.bf16.msra.mxu0 0
        %1208 = vmatprep.subr.bf16.mxu0 0
        %1209 = vmatpush1.bf16.msra.mxu0 0
        %1210 = vmatprep.subr.bf16.mxu0 0
        %1211 = vmatpush1.bf16.msra.mxu0 0
        %1212 = vmatprep.subr.bf16.mxu0 0
        %1213 = vmatpush1.bf16.msra.mxu0 %v1197
        %1214 = vmatprep.subr.bf16.mxu0 0
        %1215 = vmatpush1.bf16.msra.mxu0 %v1196
        %1216 = vmatprep.subr.bf16.mxu0 0
        %1217 = vmatpush2.bf16.msra.mxu0 0
        %1218 = vmatprep.subr.bf16.mxu0 0
        %1219 = vmatpush2.bf16.msra.mxu0 0
        %1220 = vmatprep.subr.bf16.mxu0 0
        %1221 = vmatpush2.bf16.msra.mxu0 0
        %1222 = vmatprep.subr.bf16.mxu0 0
        %1223 = vmatpush2.bf16.msra.mxu0 0
        %1224 = vmatprep.subr.bf16.mxu0 0
        %1225 = vmatpush2.bf16.msra.mxu0 0
        %1226 = vmatprep.subr.bf16.mxu0 0
        %1227 = vmatpush2.bf16.msra.mxu0 0
        %1228 = vmatprep.subr.bf16.mxu0 0
        %1229 = vmatpush2.bf16.msra.mxu0 0
        %1230 = vmatprep.subr.bf16.mxu0 0
        %1231 = vmatpush2.bf16.msra.mxu0 0
        %1232 = vmatprep.mubr.bf16.mxu0 0
        %1233 = vmatmul.mubr.bf16.gmra.mxu0 %v933
        %v1234 = vpop.f32.mrf.mxu0
        %v1235 = vadd.f32 0.0, %v1234
        %v1236 = vpop.f32.mrf.mxu0
        %v1237 = vpop.f32.mrf.mxu0
        %v1238 = vadd.f32 0.0, %v1237
        %v1239 = vpop.f32.mrf.mxu0
        %1240 = vdwg.mxu0
        %v1245 = vunpack.c.l.b16 %v912
        %v1246 = vunpack.c.l.b16 %v913
        %v1247 = vunpack.c.l.b16 %v914
        %v1248 = vunpack.c.l.b16 %v915
        %v1249 = vpack.c.b16 %v1246, %v1245
        %v1250 = vpack.c.b16 %v1248, %v1247
        %1253 = vmatprep.subr.bf16.mxu0 0
        %1254 = vmatpush1.bf16.msra.mxu0 0
        %1255 = vmatprep.subr.bf16.mxu0 0
        %1256 = vmatpush1.bf16.msra.mxu0 0
        %1257 = vmatprep.subr.bf16.mxu0 0
        %1258 = vmatpush1.bf16.msra.mxu0 0
        %1259 = vmatprep.subr.bf16.mxu0 0
        %1260 = vmatpush1.bf16.msra.mxu0 0
        %1261 = vmatprep.subr.bf16.mxu0 0
        %1262 = vmatpush1.bf16.msra.mxu0 0
        %1263 = vmatprep.subr.bf16.mxu0 0
        %1264 = vmatpush1.bf16.msra.mxu0 0
        %1265 = vmatprep.subr.bf16.mxu0 0
        %1266 = vmatpush1.bf16.msra.mxu0 %v1250
        %1267 = vmatprep.subr.bf16.mxu0 0
        %1268 = vmatpush1.bf16.msra.mxu0 %v1249
        %1269 = vmatprep.subr.bf16.mxu0 0
        %1270 = vmatpush2.bf16.msra.mxu0 0
        %1271 = vmatprep.subr.bf16.mxu0 0
        %1272 = vmatpush2.bf16.msra.mxu0 0
        %1273 = vmatprep.subr.bf16.mxu0 0
        %1274 = vmatpush2.bf16.msra.mxu0 0
        %1275 = vmatprep.subr.bf16.mxu0 0
        %1276 = vmatpush2.bf16.msra.mxu0 0
        %1277 = vmatprep.subr.bf16.mxu0 0
        %1278 = vmatpush2.bf16.msra.mxu0 0
        %1279 = vmatprep.subr.bf16.mxu0 0
        %1280 = vmatpush2.bf16.msra.mxu0 0
        %1281 = vmatprep.subr.bf16.mxu0 0
        %1282 = vmatpush2.bf16.msra.mxu0 0
        %1283 = vmatprep.subr.bf16.mxu0 0
        %1284 = vmatpush2.bf16.msra.mxu0 0
        %1285 = vmatprep.mubr.bf16.mxu0 0
        %1286 = vmatmul.mubr.bf16.gmra.mxu0 %v933
        %v1287 = vpop.f32.mrf.mxu0
        %v1288 = vadd.f32 0.0, %v1287
        %v1289 = vpop.f32.mrf.mxu0
        %v1290 = vpop.f32.mrf.mxu0
        %v1291 = vadd.f32 0.0, %v1290
        %v1292 = vpop.f32.mrf.mxu0
        %1293 = vdwg.mxu0
        %v1298 = vunpack.c.l.b16 %v916
        %v1299 = vunpack.c.l.b16 %v917
        %v1300 = vunpack.c.l.b16 %v918
        %v1301 = vunpack.c.l.b16 %v919
        %v1302 = vpack.c.b16 %v1299, %v1298
        %v1303 = vpack.c.b16 %v1301, %v1300
        %1306 = vmatprep.subr.bf16.mxu0 0
        %1307 = vmatpush1.bf16.msra.mxu0 0
        %1308 = vmatprep.subr.bf16.mxu0 0
        %1309 = vmatpush1.bf16.msra.mxu0 0
        %1310 = vmatprep.subr.bf16.mxu0 0
        %1311 = vmatpush1.bf16.msra.mxu0 0
        %1312 = vmatprep.subr.bf16.mxu0 0
        %1313 = vmatpush1.bf16.msra.mxu0 0
        %1314 = vmatprep.subr.bf16.mxu0 0
        %1315 = vmatpush1.bf16.msra.mxu0 0
        %1316 = vmatprep.subr.bf16.mxu0 0
        %1317 = vmatpush1.bf16.msra.mxu0 0
        %1318 = vmatprep.subr.bf16.mxu0 0
        %1319 = vmatpush1.bf16.msra.mxu0 %v1303
        %1320 = vmatprep.subr.bf16.mxu0 0
        %1321 = vmatpush1.bf16.msra.mxu0 %v1302
        %1322 = vmatprep.subr.bf16.mxu0 0
        %1323 = vmatpush2.bf16.msra.mxu0 0
        %1324 = vmatprep.subr.bf16.mxu0 0
        %1325 = vmatpush2.bf16.msra.mxu0 0
        %1326 = vmatprep.subr.bf16.mxu0 0
        %1327 = vmatpush2.bf16.msra.mxu0 0
        %1328 = vmatprep.subr.bf16.mxu0 0
        %1329 = vmatpush2.bf16.msra.mxu0 0
        %1330 = vmatprep.subr.bf16.mxu0 0
        %1331 = vmatpush2.bf16.msra.mxu0 0
        %1332 = vmatprep.subr.bf16.mxu0 0
        %1333 = vmatpush2.bf16.msra.mxu0 0
        %1334 = vmatprep.subr.bf16.mxu0 0
        %1335 = vmatpush2.bf16.msra.mxu0 0
        %1336 = vmatprep.subr.bf16.mxu0 0
        %1337 = vmatpush2.bf16.msra.mxu0 0
        %1338 = vmatprep.mubr.bf16.mxu0 0
        %1339 = vmatmul.mubr.bf16.gmra.mxu0 %v933
        %v1340 = vpop.f32.mrf.mxu0
        %v1341 = vadd.f32 0.0, %v1340
        %v1342 = vpop.f32.mrf.mxu0
        %v1343 = vpop.f32.mrf.mxu0
        %v1344 = vadd.f32 0.0, %v1343
        %v1345 = vpop.f32.mrf.mxu0
        %1346 = vdwg.mxu0
        %v1347 = vpack.c.bf16 %v973, %v970
        %v1348 = vpack.c.bf16 %v1026, %v1023
        %v1349 = vpack.c.bf16 %v1079, %v1076
        %v1350 = vpack.c.bf16 %v1132, %v1129
        %v1351 = vpack.c.bf16 %v1185, %v1182
        %v1352 = vpack.c.bf16 %v1238, %v1235
        %v1353 = vpack.c.bf16 %v1291, %v1288
        %v1354 = vpack.c.bf16 %v1344, %v1341
        %v1355 = vld [vmem:[%s5] sm:$0xf]
        %v1356 = vld [vmem:[%s5 + $0x4] sm:$0xf]
        %v1357 = vld [vmem:[%s5 + $0x8] sm:$0xf]
        %v1358 = vld [vmem:[%s5 + $0xc] sm:$0xf]
        %v1359 = vld [vmem:[%s5 + $0x10] sm:$0xf]
        %v1360 = vld [vmem:[%s5 + $0x14] sm:$0xf]
        %v1361 = vld [vmem:[%s5 + $0x18] sm:$0xf]
        %v1362 = vld [vmem:[%s5 + $0x1c] sm:$0xf]
        %v1363 = vld [vmem:[%s5 + $0x20] sm:$0xf]
        %v1364 = vld [vmem:[%s5 + $0x24] sm:$0xf]
        %v1365 = vld [vmem:[%s5 + $0x28] sm:$0xf]
        %v1366 = vld [vmem:[%s5 + $0x2c] sm:$0xf]
        %v1367 = vld [vmem:[%s5 + $0x30] sm:$0xf]
        %v1368 = vld [vmem:[%s5 + $0x34] sm:$0xf]
        %v1369 = vld [vmem:[%s5 + $0x38] sm:$0xf]
        %v1370 = vld [vmem:[%s5 + $0x3c] sm:$0xf]
        %v1371 = vld [vmem:[%s5 + $0x40] sm:$0xf]
        %v1372 = vld [vmem:[%s5 + $0x44] sm:$0xf]
        %v1373 = vld [vmem:[%s5 + $0x48] sm:$0xf]
        %v1374 = vld [vmem:[%s5 + $0x4c] sm:$0xf]
        %v1375 = vld [vmem:[%s5 + $0x50] sm:$0xf]
        %v1376 = vld [vmem:[%s5 + $0x54] sm:$0xf]
        %v1377 = vld [vmem:[%s5 + $0x58] sm:$0xf]
        %v1378 = vld [vmem:[%s5 + $0x5c] sm:$0xf]
        %v1379 = vld [vmem:[%s5 + $0x60] sm:$0xf]
        %v1380 = vld [vmem:[%s5 + $0x64] sm:$0xf]
        %v1381 = vld [vmem:[%s5 + $0x68] sm:$0xf]
        %v1382 = vld [vmem:[%s5 + $0x6c] sm:$0xf]
        %v1383 = vld [vmem:[%s5 + $0x70] sm:$0xf]
        %v1384 = vld [vmem:[%s5 + $0x74] sm:$0xf]
        %v1385 = vld [vmem:[%s5 + $0x78] sm:$0xf]
        %v1386 = vld [vmem:[%s5 + $0x7c] sm:$0xf]
        %v1391 = vunpack.c.l.b16 %v1355
        %v1392 = vunpack.c.l.b16 %v1356
        %v1393 = vunpack.c.l.b16 %v1357
        %v1394 = vunpack.c.l.b16 %v1358
        %v1395 = vpack.c.b16 %v1392, %v1391
        %v1396 = vpack.c.b16 %v1394, %v1393
        %1399 = vmatprep.subr.bf16.mxu0 0
        %1400 = vmatpush1.bf16.msra.mxu0 0
        %1401 = vmatprep.subr.bf16.mxu0 0
        %1402 = vmatpush1.bf16.msra.mxu0 0
        %1403 = vmatprep.subr.bf16.mxu0 0
        %1404 = vmatpush1.bf16.msra.mxu0 0
        %1405 = vmatprep.subr.bf16.mxu0 0
        %1406 = vmatpush1.bf16.msra.mxu0 0
        %1407 = vmatprep.subr.bf16.mxu0 0
        %1408 = vmatpush1.bf16.msra.mxu0 0
        %1409 = vmatprep.subr.bf16.mxu0 0
        %1410 = vmatpush1.bf16.msra.mxu0 0
        %1411 = vmatprep.subr.bf16.mxu0 0
        %1412 = vmatpush1.bf16.msra.mxu0 %v1396
        %1413 = vmatprep.subr.bf16.mxu0 0
        %1414 = vmatpush1.bf16.msra.mxu0 %v1395
        %1415 = vmatprep.subr.bf16.mxu0 0
        %1416 = vmatpush2.bf16.msra.mxu0 0
        %1417 = vmatprep.subr.bf16.mxu0 0
        %1418 = vmatpush2.bf16.msra.mxu0 0
        %1419 = vmatprep.subr.bf16.mxu0 0
        %1420 = vmatpush2.bf16.msra.mxu0 0
        %1421 = vmatprep.subr.bf16.mxu0 0
        %1422 = vmatpush2.bf16.msra.mxu0 0
        %1423 = vmatprep.subr.bf16.mxu0 0
        %1424 = vmatpush2.bf16.msra.mxu0 0
        %1425 = vmatprep.subr.bf16.mxu0 0
        %1426 = vmatpush2.bf16.msra.mxu0 0
        %1427 = vmatprep.subr.bf16.mxu0 0
        %1428 = vmatpush2.bf16.msra.mxu0 0
        %1429 = vmatprep.subr.bf16.mxu0 0
        %1430 = vmatpush2.bf16.msra.mxu0 0
        %1431 = vmatprep.mubr.bf16.mxu0 0
        %1432 = vmatmul.mubr.bf16.gmra.mxu0 %v933
        %v1433 = vpop.f32.mrf.mxu0
        %v1434 = vadd.f32 0.0, %v1433
        %v1435 = vpop.f32.mrf.mxu0
        %v1436 = vpop.f32.mrf.mxu0
        %v1437 = vadd.f32 0.0, %v1436
        %v1438 = vpop.f32.mrf.mxu0
        %1439 = vdwg.mxu0
        %v1444 = vunpack.c.l.b16 %v1359
        %v1445 = vunpack.c.l.b16 %v1360
        %v1446 = vunpack.c.l.b16 %v1361
        %v1447 = vunpack.c.l.b16 %v1362
        %v1448 = vpack.c.b16 %v1445, %v1444
        %v1449 = vpack.c.b16 %v1447, %v1446
        %1452 = vmatprep.subr.bf16.mxu0 0
        %1453 = vmatpush1.bf16.msra.mxu0 0
        %1454 = vmatprep.subr.bf16.mxu0 0
        %1455 = vmatpush1.bf16.msra.mxu0 0
        %1456 = vmatprep.subr.bf16.mxu0 0
        %1457 = vmatpush1.bf16.msra.mxu0 0
        %1458 = vmatprep.subr.bf16.mxu0 0
        %1459 = vmatpush1.bf16.msra.mxu0 0
        %1460 = vmatprep.subr.bf16.mxu0 0
        %1461 = vmatpush1.bf16.msra.mxu0 0
        %1462 = vmatprep.subr.bf16.mxu0 0
        %1463 = vmatpush1.bf16.msra.mxu0 0
        %1464 = vmatprep.subr.bf16.mxu0 0
        %1465 = vmatpush1.bf16.msra.mxu0 %v1449
        %1466 = vmatprep.subr.bf16.mxu0 0
        %1467 = vmatpush1.bf16.msra.mxu0 %v1448
        %1468 = vmatprep.subr.bf16.mxu0 0
        %1469 = vmatpush2.bf16.msra.mxu0 0
        %1470 = vmatprep.subr.bf16.mxu0 0
        %1471 = vmatpush2.bf16.msra.mxu0 0
        %1472 = vmatprep.subr.bf16.mxu0 0
        %1473 = vmatpush2.bf16.msra.mxu0 0
        %1474 = vmatprep.subr.bf16.mxu0 0
        %1475 = vmatpush2.bf16.msra.mxu0 0
        %1476 = vmatprep.subr.bf16.mxu0 0
        %1477 = vmatpush2.bf16.msra.mxu0 0
        %1478 = vmatprep.subr.bf16.mxu0 0
        %1479 = vmatpush2.bf16.msra.mxu0 0
        %1480 = vmatprep.subr.bf16.mxu0 0
        %1481 = vmatpush2.bf16.msra.mxu0 0
        %1482 = vmatprep.subr.bf16.mxu0 0
        %1483 = vmatpush2.bf16.msra.mxu0 0
        %1484 = vmatprep.mubr.bf16.mxu0 0
        %1485 = vmatmul.mubr.bf16.gmra.mxu0 %v933
        %v1486 = vpop.f32.mrf.mxu0
        %v1487 = vadd.f32 0.0, %v1486
        %v1488 = vpop.f32.mrf.mxu0
        %v1489 = vpop.f32.mrf.mxu0
        %v1490 = vadd.f32 0.0, %v1489
        %v1491 = vpop.f32.mrf.mxu0
        %1492 = vdwg.mxu0
        %v1497 = vunpack.c.l.b16 %v1363
        %v1498 = vunpack.c.l.b16 %v1364
        %v1499 = vunpack.c.l.b16 %v1365
        %v1500 = vunpack.c.l.b16 %v1366
        %v1501 = vpack.c.b16 %v1498, %v1497
        %v1502 = vpack.c.b16 %v1500, %v1499
        %1505 = vmatprep.subr.bf16.mxu0 0
        %1506 = vmatpush1.bf16.msra.mxu0 0
        %1507 = vmatprep.subr.bf16.mxu0 0
        %1508 = vmatpush1.bf16.msra.mxu0 0
        %1509 = vmatprep.subr.bf16.mxu0 0
        %1510 = vmatpush1.bf16.msra.mxu0 0
        %1511 = vmatprep.subr.bf16.mxu0 0
        %1512 = vmatpush1.bf16.msra.mxu0 0
        %1513 = vmatprep.subr.bf16.mxu0 0
        %1514 = vmatpush1.bf16.msra.mxu0 0
        %1515 = vmatprep.subr.bf16.mxu0 0
        %1516 = vmatpush1.bf16.msra.mxu0 0
        %1517 = vmatprep.subr.bf16.mxu0 0
        %1518 = vmatpush1.bf16.msra.mxu0 %v1502
        %1519 = vmatprep.subr.bf16.mxu0 0
        %1520 = vmatpush1.bf16.msra.mxu0 %v1501
        %1521 = vmatprep.subr.bf16.mxu0 0
        %1522 = vmatpush2.bf16.msra.mxu0 0
        %1523 = vmatprep.subr.bf16.mxu0 0
        %1524 = vmatpush2.bf16.msra.mxu0 0
        %1525 = vmatprep.subr.bf16.mxu0 0
        %1526 = vmatpush2.bf16.msra.mxu0 0
        %1527 = vmatprep.subr.bf16.mxu0 0
        %1528 = vmatpush2.bf16.msra.mxu0 0
        %1529 = vmatprep.subr.bf16.mxu0 0
        %1530 = vmatpush2.bf16.msra.mxu0 0
        %1531 = vmatprep.subr.bf16.mxu0 0
        %1532 = vmatpush2.bf16.msra.mxu0 0
        %1533 = vmatprep.subr.bf16.mxu0 0
        %1534 = vmatpush2.bf16.msra.mxu0 0
        %1535 = vmatprep.subr.bf16.mxu0 0
        %1536 = vmatpush2.bf16.msra.mxu0 0
        %1537 = vmatprep.mubr.bf16.mxu0 0
        %1538 = vmatmul.mubr.bf16.gmra.mxu0 %v933
        %v1539 = vpop.f32.mrf.mxu0
        %v1540 = vadd.f32 0.0, %v1539
        %v1541 = vpop.f32.mrf.mxu0
        %v1542 = vpop.f32.mrf.mxu0
        %v1543 = vadd.f32 0.0, %v1542
        %v1544 = vpop.f32.mrf.mxu0
        %1545 = vdwg.mxu0
        %v1550 = vunpack.c.l.b16 %v1367
        %v1551 = vunpack.c.l.b16 %v1368
        %v1552 = vunpack.c.l.b16 %v1369
        %v1553 = vunpack.c.l.b16 %v1370
        %v1554 = vpack.c.b16 %v1551, %v1550
        %v1555 = vpack.c.b16 %v1553, %v1552
        %1558 = vmatprep.subr.bf16.mxu0 0
        %1559 = vmatpush1.bf16.msra.mxu0 0
        %1560 = vmatprep.subr.bf16.mxu0 0
        %1561 = vmatpush1.bf16.msra.mxu0 0
        %1562 = vmatprep.subr.bf16.mxu0 0
        %1563 = vmatpush1.bf16.msra.mxu0 0
        %1564 = vmatprep.subr.bf16.mxu0 0
        %1565 = vmatpush1.bf16.msra.mxu0 0
        %1566 = vmatprep.subr.bf16.mxu0 0
        %1567 = vmatpush1.bf16.msra.mxu0 0
        %1568 = vmatprep.subr.bf16.mxu0 0
        %1569 = vmatpush1.bf16.msra.mxu0 0
        %1570 = vmatprep.subr.bf16.mxu0 0
        %1571 = vmatpush1.bf16.msra.mxu0 %v1555
        %1572 = vmatprep.subr.bf16.mxu0 0
        %1573 = vmatpush1.bf16.msra.mxu0 %v1554
        %1574 = vmatprep.subr.bf16.mxu0 0
        %1575 = vmatpush2.bf16.msra.mxu0 0
        %1576 = vmatprep.subr.bf16.mxu0 0
        %1577 = vmatpush2.bf16.msra.mxu0 0
        %1578 = vmatprep.subr.bf16.mxu0 0
        %1579 = vmatpush2.bf16.msra.mxu0 0
        %1580 = vmatprep.subr.bf16.mxu0 0
        %1581 = vmatpush2.bf16.msra.mxu0 0
        %1582 = vmatprep.subr.bf16.mxu0 0
        %1583 = vmatpush2.bf16.msra.mxu0 0
        %1584 = vmatprep.subr.bf16.mxu0 0
        %1585 = vmatpush2.bf16.msra.mxu0 0
        %1586 = vmatprep.subr.bf16.mxu0 0
        %1587 = vmatpush2.bf16.msra.mxu0 0
        %1588 = vmatprep.subr.bf16.mxu0 0
        %1589 = vmatpush2.bf16.msra.mxu0 0
        %1590 = vmatprep.mubr.bf16.mxu0 0
        %1591 = vmatmul.mubr.bf16.gmra.mxu0 %v933
        %v1592 = vpop.f32.mrf.mxu0
        %v1593 = vadd.f32 0.0, %v1592
        %v1594 = vpop.f32.mrf.mxu0
        %v1595 = vpop.f32.mrf.mxu0
        %v1596 = vadd.f32 0.0, %v1595
        %v1597 = vpop.f32.mrf.mxu0
        %1598 = vdwg.mxu0
        %v1603 = vunpack.c.l.b16 %v1371
        %v1604 = vunpack.c.l.b16 %v1372
        %v1605 = vunpack.c.l.b16 %v1373
        %v1606 = vunpack.c.l.b16 %v1374
        %v1607 = vpack.c.b16 %v1604, %v1603
        %v1608 = vpack.c.b16 %v1606, %v1605
        %1611 = vmatprep.subr.bf16.mxu0 0
        %1612 = vmatpush1.bf16.msra.mxu0 0
        %1613 = vmatprep.subr.bf16.mxu0 0
        %1614 = vmatpush1.bf16.msra.mxu0 0
        %1615 = vmatprep.subr.bf16.mxu0 0
        %1616 = vmatpush1.bf16.msra.mxu0 0
        %1617 = vmatprep.subr.bf16.mxu0 0
        %1618 = vmatpush1.bf16.msra.mxu0 0
        %1619 = vmatprep.subr.bf16.mxu0 0
        %1620 = vmatpush1.bf16.msra.mxu0 0
        %1621 = vmatprep.subr.bf16.mxu0 0
        %1622 = vmatpush1.bf16.msra.mxu0 0
        %1623 = vmatprep.subr.bf16.mxu0 0
        %1624 = vmatpush1.bf16.msra.mxu0 %v1608
        %1625 = vmatprep.subr.bf16.mxu0 0
        %1626 = vmatpush1.bf16.msra.mxu0 %v1607
        %1627 = vmatprep.subr.bf16.mxu0 0
        %1628 = vmatpush2.bf16.msra.mxu0 0
        %1629 = vmatprep.subr.bf16.mxu0 0
        %1630 = vmatpush2.bf16.msra.mxu0 0
        %1631 = vmatprep.subr.bf16.mxu0 0
        %1632 = vmatpush2.bf16.msra.mxu0 0
        %1633 = vmatprep.subr.bf16.mxu0 0
        %1634 = vmatpush2.bf16.msra.mxu0 0
        %1635 = vmatprep.subr.bf16.mxu0 0
        %1636 = vmatpush2.bf16.msra.mxu0 0
        %1637 = vmatprep.subr.bf16.mxu0 0
        %1638 = vmatpush2.bf16.msra.mxu0 0
        %1639 = vmatprep.subr.bf16.mxu0 0
        %1640 = vmatpush2.bf16.msra.mxu0 0
        %1641 = vmatprep.subr.bf16.mxu0 0
        %1642 = vmatpush2.bf16.msra.mxu0 0
        %1643 = vmatprep.mubr.bf16.mxu0 0
        %1644 = vmatmul.mubr.bf16.gmra.mxu0 %v933
        %v1645 = vpop.f32.mrf.mxu0
        %v1646 = vadd.f32 0.0, %v1645
        %v1647 = vpop.f32.mrf.mxu0
        %v1648 = vpop.f32.mrf.mxu0
        %v1649 = vadd.f32 0.0, %v1648
        %v1650 = vpop.f32.mrf.mxu0
        %1651 = vdwg.mxu0
        %v1656 = vunpack.c.l.b16 %v1375
        %v1657 = vunpack.c.l.b16 %v1376
        %v1658 = vunpack.c.l.b16 %v1377
        %v1659 = vunpack.c.l.b16 %v1378
        %v1660 = vpack.c.b16 %v1657, %v1656
        %v1661 = vpack.c.b16 %v1659, %v1658
        %1664 = vmatprep.subr.bf16.mxu0 0
        %1665 = vmatpush1.bf16.msra.mxu0 0
        %1666 = vmatprep.subr.bf16.mxu0 0
        %1667 = vmatpush1.bf16.msra.mxu0 0
        %1668 = vmatprep.subr.bf16.mxu0 0
        %1669 = vmatpush1.bf16.msra.mxu0 0
        %1670 = vmatprep.subr.bf16.mxu0 0
        %1671 = vmatpush1.bf16.msra.mxu0 0
        %1672 = vmatprep.subr.bf16.mxu0 0
        %1673 = vmatpush1.bf16.msra.mxu0 0
        %1674 = vmatprep.subr.bf16.mxu0 0
        %1675 = vmatpush1.bf16.msra.mxu0 0
        %1676 = vmatprep.subr.bf16.mxu0 0
        %1677 = vmatpush1.bf16.msra.mxu0 %v1661
        %1678 = vmatprep.subr.bf16.mxu0 0
        %1679 = vmatpush1.bf16.msra.mxu0 %v1660
        %1680 = vmatprep.subr.bf16.mxu0 0
        %1681 = vmatpush2.bf16.msra.mxu0 0
        %1682 = vmatprep.subr.bf16.mxu0 0
        %1683 = vmatpush2.bf16.msra.mxu0 0
        %1684 = vmatprep.subr.bf16.mxu0 0
        %1685 = vmatpush2.bf16.msra.mxu0 0
        %1686 = vmatprep.subr.bf16.mxu0 0
        %1687 = vmatpush2.bf16.msra.mxu0 0
        %1688 = vmatprep.subr.bf16.mxu0 0
        %1689 = vmatpush2.bf16.msra.mxu0 0
        %1690 = vmatprep.subr.bf16.mxu0 0
        %1691 = vmatpush2.bf16.msra.mxu0 0
        %1692 = vmatprep.subr.bf16.mxu0 0
        %1693 = vmatpush2.bf16.msra.mxu0 0
        %1694 = vmatprep.subr.bf16.mxu0 0
        %1695 = vmatpush2.bf16.msra.mxu0 0
        %1696 = vmatprep.mubr.bf16.mxu0 0
        %1697 = vmatmul.mubr.bf16.gmra.mxu0 %v933
        %v1698 = vpop.f32.mrf.mxu0
        %v1699 = vadd.f32 0.0, %v1698
        %v1700 = vpop.f32.mrf.mxu0
        %v1701 = vpop.f32.mrf.mxu0
        %v1702 = vadd.f32 0.0, %v1701
        %v1703 = vpop.f32.mrf.mxu0
        %1704 = vdwg.mxu0
        %v1709 = vunpack.c.l.b16 %v1379
        %v1710 = vunpack.c.l.b16 %v1380
        %v1711 = vunpack.c.l.b16 %v1381
        %v1712 = vunpack.c.l.b16 %v1382
        %v1713 = vpack.c.b16 %v1710, %v1709
        %v1714 = vpack.c.b16 %v1712, %v1711
        %1717 = vmatprep.subr.bf16.mxu0 0
        %1718 = vmatpush1.bf16.msra.mxu0 0
        %1719 = vmatprep.subr.bf16.mxu0 0
        %1720 = vmatpush1.bf16.msra.mxu0 0
        %1721 = vmatprep.subr.bf16.mxu0 0
        %1722 = vmatpush1.bf16.msra.mxu0 0
        %1723 = vmatprep.subr.bf16.mxu0 0
        %1724 = vmatpush1.bf16.msra.mxu0 0
        %1725 = vmatprep.subr.bf16.mxu0 0
        %1726 = vmatpush1.bf16.msra.mxu0 0
        %1727 = vmatprep.subr.bf16.mxu0 0
        %1728 = vmatpush1.bf16.msra.mxu0 0
        %1729 = vmatprep.subr.bf16.mxu0 0
        %1730 = vmatpush1.bf16.msra.mxu0 %v1714
        %1731 = vmatprep.subr.bf16.mxu0 0
        %1732 = vmatpush1.bf16.msra.mxu0 %v1713
        %1733 = vmatprep.subr.bf16.mxu0 0
        %1734 = vmatpush2.bf16.msra.mxu0 0
        %1735 = vmatprep.subr.bf16.mxu0 0
        %1736 = vmatpush2.bf16.msra.mxu0 0
        %1737 = vmatprep.subr.bf16.mxu0 0
        %1738 = vmatpush2.bf16.msra.mxu0 0
        %1739 = vmatprep.subr.bf16.mxu0 0
        %1740 = vmatpush2.bf16.msra.mxu0 0
        %1741 = vmatprep.subr.bf16.mxu0 0
        %1742 = vmatpush2.bf16.msra.mxu0 0
        %1743 = vmatprep.subr.bf16.mxu0 0
        %1744 = vmatpush2.bf16.msra.mxu0 0
        %1745 = vmatprep.subr.bf16.mxu0 0
        %1746 = vmatpush2.bf16.msra.mxu0 0
        %1747 = vmatprep.subr.bf16.mxu0 0
        %1748 = vmatpush2.bf16.msra.mxu0 0
        %1749 = vmatprep.mubr.bf16.mxu0 0
        %1750 = vmatmul.mubr.bf16.gmra.mxu0 %v933
        %v1751 = vpop.f32.mrf.mxu0
        %v1752 = vadd.f32 0.0, %v1751
        %v1753 = vpop.f32.mrf.mxu0
        %v1754 = vpop.f32.mrf.mxu0
        %v1755 = vadd.f32 0.0, %v1754
        %v1756 = vpop.f32.mrf.mxu0
        %1757 = vdwg.mxu0
        %v1762 = vunpack.c.l.b16 %v1383
        %v1763 = vunpack.c.l.b16 %v1384
        %v1764 = vunpack.c.l.b16 %v1385
        %v1765 = vunpack.c.l.b16 %v1386
        %v1766 = vpack.c.b16 %v1763, %v1762
        %v1767 = vpack.c.b16 %v1765, %v1764
        %1770 = vmatprep.subr.bf16.mxu0 0
        %1771 = vmatpush1.bf16.msra.mxu0 0
        %1772 = vmatprep.subr.bf16.mxu0 0
        %1773 = vmatpush1.bf16.msra.mxu0 0
        %1774 = vmatprep.subr.bf16.mxu0 0
        %1775 = vmatpush1.bf16.msra.mxu0 0
        %1776 = vmatprep.subr.bf16.mxu0 0
        %1777 = vmatpush1.bf16.msra.mxu0 0
        %1778 = vmatprep.subr.bf16.mxu0 0
        %1779 = vmatpush1.bf16.msra.mxu0 0
        %1780 = vmatprep.subr.bf16.mxu0 0
        %1781 = vmatpush1.bf16.msra.mxu0 0
        %1782 = vmatprep.subr.bf16.mxu0 0
        %1783 = vmatpush1.bf16.msra.mxu0 %v1767
        %1784 = vmatprep.subr.bf16.mxu0 0
        %1785 = vmatpush1.bf16.msra.mxu0 %v1766
        %1786 = vmatprep.subr.bf16.mxu0 0
        %1787 = vmatpush2.bf16.msra.mxu0 0
        %1788 = vmatprep.subr.bf16.mxu0 0
        %1789 = vmatpush2.bf16.msra.mxu0 0
        %1790 = vmatprep.subr.bf16.mxu0 0
        %1791 = vmatpush2.bf16.msra.mxu0 0
        %1792 = vmatprep.subr.bf16.mxu0 0
        %1793 = vmatpush2.bf16.msra.mxu0 0
        %1794 = vmatprep.subr.bf16.mxu0 0
        %1795 = vmatpush2.bf16.msra.mxu0 0
        %1796 = vmatprep.subr.bf16.mxu0 0
        %1797 = vmatpush2.bf16.msra.mxu0 0
        %1798 = vmatprep.subr.bf16.mxu0 0
        %1799 = vmatpush2.bf16.msra.mxu0 0
        %1800 = vmatprep.subr.bf16.mxu0 0
        %1801 = vmatpush2.bf16.msra.mxu0 0
        %1802 = vmatprep.mubr.bf16.mxu0 0
        %1803 = vmatmul.mubr.bf16.gmra.mxu0 %v933
        %v1804 = vpop.f32.mrf.mxu0
        %v1805 = vadd.f32 0.0, %v1804
        %v1806 = vpop.f32.mrf.mxu0
        %v1807 = vpop.f32.mrf.mxu0
        %v1808 = vadd.f32 0.0, %v1807
        %v1809 = vpop.f32.mrf.mxu0
        %1810 = vdwg.mxu0
        %v1811 = vpack.c.bf16 %v1437, %v1434
        %v1812 = vpack.c.bf16 %v1490, %v1487
        %v1813 = vpack.c.bf16 %v1543, %v1540
        %v1814 = vpack.c.bf16 %v1596, %v1593
        %v1815 = vpack.c.bf16 %v1649, %v1646
        %v1816 = vpack.c.bf16 %v1702, %v1699
        %v1817 = vpack.c.bf16 %v1755, %v1752
        %v1818 = vpack.c.bf16 %v1808, %v1805
        %vm1819 = vcmask 64512
        %v1821 = vsel %vm1819, %v880, 0
        %v1824 = vsel %vm1819, %v1347, 0
        %1826 = vmatprep.subr.bf16.mxu0 0
        %1827 = vmatpush1.bf16.xpose.msra.mxu0 0
        %1828 = vmatprep.subr.bf16.mxu0 0
        %1829 = vmatpush1.bf16.xpose.msra.mxu0 0
        %1830 = vmatprep.subr.bf16.mxu0 0
        %1831 = vmatpush1.bf16.xpose.msra.mxu0 0
        %1832 = vmatprep.subr.bf16.mxu0 0
        %1833 = vmatpush1.bf16.xpose.msra.mxu0 0
        %1834 = vmatprep.subr.bf16.mxu0 0
        %1835 = vmatpush1.bf16.xpose.msra.mxu0 0
        %1836 = vmatprep.subr.bf16.mxu0 0
        %1837 = vmatpush1.bf16.xpose.msra.mxu0 0
        %1838 = vmatprep.subr.bf16.mxu0 0
        %1839 = vmatpush1.bf16.xpose.msra.mxu0 0
        %1840 = vmatprep.subr.bf16.mxu0 0
        %1841 = vmatpush1.bf16.xpose.msra.mxu0 %v1824
        %1842 = vmatprep.subr.bf16.mxu0 0
        %1843 = vmatpush2.bf16.xpose.msra.mxu0 0
        %1844 = vmatprep.subr.bf16.mxu0 0
        %1845 = vmatpush2.bf16.xpose.msra.mxu0 0
        %1846 = vmatprep.subr.bf16.mxu0 0
        %1847 = vmatpush2.bf16.xpose.msra.mxu0 0
        %1848 = vmatprep.subr.bf16.mxu0 0
        %1849 = vmatpush2.bf16.xpose.msra.mxu0 0
        %1850 = vmatprep.subr.bf16.mxu0 0
        %1851 = vmatpush2.bf16.xpose.msra.mxu0 0
        %1852 = vmatprep.subr.bf16.mxu0 0
        %1853 = vmatpush2.bf16.xpose.msra.mxu0 0
        %1854 = vmatprep.subr.bf16.mxu0 0
        %1855 = vmatpush2.bf16.xpose.msra.mxu0 0
        %1856 = vmatprep.subr.bf16.mxu0 0
        %1857 = vmatpush2.bf16.xpose.msra.mxu0 0
        %1858 = vmatprep.mubr.bf16.mxu0 0
        %1859 = vmatmul.mubr.bf16.gmra.mxu0 %v1821
        %v1860 = vpop.f32.mrf.mxu0
        %v1861 = vadd.f32 0.0, %v1860
        %v1862 = vpop.f32.mrf.mxu0
        %v1863 = vpop.f32.mrf.mxu0
        %v1864 = vpop.f32.mrf.mxu0
        %1865 = vdwg.mxu0
        %v1867 = vsel %vm1819, %v881, 0
        %v1870 = vsel %vm1819, %v1348, 0
        %1872 = vmatprep.subr.bf16.mxu0 0
        %1873 = vmatpush1.bf16.xpose.msra.mxu0 0
        %1874 = vmatprep.subr.bf16.mxu0 0
        %1875 = vmatpush1.bf16.xpose.msra.mxu0 0
        %1876 = vmatprep.subr.bf16.mxu0 0
        %1877 = vmatpush1.bf16.xpose.msra.mxu0 0
        %1878 = vmatprep.subr.bf16.mxu0 0
        %1879 = vmatpush1.bf16.xpose.msra.mxu0 0
        %1880 = vmatprep.subr.bf16.mxu0 0
        %1881 = vmatpush1.bf16.xpose.msra.mxu0 0
        %1882 = vmatprep.subr.bf16.mxu0 0
        %1883 = vmatpush1.bf16.xpose.msra.mxu0 0
        %1884 = vmatprep.subr.bf16.mxu0 0
        %1885 = vmatpush1.bf16.xpose.msra.mxu0 0
        %1886 = vmatprep.subr.bf16.mxu0 0
        %1887 = vmatpush1.bf16.xpose.msra.mxu0 %v1870
        %1888 = vmatprep.subr.bf16.mxu0 0
        %1889 = vmatpush2.bf16.xpose.msra.mxu0 0
        %1890 = vmatprep.subr.bf16.mxu0 0
        %1891 = vmatpush2.bf16.xpose.msra.mxu0 0
        %1892 = vmatprep.subr.bf16.mxu0 0
        %1893 = vmatpush2.bf16.xpose.msra.mxu0 0
        %1894 = vmatprep.subr.bf16.mxu0 0
        %1895 = vmatpush2.bf16.xpose.msra.mxu0 0
        %1896 = vmatprep.subr.bf16.mxu0 0
        %1897 = vmatpush2.bf16.xpose.msra.mxu0 0
        %1898 = vmatprep.subr.bf16.mxu0 0
        %1899 = vmatpush2.bf16.xpose.msra.mxu0 0
        %1900 = vmatprep.subr.bf16.mxu0 0
        %1901 = vmatpush2.bf16.xpose.msra.mxu0 0
        %1902 = vmatprep.subr.bf16.mxu0 0
        %1903 = vmatpush2.bf16.xpose.msra.mxu0 0
        %1904 = vmatprep.mubr.bf16.mxu0 0
        %1905 = vmatmul.mubr.bf16.gmra.mxu0 %v1867
        %v1906 = vpop.f32.mrf.mxu0
        %v1907 = vadd.f32 0.0, %v1906
        %v1908 = vpop.f32.mrf.mxu0
        %v1909 = vpop.f32.mrf.mxu0
        %v1910 = vpop.f32.mrf.mxu0
        %1911 = vdwg.mxu0
        %v1913 = vsel %vm1819, %v882, 0
        %v1916 = vsel %vm1819, %v1349, 0
        %1918 = vmatprep.subr.bf16.mxu0 0
        %1919 = vmatpush1.bf16.xpose.msra.mxu0 0
        %1920 = vmatprep.subr.bf16.mxu0 0
        %1921 = vmatpush1.bf16.xpose.msra.mxu0 0
        %1922 = vmatprep.subr.bf16.mxu0 0
        %1923 = vmatpush1.bf16.xpose.msra.mxu0 0
        %1924 = vmatprep.subr.bf16.mxu0 0
        %1925 = vmatpush1.bf16.xpose.msra.mxu0 0
        %1926 = vmatprep.subr.bf16.mxu0 0
        %1927 = vmatpush1.bf16.xpose.msra.mxu0 0
        %1928 = vmatprep.subr.bf16.mxu0 0
        %1929 = vmatpush1.bf16.xpose.msra.mxu0 0
        %1930 = vmatprep.subr.bf16.mxu0 0
        %1931 = vmatpush1.bf16.xpose.msra.mxu0 0
        %1932 = vmatprep.subr.bf16.mxu0 0
        %1933 = vmatpush1.bf16.xpose.msra.mxu0 %v1916
        %1934 = vmatprep.subr.bf16.mxu0 0
        %1935 = vmatpush2.bf16.xpose.msra.mxu0 0
        %1936 = vmatprep.subr.bf16.mxu0 0
        %1937 = vmatpush2.bf16.xpose.msra.mxu0 0
        %1938 = vmatprep.subr.bf16.mxu0 0
        %1939 = vmatpush2.bf16.xpose.msra.mxu0 0
        %1940 = vmatprep.subr.bf16.mxu0 0
        %1941 = vmatpush2.bf16.xpose.msra.mxu0 0
        %1942 = vmatprep.subr.bf16.mxu0 0
        %1943 = vmatpush2.bf16.xpose.msra.mxu0 0
        %1944 = vmatprep.subr.bf16.mxu0 0
        %1945 = vmatpush2.bf16.xpose.msra.mxu0 0
        %1946 = vmatprep.subr.bf16.mxu0 0
        %1947 = vmatpush2.bf16.xpose.msra.mxu0 0
        %1948 = vmatprep.subr.bf16.mxu0 0
        %1949 = vmatpush2.bf16.xpose.msra.mxu0 0
        %1950 = vmatprep.mubr.bf16.mxu0 0
        %1951 = vmatmul.mubr.bf16.gmra.mxu0 %v1913
        %v1952 = vpop.f32.mrf.mxu0
        %v1953 = vadd.f32 0.0, %v1952
        %v1954 = vpop.f32.mrf.mxu0
        %v1955 = vpop.f32.mrf.mxu0
        %v1956 = vpop.f32.mrf.mxu0
        %1957 = vdwg.mxu0
        %v1959 = vsel %vm1819, %v883, 0
        %v1962 = vsel %vm1819, %v1350, 0
        %1964 = vmatprep.subr.bf16.mxu0 0
        %1965 = vmatpush1.bf16.xpose.msra.mxu0 0
        %1966 = vmatprep.subr.bf16.mxu0 0
        %1967 = vmatpush1.bf16.xpose.msra.mxu0 0
        %1968 = vmatprep.subr.bf16.mxu0 0
        %1969 = vmatpush1.bf16.xpose.msra.mxu0 0
        %1970 = vmatprep.subr.bf16.mxu0 0
        %1971 = vmatpush1.bf16.xpose.msra.mxu0 0
        %1972 = vmatprep.subr.bf16.mxu0 0
        %1973 = vmatpush1.bf16.xpose.msra.mxu0 0
        %1974 = vmatprep.subr.bf16.mxu0 0
        %1975 = vmatpush1.bf16.xpose.msra.mxu0 0
        %1976 = vmatprep.subr.bf16.mxu0 0
        %1977 = vmatpush1.bf16.xpose.msra.mxu0 0
        %1978 = vmatprep.subr.bf16.mxu0 0
        %1979 = vmatpush1.bf16.xpose.msra.mxu0 %v1962
        %1980 = vmatprep.subr.bf16.mxu0 0
        %1981 = vmatpush2.bf16.xpose.msra.mxu0 0
        %1982 = vmatprep.subr.bf16.mxu0 0
        %1983 = vmatpush2.bf16.xpose.msra.mxu0 0
        %1984 = vmatprep.subr.bf16.mxu0 0
        %1985 = vmatpush2.bf16.xpose.msra.mxu0 0
        %1986 = vmatprep.subr.bf16.mxu0 0
        %1987 = vmatpush2.bf16.xpose.msra.mxu0 0
        %1988 = vmatprep.subr.bf16.mxu0 0
        %1989 = vmatpush2.bf16.xpose.msra.mxu0 0
        %1990 = vmatprep.subr.bf16.mxu0 0
        %1991 = vmatpush2.bf16.xpose.msra.mxu0 0
        %1992 = vmatprep.subr.bf16.mxu0 0
        %1993 = vmatpush2.bf16.xpose.msra.mxu0 0
        %1994 = vmatprep.subr.bf16.mxu0 0
        %1995 = vmatpush2.bf16.xpose.msra.mxu0 0
        %1996 = vmatprep.mubr.bf16.mxu0 0
        %1997 = vmatmul.mubr.bf16.gmra.mxu0 %v1959
        %v1998 = vpop.f32.mrf.mxu0
        %v1999 = vadd.f32 0.0, %v1998
        %v2000 = vpop.f32.mrf.mxu0
        %v2001 = vpop.f32.mrf.mxu0
        %v2002 = vpop.f32.mrf.mxu0
        %2003 = vdwg.mxu0
        %v2005 = vsel %vm1819, %v884, 0
        %v2008 = vsel %vm1819, %v1351, 0
        %2010 = vmatprep.subr.bf16.mxu0 0
        %2011 = vmatpush1.bf16.xpose.msra.mxu0 0
        %2012 = vmatprep.subr.bf16.mxu0 0
        %2013 = vmatpush1.bf16.xpose.msra.mxu0 0
        %2014 = vmatprep.subr.bf16.mxu0 0
        %2015 = vmatpush1.bf16.xpose.msra.mxu0 0
        %2016 = vmatprep.subr.bf16.mxu0 0
        %2017 = vmatpush1.bf16.xpose.msra.mxu0 0
        %2018 = vmatprep.subr.bf16.mxu0 0
        %2019 = vmatpush1.bf16.xpose.msra.mxu0 0
        %2020 = vmatprep.subr.bf16.mxu0 0
        %2021 = vmatpush1.bf16.xpose.msra.mxu0 0
        %2022 = vmatprep.subr.bf16.mxu0 0
        %2023 = vmatpush1.bf16.xpose.msra.mxu0 0
        %2024 = vmatprep.subr.bf16.mxu0 0
        %2025 = vmatpush1.bf16.xpose.msra.mxu0 %v2008
        %2026 = vmatprep.subr.bf16.mxu0 0
        %2027 = vmatpush2.bf16.xpose.msra.mxu0 0
        %2028 = vmatprep.subr.bf16.mxu0 0
        %2029 = vmatpush2.bf16.xpose.msra.mxu0 0
        %2030 = vmatprep.subr.bf16.mxu0 0
        %2031 = vmatpush2.bf16.xpose.msra.mxu0 0
        %2032 = vmatprep.subr.bf16.mxu0 0
        %2033 = vmatpush2.bf16.xpose.msra.mxu0 0
        %2034 = vmatprep.subr.bf16.mxu0 0
        %2035 = vmatpush2.bf16.xpose.msra.mxu0 0
        %2036 = vmatprep.subr.bf16.mxu0 0
        %2037 = vmatpush2.bf16.xpose.msra.mxu0 0
        %2038 = vmatprep.subr.bf16.mxu0 0
        %2039 = vmatpush2.bf16.xpose.msra.mxu0 0
        %2040 = vmatprep.subr.bf16.mxu0 0
        %2041 = vmatpush2.bf16.xpose.msra.mxu0 0
        %2042 = vmatprep.mubr.bf16.mxu0 0
        %2043 = vmatmul.mubr.bf16.gmra.mxu0 %v2005
        %v2044 = vpop.f32.mrf.mxu0
        %v2045 = vadd.f32 0.0, %v2044
        %v2046 = vpop.f32.mrf.mxu0
        %v2047 = vpop.f32.mrf.mxu0
        %v2048 = vpop.f32.mrf.mxu0
        %2049 = vdwg.mxu0
        %v2051 = vsel %vm1819, %v885, 0
        %v2054 = vsel %vm1819, %v1352, 0
        %2056 = vmatprep.subr.bf16.mxu0 0
        %2057 = vmatpush1.bf16.xpose.msra.mxu0 0
        %2058 = vmatprep.subr.bf16.mxu0 0
        %2059 = vmatpush1.bf16.xpose.msra.mxu0 0
        %2060 = vmatprep.subr.bf16.mxu0 0
        %2061 = vmatpush1.bf16.xpose.msra.mxu0 0
        %2062 = vmatprep.subr.bf16.mxu0 0
        %2063 = vmatpush1.bf16.xpose.msra.mxu0 0
        %2064 = vmatprep.subr.bf16.mxu0 0
        %2065 = vmatpush1.bf16.xpose.msra.mxu0 0
        %2066 = vmatprep.subr.bf16.mxu0 0
        %2067 = vmatpush1.bf16.xpose.msra.mxu0 0
        %2068 = vmatprep.subr.bf16.mxu0 0
        %2069 = vmatpush1.bf16.xpose.msra.mxu0 0
        %2070 = vmatprep.subr.bf16.mxu0 0
        %2071 = vmatpush1.bf16.xpose.msra.mxu0 %v2054
        %2072 = vmatprep.subr.bf16.mxu0 0
        %2073 = vmatpush2.bf16.xpose.msra.mxu0 0
        %2074 = vmatprep.subr.bf16.mxu0 0
        %2075 = vmatpush2.bf16.xpose.msra.mxu0 0
        %2076 = vmatprep.subr.bf16.mxu0 0
        %2077 = vmatpush2.bf16.xpose.msra.mxu0 0
        %2078 = vmatprep.subr.bf16.mxu0 0
        %2079 = vmatpush2.bf16.xpose.msra.mxu0 0
        %2080 = vmatprep.subr.bf16.mxu0 0
        %2081 = vmatpush2.bf16.xpose.msra.mxu0 0
        %2082 = vmatprep.subr.bf16.mxu0 0
        %2083 = vmatpush2.bf16.xpose.msra.mxu0 0
        %2084 = vmatprep.subr.bf16.mxu0 0
        %2085 = vmatpush2.bf16.xpose.msra.mxu0 0
        %2086 = vmatprep.subr.bf16.mxu0 0
        %2087 = vmatpush2.bf16.xpose.msra.mxu0 0
        %2088 = vmatprep.mubr.bf16.mxu0 0
        %2089 = vmatmul.mubr.bf16.gmra.mxu0 %v2051
        %v2090 = vpop.f32.mrf.mxu0
        %v2091 = vadd.f32 0.0, %v2090
        %v2092 = vpop.f32.mrf.mxu0
        %v2093 = vpop.f32.mrf.mxu0
        %v2094 = vpop.f32.mrf.mxu0
        %2095 = vdwg.mxu0
        %v2097 = vsel %vm1819, %v886, 0
        %v2100 = vsel %vm1819, %v1353, 0
        %2102 = vmatprep.subr.bf16.mxu0 0
        %2103 = vmatpush1.bf16.xpose.msra.mxu0 0
        %2104 = vmatprep.subr.bf16.mxu0 0
        %2105 = vmatpush1.bf16.xpose.msra.mxu0 0
        %2106 = vmatprep.subr.bf16.mxu0 0
        %2107 = vmatpush1.bf16.xpose.msra.mxu0 0
        %2108 = vmatprep.subr.bf16.mxu0 0
        %2109 = vmatpush1.bf16.xpose.msra.mxu0 0
        %2110 = vmatprep.subr.bf16.mxu0 0
        %2111 = vmatpush1.bf16.xpose.msra.mxu0 0
        %2112 = vmatprep.subr.bf16.mxu0 0
        %2113 = vmatpush1.bf16.xpose.msra.mxu0 0
        %2114 = vmatprep.subr.bf16.mxu0 0
        %2115 = vmatpush1.bf16.xpose.msra.mxu0 0
        %2116 = vmatprep.subr.bf16.mxu0 0
        %2117 = vmatpush1.bf16.xpose.msra.mxu0 %v2100
        %2118 = vmatprep.subr.bf16.mxu0 0
        %2119 = vmatpush2.bf16.xpose.msra.mxu0 0
        %2120 = vmatprep.subr.bf16.mxu0 0
        %2121 = vmatpush2.bf16.xpose.msra.mxu0 0
        %2122 = vmatprep.subr.bf16.mxu0 0
        %2123 = vmatpush2.bf16.xpose.msra.mxu0 0
        %2124 = vmatprep.subr.bf16.mxu0 0
        %2125 = vmatpush2.bf16.xpose.msra.mxu0 0
        %2126 = vmatprep.subr.bf16.mxu0 0
        %2127 = vmatpush2.bf16.xpose.msra.mxu0 0
        %2128 = vmatprep.subr.bf16.mxu0 0
        %2129 = vmatpush2.bf16.xpose.msra.mxu0 0
        %2130 = vmatprep.subr.bf16.mxu0 0
        %2131 = vmatpush2.bf16.xpose.msra.mxu0 0
        %2132 = vmatprep.subr.bf16.mxu0 0
        %2133 = vmatpush2.bf16.xpose.msra.mxu0 0
        %2134 = vmatprep.mubr.bf16.mxu0 0
        %2135 = vmatmul.mubr.bf16.gmra.mxu0 %v2097
        %v2136 = vpop.f32.mrf.mxu0
        %v2137 = vadd.f32 0.0, %v2136
        %v2138 = vpop.f32.mrf.mxu0
        %v2139 = vpop.f32.mrf.mxu0
        %v2140 = vpop.f32.mrf.mxu0
        %2141 = vdwg.mxu0
        %v2143 = vsel %vm1819, %v887, 0
        %v2146 = vsel %vm1819, %v1354, 0
        %2148 = vmatprep.subr.bf16.mxu0 0
        %2149 = vmatpush1.bf16.xpose.msra.mxu0 0
        %2150 = vmatprep.subr.bf16.mxu0 0
        %2151 = vmatpush1.bf16.xpose.msra.mxu0 0
        %2152 = vmatprep.subr.bf16.mxu0 0
        %2153 = vmatpush1.bf16.xpose.msra.mxu0 0
        %2154 = vmatprep.subr.bf16.mxu0 0
        %2155 = vmatpush1.bf16.xpose.msra.mxu0 0
        %2156 = vmatprep.subr.bf16.mxu0 0
        %2157 = vmatpush1.bf16.xpose.msra.mxu0 0
        %2158 = vmatprep.subr.bf16.mxu0 0
        %2159 = vmatpush1.bf16.xpose.msra.mxu0 0
        %2160 = vmatprep.subr.bf16.mxu0 0
        %2161 = vmatpush1.bf16.xpose.msra.mxu0 0
        %2162 = vmatprep.subr.bf16.mxu0 0
        %2163 = vmatpush1.bf16.xpose.msra.mxu0 %v2146
        %2164 = vmatprep.subr.bf16.mxu0 0
        %2165 = vmatpush2.bf16.xpose.msra.mxu0 0
        %2166 = vmatprep.subr.bf16.mxu0 0
        %2167 = vmatpush2.bf16.xpose.msra.mxu0 0
        %2168 = vmatprep.subr.bf16.mxu0 0
        %2169 = vmatpush2.bf16.xpose.msra.mxu0 0
        %2170 = vmatprep.subr.bf16.mxu0 0
        %2171 = vmatpush2.bf16.xpose.msra.mxu0 0
        %2172 = vmatprep.subr.bf16.mxu0 0
        %2173 = vmatpush2.bf16.xpose.msra.mxu0 0
        %2174 = vmatprep.subr.bf16.mxu0 0
        %2175 = vmatpush2.bf16.xpose.msra.mxu0 0
        %2176 = vmatprep.subr.bf16.mxu0 0
        %2177 = vmatpush2.bf16.xpose.msra.mxu0 0
        %2178 = vmatprep.subr.bf16.mxu0 0
        %2179 = vmatpush2.bf16.xpose.msra.mxu0 0
        %2180 = vmatprep.mubr.bf16.mxu0 0
        %2181 = vmatmul.mubr.bf16.gmra.mxu0 %v2143
        %v2182 = vpop.f32.mrf.mxu0
        %v2183 = vadd.f32 0.0, %v2182
        %v2184 = vpop.f32.mrf.mxu0
        %v2185 = vpop.f32.mrf.mxu0
        %v2186 = vpop.f32.mrf.mxu0
        %2187 = vdwg.mxu0
        %vm2188 = vcmask 130048
        %v2189 = vsel %vm2188, %v1861, -inf
        %2190 = vmax.xlane.f32.xlu0 %v2189
        %v2191 = vpop.xlane.xlu0 %2190
        %v2192 = vsel %vm2188, %v1907, -inf
        %2193 = vmax.xlane.f32.xlu0 %v2192
        %v2194 = vpop.xlane.xlu0 %2193
        %v2195 = vsel %vm2188, %v1953, -inf
        %2196 = vmax.xlane.f32.xlu0 %v2195
        %v2197 = vpop.xlane.xlu0 %2196
        %v2198 = vsel %vm2188, %v1999, -inf
        %2199 = vmax.xlane.f32.xlu0 %v2198
        %v2200 = vpop.xlane.xlu0 %2199
        %v2201 = vsel %vm2188, %v2045, -inf
        %2202 = vmax.xlane.f32.xlu0 %v2201
        %v2203 = vpop.xlane.xlu0 %2202
        %v2204 = vsel %vm2188, %v2091, -inf
        %2205 = vmax.xlane.f32.xlu0 %v2204
        %v2206 = vpop.xlane.xlu0 %2205
        %v2207 = vsel %vm2188, %v2137, -inf
        %2208 = vmax.xlane.f32.xlu0 %v2207
        %v2209 = vpop.xlane.xlu0 %2208
        %v2210 = vsel %vm2188, %v2183, -inf
        %2211 = vmax.xlane.f32.xlu0 %v2210
        %v2212 = vpop.xlane.xlu0 %2211
        %v2213 = vsub.f32 %v1861, %v2191
        %v2214 = vsub.f32 %v1907, %v2194
        %v2215 = vsub.f32 %v1953, %v2197
        %v2216 = vsub.f32 %v1999, %v2200
        %v2217 = vsub.f32 %v2045, %v2203
        %v2218 = vsub.f32 %v2091, %v2206
        %v2219 = vsub.f32 %v2137, %v2209
        %v2220 = vsub.f32 %v2183, %v2212
        %v2221 = vmul.f32 %v2213, 1.442695
        %v2222 = vpow.pop %v2221
        %v2223 = vmul.f32 %v2214, 1.442695
        %v2224 = vpow.pop %v2223
        %v2225 = vmul.f32 %v2215, 1.442695
        %v2226 = vpow.pop %v2225
        %v2227 = vmul.f32 %v2216, 1.442695
        %v2228 = vpow.pop %v2227
        %v2229 = vmul.f32 %v2217, 1.442695
        %v2230 = vpow.pop %v2229
        %v2231 = vmul.f32 %v2218, 1.442695
        %v2232 = vpow.pop %v2231
        %v2233 = vmul.f32 %v2219, 1.442695
        %v2234 = vpow.pop %v2233
        %v2235 = vmul.f32 %v2220, 1.442695
        %v2236 = vpow.pop %v2235
        %v2237 = vsel %vm2188, %v2222, 0.0
        %2238 = vadd.xlane.f32.xlu0 %v2237
        %v2239 = vpop.xlane.xlu0 %2238
        %v2240 = vsel %vm2188, %v2224, 0.0
        %2241 = vadd.xlane.f32.xlu0 %v2240
        %v2242 = vpop.xlane.xlu0 %2241
        %v2243 = vsel %vm2188, %v2226, 0.0
        %2244 = vadd.xlane.f32.xlu0 %v2243
        %v2245 = vpop.xlane.xlu0 %2244
        %v2246 = vsel %vm2188, %v2228, 0.0
        %2247 = vadd.xlane.f32.xlu0 %v2246
        %v2248 = vpop.xlane.xlu0 %2247
        %v2249 = vsel %vm2188, %v2230, 0.0
        %2250 = vadd.xlane.f32.xlu0 %v2249
        %v2251 = vpop.xlane.xlu0 %2250
        %v2252 = vsel %vm2188, %v2232, 0.0
        %2253 = vadd.xlane.f32.xlu0 %v2252
        %v2254 = vpop.xlane.xlu0 %2253
        %v2255 = vsel %vm2188, %v2234, 0.0
        %2256 = vadd.xlane.f32.xlu0 %v2255
        %v2257 = vpop.xlane.xlu0 %2256
        %v2258 = vsel %vm2188, %v2236, 0.0
        %2259 = vadd.xlane.f32.xlu0 %v2258
        %v2260 = vpop.xlane.xlu0 %2259
        %v2261 = vrcp.pop %v2239
        %v2262 = vrcp.pop %v2242
        %v2263 = vrcp.pop %v2245
        %v2264 = vrcp.pop %v2248
        %v2265 = vrcp.pop %v2251
        %v2266 = vrcp.pop %v2254
        %v2267 = vrcp.pop %v2257
        %v2268 = vrcp.pop %v2260
        %v2269 = vmul.f32 %v2222, %v2261
        %v2270 = vmul.f32 %v2224, %v2262
        %v2271 = vmul.f32 %v2226, %v2263
        %v2272 = vmul.f32 %v2228, %v2264
        %v2273 = vmul.f32 %v2230, %v2265
        %v2274 = vmul.f32 %v2232, %v2266
        %v2275 = vmul.f32 %v2234, %v2267
        %v2276 = vmul.f32 %v2236, %v2268
        %v2277 = vpack.c.bf16 %v2269, %v2269
        %v2278 = vpack.c.bf16 %v2270, %v2270
        %v2279 = vpack.c.bf16 %v2271, %v2271
        %v2280 = vpack.c.bf16 %v2272, %v2272
        %v2281 = vpack.c.bf16 %v2273, %v2273
        %v2282 = vpack.c.bf16 %v2274, %v2274
        %v2283 = vpack.c.bf16 %v2275, %v2275
        %v2284 = vpack.c.bf16 %v2276, %v2276
        %v2286 = vsel %vm2188, %v2277, 0
        %2288 = vmatprep.subr.bf16.mxu0 0
        %2289 = vmatpush1.bf16.msra.mxu0 0
        %2290 = vmatprep.subr.bf16.mxu0 0
        %2291 = vmatpush1.bf16.msra.mxu0 0
        %2292 = vmatprep.subr.bf16.mxu0 0
        %2293 = vmatpush1.bf16.msra.mxu0 0
        %2294 = vmatprep.subr.bf16.mxu0 0
        %2295 = vmatpush1.bf16.msra.mxu0 0
        %2296 = vmatprep.subr.bf16.mxu0 0
        %2297 = vmatpush1.bf16.msra.mxu0 0
        %2298 = vmatprep.subr.bf16.mxu0 0
        %2299 = vmatpush1.bf16.msra.mxu0 0
        %2300 = vmatprep.subr.bf16.mxu0 0
        %2301 = vmatpush1.bf16.msra.mxu0 0
        %2302 = vmatprep.subr.bf16.mxu0 0
        %2303 = vmatpush1.bf16.msra.mxu0 %v1811
        %2304 = vmatprep.subr.bf16.mxu0 0
        %2305 = vmatpush2.bf16.msra.mxu0 0
        %2306 = vmatprep.subr.bf16.mxu0 0
        %2307 = vmatpush2.bf16.msra.mxu0 0
        %2308 = vmatprep.subr.bf16.mxu0 0
        %2309 = vmatpush2.bf16.msra.mxu0 0
        %2310 = vmatprep.subr.bf16.mxu0 0
        %2311 = vmatpush2.bf16.msra.mxu0 0
        %2312 = vmatprep.subr.bf16.mxu0 0
        %2313 = vmatpush2.bf16.msra.mxu0 0
        %2314 = vmatprep.subr.bf16.mxu0 0
        %2315 = vmatpush2.bf16.msra.mxu0 0
        %2316 = vmatprep.subr.bf16.mxu0 0
        %2317 = vmatpush2.bf16.msra.mxu0 0
        %2318 = vmatprep.subr.bf16.mxu0 0
        %2319 = vmatpush2.bf16.msra.mxu0 0
        %2320 = vmatprep.mubr.bf16.mxu0 0
        %2321 = vmatmul.mubr.bf16.gmra.mxu0 %v2286
        %v2322 = vpop.f32.mrf.mxu0
        %v2323 = vadd.f32 0.0, %v2322
        %v2324 = vpop.f32.mrf.mxu0
        %v2325 = vpop.f32.mrf.mxu0
        %v2326 = vpop.f32.mrf.mxu0
        %2327 = vdwg.mxu0
        %v2329 = vsel %vm2188, %v2278, 0
        %2331 = vmatprep.subr.bf16.mxu0 0
        %2332 = vmatpush1.bf16.msra.mxu0 0
        %2333 = vmatprep.subr.bf16.mxu0 0
        %2334 = vmatpush1.bf16.msra.mxu0 0
        %2335 = vmatprep.subr.bf16.mxu0 0
        %2336 = vmatpush1.bf16.msra.mxu0 0
        %2337 = vmatprep.subr.bf16.mxu0 0
        %2338 = vmatpush1.bf16.msra.mxu0 0
        %2339 = vmatprep.subr.bf16.mxu0 0
        %2340 = vmatpush1.bf16.msra.mxu0 0
        %2341 = vmatprep.subr.bf16.mxu0 0
        %2342 = vmatpush1.bf16.msra.mxu0 0
        %2343 = vmatprep.subr.bf16.mxu0 0
        %2344 = vmatpush1.bf16.msra.mxu0 0
        %2345 = vmatprep.subr.bf16.mxu0 0
        %2346 = vmatpush1.bf16.msra.mxu0 %v1812
        %2347 = vmatprep.subr.bf16.mxu0 0
        %2348 = vmatpush2.bf16.msra.mxu0 0
        %2349 = vmatprep.subr.bf16.mxu0 0
        %2350 = vmatpush2.bf16.msra.mxu0 0
        %2351 = vmatprep.subr.bf16.mxu0 0
        %2352 = vmatpush2.bf16.msra.mxu0 0
        %2353 = vmatprep.subr.bf16.mxu0 0
        %2354 = vmatpush2.bf16.msra.mxu0 0
        %2355 = vmatprep.subr.bf16.mxu0 0
        %2356 = vmatpush2.bf16.msra.mxu0 0
        %2357 = vmatprep.subr.bf16.mxu0 0
        %2358 = vmatpush2.bf16.msra.mxu0 0
        %2359 = vmatprep.subr.bf16.mxu0 0
        %2360 = vmatpush2.bf16.msra.mxu0 0
        %2361 = vmatprep.subr.bf16.mxu0 0
        %2362 = vmatpush2.bf16.msra.mxu0 0
        %2363 = vmatprep.mubr.bf16.mxu0 0
        %2364 = vmatmul.mubr.bf16.gmra.mxu0 %v2329
        %v2365 = vpop.f32.mrf.mxu0
        %v2366 = vadd.f32 0.0, %v2365
        %v2367 = vpop.f32.mrf.mxu0
        %v2368 = vpop.f32.mrf.mxu0
        %v2369 = vpop.f32.mrf.mxu0
        %2370 = vdwg.mxu0
        %v2372 = vsel %vm2188, %v2279, 0
        %2374 = vmatprep.subr.bf16.mxu0 0
        %2375 = vmatpush1.bf16.msra.mxu0 0
        %2376 = vmatprep.subr.bf16.mxu0 0
        %2377 = vmatpush1.bf16.msra.mxu0 0
        %2378 = vmatprep.subr.bf16.mxu0 0
        %2379 = vmatpush1.bf16.msra.mxu0 0
        %2380 = vmatprep.subr.bf16.mxu0 0
        %2381 = vmatpush1.bf16.msra.mxu0 0
        %2382 = vmatprep.subr.bf16.mxu0 0
        %2383 = vmatpush1.bf16.msra.mxu0 0
        %2384 = vmatprep.subr.bf16.mxu0 0
        %2385 = vmatpush1.bf16.msra.mxu0 0
        %2386 = vmatprep.subr.bf16.mxu0 0
        %2387 = vmatpush1.bf16.msra.mxu0 0
        %2388 = vmatprep.subr.bf16.mxu0 0
        %2389 = vmatpush1.bf16.msra.mxu0 %v1813
        %2390 = vmatprep.subr.bf16.mxu0 0
        %2391 = vmatpush2.bf16.msra.mxu0 0
        %2392 = vmatprep.subr.bf16.mxu0 0
        %2393 = vmatpush2.bf16.msra.mxu0 0
        %2394 = vmatprep.subr.bf16.mxu0 0
        %2395 = vmatpush2.bf16.msra.mxu0 0
        %2396 = vmatprep.subr.bf16.mxu0 0
        %2397 = vmatpush2.bf16.msra.mxu0 0
        %2398 = vmatprep.subr.bf16.mxu0 0
        %2399 = vmatpush2.bf16.msra.mxu0 0
        %2400 = vmatprep.subr.bf16.mxu0 0
        %2401 = vmatpush2.bf16.msra.mxu0 0
        %2402 = vmatprep.subr.bf16.mxu0 0
        %2403 = vmatpush2.bf16.msra.mxu0 0
        %2404 = vmatprep.subr.bf16.mxu0 0
        %2405 = vmatpush2.bf16.msra.mxu0 0
        %2406 = vmatprep.mubr.bf16.mxu0 0
        %2407 = vmatmul.mubr.bf16.gmra.mxu0 %v2372
        %v2408 = vpop.f32.mrf.mxu0
        %v2409 = vadd.f32 0.0, %v2408
        %v2410 = vpop.f32.mrf.mxu0
        %v2411 = vpop.f32.mrf.mxu0
        %v2412 = vpop.f32.mrf.mxu0
        %2413 = vdwg.mxu0
        %v2415 = vsel %vm2188, %v2280, 0
        %2417 = vmatprep.subr.bf16.mxu0 0
        %2418 = vmatpush1.bf16.msra.mxu0 0
        %2419 = vmatprep.subr.bf16.mxu0 0
        %2420 = vmatpush1.bf16.msra.mxu0 0
        %2421 = vmatprep.subr.bf16.mxu0 0
        %2422 = vmatpush1.bf16.msra.mxu0 0
        %2423 = vmatprep.subr.bf16.mxu0 0
        %2424 = vmatpush1.bf16.msra.mxu0 0
        %2425 = vmatprep.subr.bf16.mxu0 0
        %2426 = vmatpush1.bf16.msra.mxu0 0
        %2427 = vmatprep.subr.bf16.mxu0 0
        %2428 = vmatpush1.bf16.msra.mxu0 0
        %2429 = vmatprep.subr.bf16.mxu0 0
        %2430 = vmatpush1.bf16.msra.mxu0 0
        %2431 = vmatprep.subr.bf16.mxu0 0
        %2432 = vmatpush1.bf16.msra.mxu0 %v1814
        %2433 = vmatprep.subr.bf16.mxu0 0
        %2434 = vmatpush2.bf16.msra.mxu0 0
        %2435 = vmatprep.subr.bf16.mxu0 0
        %2436 = vmatpush2.bf16.msra.mxu0 0
        %2437 = vmatprep.subr.bf16.mxu0 0
        %2438 = vmatpush2.bf16.msra.mxu0 0
        %2439 = vmatprep.subr.bf16.mxu0 0
        %2440 = vmatpush2.bf16.msra.mxu0 0
        %2441 = vmatprep.subr.bf16.mxu0 0
        %2442 = vmatpush2.bf16.msra.mxu0 0
        %2443 = vmatprep.subr.bf16.mxu0 0
        %2444 = vmatpush2.bf16.msra.mxu0 0
        %2445 = vmatprep.subr.bf16.mxu0 0
        %2446 = vmatpush2.bf16.msra.mxu0 0
        %2447 = vmatprep.subr.bf16.mxu0 0
        %2448 = vmatpush2.bf16.msra.mxu0 0
        %2449 = vmatprep.mubr.bf16.mxu0 0
        %2450 = vmatmul.mubr.bf16.gmra.mxu0 %v2415
        %v2451 = vpop.f32.mrf.mxu0
        %v2452 = vadd.f32 0.0, %v2451
        %v2453 = vpop.f32.mrf.mxu0
        %v2454 = vpop.f32.mrf.mxu0
        %v2455 = vpop.f32.mrf.mxu0
        %2456 = vdwg.mxu0
        %v2458 = vsel %vm2188, %v2281, 0
        %2460 = vmatprep.subr.bf16.mxu0 0
        %2461 = vmatpush1.bf16.msra.mxu0 0
        %2462 = vmatprep.subr.bf16.mxu0 0
        %2463 = vmatpush1.bf16.msra.mxu0 0
        %2464 = vmatprep.subr.bf16.mxu0 0
        %2465 = vmatpush1.bf16.msra.mxu0 0
        %2466 = vmatprep.subr.bf16.mxu0 0
        %2467 = vmatpush1.bf16.msra.mxu0 0
        %2468 = vmatprep.subr.bf16.mxu0 0
        %2469 = vmatpush1.bf16.msra.mxu0 0
        %2470 = vmatprep.subr.bf16.mxu0 0
        %2471 = vmatpush1.bf16.msra.mxu0 0
        %2472 = vmatprep.subr.bf16.mxu0 0
        %2473 = vmatpush1.bf16.msra.mxu0 0
        %2474 = vmatprep.subr.bf16.mxu0 0
        %2475 = vmatpush1.bf16.msra.mxu0 %v1815
        %2476 = vmatprep.subr.bf16.mxu0 0
        %2477 = vmatpush2.bf16.msra.mxu0 0
        %2478 = vmatprep.subr.bf16.mxu0 0
        %2479 = vmatpush2.bf16.msra.mxu0 0
        %2480 = vmatprep.subr.bf16.mxu0 0
        %2481 = vmatpush2.bf16.msra.mxu0 0
        %2482 = vmatprep.subr.bf16.mxu0 0
        %2483 = vmatpush2.bf16.msra.mxu0 0
        %2484 = vmatprep.subr.bf16.mxu0 0
        %2485 = vmatpush2.bf16.msra.mxu0 0
        %2486 = vmatprep.subr.bf16.mxu0 0
        %2487 = vmatpush2.bf16.msra.mxu0 0
        %2488 = vmatprep.subr.bf16.mxu0 0
        %2489 = vmatpush2.bf16.msra.mxu0 0
        %2490 = vmatprep.subr.bf16.mxu0 0
        %2491 = vmatpush2.bf16.msra.mxu0 0
        %2492 = vmatprep.mubr.bf16.mxu0 0
        %2493 = vmatmul.mubr.bf16.gmra.mxu0 %v2458
        %v2494 = vpop.f32.mrf.mxu0
        %v2495 = vadd.f32 0.0, %v2494
        %v2496 = vpop.f32.mrf.mxu0
        %v2497 = vpop.f32.mrf.mxu0
        %v2498 = vpop.f32.mrf.mxu0
        %2499 = vdwg.mxu0
        %v2501 = vsel %vm2188, %v2282, 0
        %2503 = vmatprep.subr.bf16.mxu0 0
        %2504 = vmatpush1.bf16.msra.mxu0 0
        %2505 = vmatprep.subr.bf16.mxu0 0
        %2506 = vmatpush1.bf16.msra.mxu0 0
        %2507 = vmatprep.subr.bf16.mxu0 0
        %2508 = vmatpush1.bf16.msra.mxu0 0
        %2509 = vmatprep.subr.bf16.mxu0 0
        %2510 = vmatpush1.bf16.msra.mxu0 0
        %2511 = vmatprep.subr.bf16.mxu0 0
        %2512 = vmatpush1.bf16.msra.mxu0 0
        %2513 = vmatprep.subr.bf16.mxu0 0
        %2514 = vmatpush1.bf16.msra.mxu0 0
        %2515 = vmatprep.subr.bf16.mxu0 0
        %2516 = vmatpush1.bf16.msra.mxu0 0
        %2517 = vmatprep.subr.bf16.mxu0 0
        %2518 = vmatpush1.bf16.msra.mxu0 %v1816
        %2519 = vmatprep.subr.bf16.mxu0 0
        %2520 = vmatpush2.bf16.msra.mxu0 0
        %2521 = vmatprep.subr.bf16.mxu0 0
        %2522 = vmatpush2.bf16.msra.mxu0 0
        %2523 = vmatprep.subr.bf16.mxu0 0
        %2524 = vmatpush2.bf16.msra.mxu0 0
        %2525 = vmatprep.subr.bf16.mxu0 0
        %2526 = vmatpush2.bf16.msra.mxu0 0
        %2527 = vmatprep.subr.bf16.mxu0 0
        %2528 = vmatpush2.bf16.msra.mxu0 0
        %2529 = vmatprep.subr.bf16.mxu0 0
        %2530 = vmatpush2.bf16.msra.mxu0 0
        %2531 = vmatprep.subr.bf16.mxu0 0
        %2532 = vmatpush2.bf16.msra.mxu0 0
        %2533 = vmatprep.subr.bf16.mxu0 0
        %2534 = vmatpush2.bf16.msra.mxu0 0
        %2535 = vmatprep.mubr.bf16.mxu0 0
        %2536 = vmatmul.mubr.bf16.gmra.mxu0 %v2501
        %v2537 = vpop.f32.mrf.mxu0
        %v2538 = vadd.f32 0.0, %v2537
        %v2539 = vpop.f32.mrf.mxu0
        %v2540 = vpop.f32.mrf.mxu0
        %v2541 = vpop.f32.mrf.mxu0
        %2542 = vdwg.mxu0
        %v2544 = vsel %vm2188, %v2283, 0
        %2546 = vmatprep.subr.bf16.mxu0 0
        %2547 = vmatpush1.bf16.msra.mxu0 0
        %2548 = vmatprep.subr.bf16.mxu0 0
        %2549 = vmatpush1.bf16.msra.mxu0 0
        %2550 = vmatprep.subr.bf16.mxu0 0
        %2551 = vmatpush1.bf16.msra.mxu0 0
        %2552 = vmatprep.subr.bf16.mxu0 0
        %2553 = vmatpush1.bf16.msra.mxu0 0
        %2554 = vmatprep.subr.bf16.mxu0 0
        %2555 = vmatpush1.bf16.msra.mxu0 0
        %2556 = vmatprep.subr.bf16.mxu0 0
        %2557 = vmatpush1.bf16.msra.mxu0 0
        %2558 = vmatprep.subr.bf16.mxu0 0
        %2559 = vmatpush1.bf16.msra.mxu0 0
        %2560 = vmatprep.subr.bf16.mxu0 0
        %2561 = vmatpush1.bf16.msra.mxu0 %v1817
        %2562 = vmatprep.subr.bf16.mxu0 0
        %2563 = vmatpush2.bf16.msra.mxu0 0
        %2564 = vmatprep.subr.bf16.mxu0 0
        %2565 = vmatpush2.bf16.msra.mxu0 0
        %2566 = vmatprep.subr.bf16.mxu0 0
        %2567 = vmatpush2.bf16.msra.mxu0 0
        %2568 = vmatprep.subr.bf16.mxu0 0
        %2569 = vmatpush2.bf16.msra.mxu0 0
        %2570 = vmatprep.subr.bf16.mxu0 0
        %2571 = vmatpush2.bf16.msra.mxu0 0
        %2572 = vmatprep.subr.bf16.mxu0 0
        %2573 = vmatpush2.bf16.msra.mxu0 0
        %2574 = vmatprep.subr.bf16.mxu0 0
        %2575 = vmatpush2.bf16.msra.mxu0 0
        %2576 = vmatprep.subr.bf16.mxu0 0
        %2577 = vmatpush2.bf16.msra.mxu0 0
        %2578 = vmatprep.mubr.bf16.mxu0 0
        %2579 = vmatmul.mubr.bf16.gmra.mxu0 %v2544
        %v2580 = vpop.f32.mrf.mxu0
        %v2581 = vadd.f32 0.0, %v2580
        %v2582 = vpop.f32.mrf.mxu0
        %v2583 = vpop.f32.mrf.mxu0
        %v2584 = vpop.f32.mrf.mxu0
        %2585 = vdwg.mxu0
        %v2587 = vsel %vm2188, %v2284, 0
        %2589 = vmatprep.subr.bf16.mxu0 0
        %2590 = vmatpush1.bf16.msra.mxu0 0
        %2591 = vmatprep.subr.bf16.mxu0 0
        %2592 = vmatpush1.bf16.msra.mxu0 0
        %2593 = vmatprep.subr.bf16.mxu0 0
        %2594 = vmatpush1.bf16.msra.mxu0 0
        %2595 = vmatprep.subr.bf16.mxu0 0
        %2596 = vmatpush1.bf16.msra.mxu0 0
        %2597 = vmatprep.subr.bf16.mxu0 0
        %2598 = vmatpush1.bf16.msra.mxu0 0
        %2599 = vmatprep.subr.bf16.mxu0 0
        %2600 = vmatpush1.bf16.msra.mxu0 0
        %2601 = vmatprep.subr.bf16.mxu0 0
        %2602 = vmatpush1.bf16.msra.mxu0 0
        %2603 = vmatprep.subr.bf16.mxu0 0
        %2604 = vmatpush1.bf16.msra.mxu0 %v1818
        %2605 = vmatprep.subr.bf16.mxu0 0
        %2606 = vmatpush2.bf16.msra.mxu0 0
        %2607 = vmatprep.subr.bf16.mxu0 0
        %2608 = vmatpush2.bf16.msra.mxu0 0
        %2609 = vmatprep.subr.bf16.mxu0 0
        %2610 = vmatpush2.bf16.msra.mxu0 0
        %2611 = vmatprep.subr.bf16.mxu0 0
        %2612 = vmatpush2.bf16.msra.mxu0 0
        %2613 = vmatprep.subr.bf16.mxu0 0
        %2614 = vmatpush2.bf16.msra.mxu0 0
        %2615 = vmatprep.subr.bf16.mxu0 0
        %2616 = vmatpush2.bf16.msra.mxu0 0
        %2617 = vmatprep.subr.bf16.mxu0 0
        %2618 = vmatpush2.bf16.msra.mxu0 0
        %2619 = vmatprep.subr.bf16.mxu0 0
        %2620 = vmatpush2.bf16.msra.mxu0 0
        %2621 = vmatprep.mubr.bf16.mxu0 0
        %2622 = vmatmul.mubr.bf16.gmra.mxu0 %v2587
        %v2623 = vpop.f32.mrf.mxu0
        %v2624 = vadd.f32 0.0, %v2623
        %v2625 = vpop.f32.mrf.mxu0
        %v2626 = vpop.f32.mrf.mxu0
        %v2627 = vpop.f32.mrf.mxu0
        %2628 = vdwg.mxu0
        %v2629 = vpack.c.bf16 %v2323, %v2323
        %v2630 = vpack.c.bf16 %v2366, %v2366
        %v2631 = vpack.c.bf16 %v2409, %v2409
        %v2632 = vpack.c.bf16 %v2452, %v2452
        %v2633 = vpack.c.bf16 %v2495, %v2495
        %v2634 = vpack.c.bf16 %v2538, %v2538
        %v2635 = vpack.c.bf16 %v2581, %v2581
        %v2636 = vpack.c.bf16 %v2624, %v2624
        %v2637 = vld [vmem:[%s6] sm:$0xf]
        %v2638 = vld [vmem:[%s6 + $0x4] sm:$0xf]
        %v2639 = vld [vmem:[%s6 + $0x8] sm:$0xf]
        %v2640 = vld [vmem:[%s6 + $0xc] sm:$0xf]
        %v2641 = vld [vmem:[%s6 + $0x10] sm:$0xf]
        %v2642 = vld [vmem:[%s6 + $0x14] sm:$0xf]
        %v2643 = vld [vmem:[%s6 + $0x18] sm:$0xf]
        %v2644 = vld [vmem:[%s6 + $0x1c] sm:$0xf]
        %v2646 = vsel %vm1819, %v2629, 0
        %vm2648 = vcmask 1043456
        %v2650 = vsel %vm2648, %v2637, 0
        %2652 = vmatprep.subr.bf16.mxu0 0
        %2653 = vmatpush1.bf16.msra.mxu0 0
        %2654 = vmatprep.subr.bf16.mxu0 0
        %2655 = vmatpush1.bf16.msra.mxu0 0
        %2656 = vmatprep.subr.bf16.mxu0 0
        %2657 = vmatpush1.bf16.msra.mxu0 0
        %2658 = vmatprep.subr.bf16.mxu0 0
        %2659 = vmatpush1.bf16.msra.mxu0 0
        %2660 = vmatprep.subr.bf16.mxu0 0
        %2661 = vmatpush1.bf16.msra.mxu0 0
        %2662 = vmatprep.subr.bf16.mxu0 0
        %2663 = vmatpush1.bf16.msra.mxu0 0
        %2664 = vmatprep.subr.bf16.mxu0 0
        %2665 = vmatpush1.bf16.msra.mxu0 0
        %2666 = vmatprep.subr.bf16.mxu0 0
        %2667 = vmatpush1.bf16.msra.mxu0 %v2650
        %2668 = vmatprep.subr.bf16.mxu0 0
        %2669 = vmatpush2.bf16.msra.mxu0 0
        %2670 = vmatprep.subr.bf16.mxu0 0
        %2671 = vmatpush2.bf16.msra.mxu0 0
        %2672 = vmatprep.subr.bf16.mxu0 0
        %2673 = vmatpush2.bf16.msra.mxu0 0
        %2674 = vmatprep.subr.bf16.mxu0 0
        %2675 = vmatpush2.bf16.msra.mxu0 0
        %2676 = vmatprep.subr.bf16.mxu0 0
        %2677 = vmatpush2.bf16.msra.mxu0 0
        %2678 = vmatprep.subr.bf16.mxu0 0
        %2679 = vmatpush2.bf16.msra.mxu0 0
        %2680 = vmatprep.subr.bf16.mxu0 0
        %2681 = vmatpush2.bf16.msra.mxu0 0
        %2682 = vmatprep.subr.bf16.mxu0 0
        %2683 = vmatpush2.bf16.msra.mxu0 0
        %2684 = vmatprep.mubr.bf16.mxu0 0
        %2685 = vmatmul.mubr.bf16.gmra.mxu0 %v2646
        %v2686 = vpop.f32.mrf.mxu0
        %v2687 = vadd.f32 0.0, %v2686
        %v2688 = vpop.f32.mrf.mxu0
        %v2689 = vpop.f32.mrf.mxu0
        %v2690 = vpop.f32.mrf.mxu0
        %2691 = vdwg.mxu0
        %v2693 = vsel %vm1819, %v2630, 0
        %v2696 = vsel %vm2648, %v2638, 0
        %2698 = vmatprep.subr.bf16.mxu0 0
        %2699 = vmatpush1.bf16.msra.mxu0 0
        %2700 = vmatprep.subr.bf16.mxu0 0
        %2701 = vmatpush1.bf16.msra.mxu0 0
        %2702 = vmatprep.subr.bf16.mxu0 0
        %2703 = vmatpush1.bf16.msra.mxu0 0
        %2704 = vmatprep.subr.bf16.mxu0 0
        %2705 = vmatpush1.bf16.msra.mxu0 0
        %2706 = vmatprep.subr.bf16.mxu0 0
        %2707 = vmatpush1.bf16.msra.mxu0 0
        %2708 = vmatprep.subr.bf16.mxu0 0
        %2709 = vmatpush1.bf16.msra.mxu0 0
        %2710 = vmatprep.subr.bf16.mxu0 0
        %2711 = vmatpush1.bf16.msra.mxu0 0
        %2712 = vmatprep.subr.bf16.mxu0 0
        %2713 = vmatpush1.bf16.msra.mxu0 %v2696
        %2714 = vmatprep.subr.bf16.mxu0 0
        %2715 = vmatpush2.bf16.msra.mxu0 0
        %2716 = vmatprep.subr.bf16.mxu0 0
        %2717 = vmatpush2.bf16.msra.mxu0 0
        %2718 = vmatprep.subr.bf16.mxu0 0
        %2719 = vmatpush2.bf16.msra.mxu0 0
        %2720 = vmatprep.subr.bf16.mxu0 0
        %2721 = vmatpush2.bf16.msra.mxu0 0
        %2722 = vmatprep.subr.bf16.mxu0 0
        %2723 = vmatpush2.bf16.msra.mxu0 0
        %2724 = vmatprep.subr.bf16.mxu0 0
        %2725 = vmatpush2.bf16.msra.mxu0 0
        %2726 = vmatprep.subr.bf16.mxu0 0
        %2727 = vmatpush2.bf16.msra.mxu0 0
        %2728 = vmatprep.subr.bf16.mxu0 0
        %2729 = vmatpush2.bf16.msra.mxu0 0
        %2730 = vmatprep.mubr.bf16.mxu0 0
        %2731 = vmatmul.mubr.bf16.gmra.mxu0 %v2693
        %v2732 = vpop.f32.mrf.mxu0
        %v2733 = vadd.f32 0.0, %v2732
        %v2734 = vpop.f32.mrf.mxu0
        %v2735 = vpop.f32.mrf.mxu0
        %v2736 = vpop.f32.mrf.mxu0
        %2737 = vdwg.mxu0
        %v2739 = vsel %vm1819, %v2631, 0
        %v2742 = vsel %vm2648, %v2639, 0
        %2744 = vmatprep.subr.bf16.mxu0 0
        %2745 = vmatpush1.bf16.msra.mxu0 0
        %2746 = vmatprep.subr.bf16.mxu0 0
        %2747 = vmatpush1.bf16.msra.mxu0 0
        %2748 = vmatprep.subr.bf16.mxu0 0
        %2749 = vmatpush1.bf16.msra.mxu0 0
        %2750 = vmatprep.subr.bf16.mxu0 0
        %2751 = vmatpush1.bf16.msra.mxu0 0
        %2752 = vmatprep.subr.bf16.mxu0 0
        %2753 = vmatpush1.bf16.msra.mxu0 0
        %2754 = vmatprep.subr.bf16.mxu0 0
        %2755 = vmatpush1.bf16.msra.mxu0 0
        %2756 = vmatprep.subr.bf16.mxu0 0
        %2757 = vmatpush1.bf16.msra.mxu0 0
        %2758 = vmatprep.subr.bf16.mxu0 0
        %2759 = vmatpush1.bf16.msra.mxu0 %v2742
        %2760 = vmatprep.subr.bf16.mxu0 0
        %2761 = vmatpush2.bf16.msra.mxu0 0
        %2762 = vmatprep.subr.bf16.mxu0 0
        %2763 = vmatpush2.bf16.msra.mxu0 0
        %2764 = vmatprep.subr.bf16.mxu0 0
        %2765 = vmatpush2.bf16.msra.mxu0 0
        %2766 = vmatprep.subr.bf16.mxu0 0
        %2767 = vmatpush2.bf16.msra.mxu0 0
        %2768 = vmatprep.subr.bf16.mxu0 0
        %2769 = vmatpush2.bf16.msra.mxu0 0
        %2770 = vmatprep.subr.bf16.mxu0 0
        %2771 = vmatpush2.bf16.msra.mxu0 0
        %2772 = vmatprep.subr.bf16.mxu0 0
        %2773 = vmatpush2.bf16.msra.mxu0 0
        %2774 = vmatprep.subr.bf16.mxu0 0
        %2775 = vmatpush2.bf16.msra.mxu0 0
        %2776 = vmatprep.mubr.bf16.mxu0 0
        %2777 = vmatmul.mubr.bf16.gmra.mxu0 %v2739
        %v2778 = vpop.f32.mrf.mxu0
        %v2779 = vadd.f32 0.0, %v2778
        %v2780 = vpop.f32.mrf.mxu0
        %v2781 = vpop.f32.mrf.mxu0
        %v2782 = vpop.f32.mrf.mxu0
        %2783 = vdwg.mxu0
        %v2785 = vsel %vm1819, %v2632, 0
        %v2788 = vsel %vm2648, %v2640, 0
        %2790 = vmatprep.subr.bf16.mxu0 0
        %2791 = vmatpush1.bf16.msra.mxu0 0
        %2792 = vmatprep.subr.bf16.mxu0 0
        %2793 = vmatpush1.bf16.msra.mxu0 0
        %2794 = vmatprep.subr.bf16.mxu0 0
        %2795 = vmatpush1.bf16.msra.mxu0 0
        %2796 = vmatprep.subr.bf16.mxu0 0
        %2797 = vmatpush1.bf16.msra.mxu0 0
        %2798 = vmatprep.subr.bf16.mxu0 0
        %2799 = vmatpush1.bf16.msra.mxu0 0
        %2800 = vmatprep.subr.bf16.mxu0 0
        %2801 = vmatpush1.bf16.msra.mxu0 0
        %2802 = vmatprep.subr.bf16.mxu0 0
        %2803 = vmatpush1.bf16.msra.mxu0 0
        %2804 = vmatprep.subr.bf16.mxu0 0
        %2805 = vmatpush1.bf16.msra.mxu0 %v2788
        %2806 = vmatprep.subr.bf16.mxu0 0
        %2807 = vmatpush2.bf16.msra.mxu0 0
        %2808 = vmatprep.subr.bf16.mxu0 0
        %2809 = vmatpush2.bf16.msra.mxu0 0
        %2810 = vmatprep.subr.bf16.mxu0 0
        %2811 = vmatpush2.bf16.msra.mxu0 0
        %2812 = vmatprep.subr.bf16.mxu0 0
        %2813 = vmatpush2.bf16.msra.mxu0 0
        %2814 = vmatprep.subr.bf16.mxu0 0
        %2815 = vmatpush2.bf16.msra.mxu0 0
        %2816 = vmatprep.subr.bf16.mxu0 0
        %2817 = vmatpush2.bf16.msra.mxu0 0
        %2818 = vmatprep.subr.bf16.mxu0 0
        %2819 = vmatpush2.bf16.msra.mxu0 0
        %2820 = vmatprep.subr.bf16.mxu0 0
        %2821 = vmatpush2.bf16.msra.mxu0 0
        %2822 = vmatprep.mubr.bf16.mxu0 0
        %2823 = vmatmul.mubr.bf16.gmra.mxu0 %v2785
        %v2824 = vpop.f32.mrf.mxu0
        %v2825 = vadd.f32 0.0, %v2824
        %v2826 = vpop.f32.mrf.mxu0
        %v2827 = vpop.f32.mrf.mxu0
        %v2828 = vpop.f32.mrf.mxu0
        %2829 = vdwg.mxu0
        %v2831 = vsel %vm1819, %v2633, 0
        %v2834 = vsel %vm2648, %v2641, 0
        %2836 = vmatprep.subr.bf16.mxu0 0
        %2837 = vmatpush1.bf16.msra.mxu0 0
        %2838 = vmatprep.subr.bf16.mxu0 0
        %2839 = vmatpush1.bf16.msra.mxu0 0
        %2840 = vmatprep.subr.bf16.mxu0 0
        %2841 = vmatpush1.bf16.msra.mxu0 0
        %2842 = vmatprep.subr.bf16.mxu0 0
        %2843 = vmatpush1.bf16.msra.mxu0 0
        %2844 = vmatprep.subr.bf16.mxu0 0
        %2845 = vmatpush1.bf16.msra.mxu0 0
        %2846 = vmatprep.subr.bf16.mxu0 0
        %2847 = vmatpush1.bf16.msra.mxu0 0
        %2848 = vmatprep.subr.bf16.mxu0 0
        %2849 = vmatpush1.bf16.msra.mxu0 0
        %2850 = vmatprep.subr.bf16.mxu0 0
        %2851 = vmatpush1.bf16.msra.mxu0 %v2834
        %2852 = vmatprep.subr.bf16.mxu0 0
        %2853 = vmatpush2.bf16.msra.mxu0 0
        %2854 = vmatprep.subr.bf16.mxu0 0
        %2855 = vmatpush2.bf16.msra.mxu0 0
        %2856 = vmatprep.subr.bf16.mxu0 0
        %2857 = vmatpush2.bf16.msra.mxu0 0
        %2858 = vmatprep.subr.bf16.mxu0 0
        %2859 = vmatpush2.bf16.msra.mxu0 0
        %2860 = vmatprep.subr.bf16.mxu0 0
        %2861 = vmatpush2.bf16.msra.mxu0 0
        %2862 = vmatprep.subr.bf16.mxu0 0
        %2863 = vmatpush2.bf16.msra.mxu0 0
        %2864 = vmatprep.subr.bf16.mxu0 0
        %2865 = vmatpush2.bf16.msra.mxu0 0
        %2866 = vmatprep.subr.bf16.mxu0 0
        %2867 = vmatpush2.bf16.msra.mxu0 0
        %2868 = vmatprep.mubr.bf16.mxu0 0
        %2869 = vmatmul.mubr.bf16.gmra.mxu0 %v2831
        %v2870 = vpop.f32.mrf.mxu0
        %v2871 = vadd.f32 0.0, %v2870
        %v2872 = vpop.f32.mrf.mxu0
        %v2873 = vpop.f32.mrf.mxu0
        %v2874 = vpop.f32.mrf.mxu0
        %2875 = vdwg.mxu0
        %v2877 = vsel %vm1819, %v2634, 0
        %v2880 = vsel %vm2648, %v2642, 0
        %2882 = vmatprep.subr.bf16.mxu0 0
        %2883 = vmatpush1.bf16.msra.mxu0 0
        %2884 = vmatprep.subr.bf16.mxu0 0
        %2885 = vmatpush1.bf16.msra.mxu0 0
        %2886 = vmatprep.subr.bf16.mxu0 0
        %2887 = vmatpush1.bf16.msra.mxu0 0
        %2888 = vmatprep.subr.bf16.mxu0 0
        %2889 = vmatpush1.bf16.msra.mxu0 0
        %2890 = vmatprep.subr.bf16.mxu0 0
        %2891 = vmatpush1.bf16.msra.mxu0 0
        %2892 = vmatprep.subr.bf16.mxu0 0
        %2893 = vmatpush1.bf16.msra.mxu0 0
        %2894 = vmatprep.subr.bf16.mxu0 0
        %2895 = vmatpush1.bf16.msra.mxu0 0
        %2896 = vmatprep.subr.bf16.mxu0 0
        %2897 = vmatpush1.bf16.msra.mxu0 %v2880
        %2898 = vmatprep.subr.bf16.mxu0 0
        %2899 = vmatpush2.bf16.msra.mxu0 0
        %2900 = vmatprep.subr.bf16.mxu0 0
        %2901 = vmatpush2.bf16.msra.mxu0 0
        %2902 = vmatprep.subr.bf16.mxu0 0
        %2903 = vmatpush2.bf16.msra.mxu0 0
        %2904 = vmatprep.subr.bf16.mxu0 0
        %2905 = vmatpush2.bf16.msra.mxu0 0
        %2906 = vmatprep.subr.bf16.mxu0 0
        %2907 = vmatpush2.bf16.msra.mxu0 0
        %2908 = vmatprep.subr.bf16.mxu0 0
        %2909 = vmatpush2.bf16.msra.mxu0 0
        %2910 = vmatprep.subr.bf16.mxu0 0
        %2911 = vmatpush2.bf16.msra.mxu0 0
        %2912 = vmatprep.subr.bf16.mxu0 0
        %2913 = vmatpush2.bf16.msra.mxu0 0
        %2914 = vmatprep.mubr.bf16.mxu0 0
        %2915 = vmatmul.mubr.bf16.gmra.mxu0 %v2877
        %v2916 = vpop.f32.mrf.mxu0
        %v2917 = vadd.f32 0.0, %v2916
        %v2918 = vpop.f32.mrf.mxu0
        %v2919 = vpop.f32.mrf.mxu0
        %v2920 = vpop.f32.mrf.mxu0
        %2921 = vdwg.mxu0
        %v2923 = vsel %vm1819, %v2635, 0
        %v2926 = vsel %vm2648, %v2643, 0
        %2928 = vmatprep.subr.bf16.mxu0 0
        %2929 = vmatpush1.bf16.msra.mxu0 0
        %2930 = vmatprep.subr.bf16.mxu0 0
        %2931 = vmatpush1.bf16.msra.mxu0 0
        %2932 = vmatprep.subr.bf16.mxu0 0
        %2933 = vmatpush1.bf16.msra.mxu0 0
        %2934 = vmatprep.subr.bf16.mxu0 0
        %2935 = vmatpush1.bf16.msra.mxu0 0
        %2936 = vmatprep.subr.bf16.mxu0 0
        %2937 = vmatpush1.bf16.msra.mxu0 0
        %2938 = vmatprep.subr.bf16.mxu0 0
        %2939 = vmatpush1.bf16.msra.mxu0 0
        %2940 = vmatprep.subr.bf16.mxu0 0
        %2941 = vmatpush1.bf16.msra.mxu0 0
        %2942 = vmatprep.subr.bf16.mxu0 0
        %2943 = vmatpush1.bf16.msra.mxu0 %v2926
        %2944 = vmatprep.subr.bf16.mxu0 0
        %2945 = vmatpush2.bf16.msra.mxu0 0
        %2946 = vmatprep.subr.bf16.mxu0 0
        %2947 = vmatpush2.bf16.msra.mxu0 0
        %2948 = vmatprep.subr.bf16.mxu0 0
        %2949 = vmatpush2.bf16.msra.mxu0 0
        %2950 = vmatprep.subr.bf16.mxu0 0
        %2951 = vmatpush2.bf16.msra.mxu0 0
        %2952 = vmatprep.subr.bf16.mxu0 0
        %2953 = vmatpush2.bf16.msra.mxu0 0
        %2954 = vmatprep.subr.bf16.mxu0 0
        %2955 = vmatpush2.bf16.msra.mxu0 0
        %2956 = vmatprep.subr.bf16.mxu0 0
        %2957 = vmatpush2.bf16.msra.mxu0 0
        %2958 = vmatprep.subr.bf16.mxu0 0
        %2959 = vmatpush2.bf16.msra.mxu0 0
        %2960 = vmatprep.mubr.bf16.mxu0 0
        %2961 = vmatmul.mubr.bf16.gmra.mxu0 %v2923
        %v2962 = vpop.f32.mrf.mxu0
        %v2963 = vadd.f32 0.0, %v2962
        %v2964 = vpop.f32.mrf.mxu0
        %v2965 = vpop.f32.mrf.mxu0
        %v2966 = vpop.f32.mrf.mxu0
        %2967 = vdwg.mxu0
        %v2969 = vsel %vm1819, %v2636, 0
        %v2972 = vsel %vm2648, %v2644, 0
        %2974 = vmatprep.subr.bf16.mxu0 0
        %2975 = vmatpush1.bf16.msra.mxu0 0
        %2976 = vmatprep.subr.bf16.mxu0 0
        %2977 = vmatpush1.bf16.msra.mxu0 0
        %2978 = vmatprep.subr.bf16.mxu0 0
        %2979 = vmatpush1.bf16.msra.mxu0 0
        %2980 = vmatprep.subr.bf16.mxu0 0
        %2981 = vmatpush1.bf16.msra.mxu0 0
        %2982 = vmatprep.subr.bf16.mxu0 0
        %2983 = vmatpush1.bf16.msra.mxu0 0
        %2984 = vmatprep.subr.bf16.mxu0 0
        %2985 = vmatpush1.bf16.msra.mxu0 0
        %2986 = vmatprep.subr.bf16.mxu0 0
        %2987 = vmatpush1.bf16.msra.mxu0 0
        %2988 = vmatprep.subr.bf16.mxu0 0
        %2989 = vmatpush1.bf16.msra.mxu0 %v2972
        %2990 = vmatprep.subr.bf16.mxu0 0
        %2991 = vmatpush2.bf16.msra.mxu0 0
        %2992 = vmatprep.subr.bf16.mxu0 0
        %2993 = vmatpush2.bf16.msra.mxu0 0
        %2994 = vmatprep.subr.bf16.mxu0 0
        %2995 = vmatpush2.bf16.msra.mxu0 0
        %2996 = vmatprep.subr.bf16.mxu0 0
        %2997 = vmatpush2.bf16.msra.mxu0 0
        %2998 = vmatprep.subr.bf16.mxu0 0
        %2999 = vmatpush2.bf16.msra.mxu0 0
        %3000 = vmatprep.subr.bf16.mxu0 0
        %3001 = vmatpush2.bf16.msra.mxu0 0
        %3002 = vmatprep.subr.bf16.mxu0 0
        %3003 = vmatpush2.bf16.msra.mxu0 0
        %3004 = vmatprep.subr.bf16.mxu0 0
        %3005 = vmatpush2.bf16.msra.mxu0 0
        %3006 = vmatprep.mubr.bf16.mxu0 0
        %3007 = vmatmul.mubr.bf16.gmra.mxu0 %v2969
        %v3008 = vpop.f32.mrf.mxu0
        %v3009 = vadd.f32 0.0, %v3008
        %v3010 = vpop.f32.mrf.mxu0
        %v3011 = vpop.f32.mrf.mxu0
        %v3012 = vpop.f32.mrf.mxu0
        %3013 = vdwg.mxu0
        %vm3014 = vcmask 523264
        %v3015 = vsel %vm3014, %v2687, 0.0
        %v3016 = vsel %vm3014, %v2733, 0.0
        %v3017 = vadd.f32 %v3015, %v3016
        %v3018 = vsel %vm3014, %v2779, 0.0
        %v3019 = vadd.f32 %v3017, %v3018
        %v3020 = vsel %vm3014, %v2825, 0.0
        %v3021 = vadd.f32 %v3019, %v3020
        %v3022 = vsel %vm3014, %v2871, 0.0
        %v3023 = vadd.f32 %v3021, %v3022
        %v3024 = vsel %vm3014, %v2917, 0.0
        %v3025 = vadd.f32 %v3023, %v3024
        %v3026 = vsel %vm3014, %v2963, 0.0
        %v3027 = vadd.f32 %v3025, %v3026
        %v3028 = vsel %vm3014, %v3009, 0.0
        %v3029 = vadd.f32 %v3027, %v3028
        %v3030 = vld [vmem:[%s2 + $0x4] sm:$0x1]
        %v3032 = vlaneseq
        %v3033 = vshrl.u32 %v3032, 7
        %v3034 = vsub.s32 0, %v3033
        %v3035 = vrot.slane %v3030, %v3034
        %v3037 = vadd.f32 %v3029, %v3035
        %v3038 = vld [vmem:[%s2 + $0x5] sm:$0x1]
        %v3039 = vld [vmem:[%s2 + $0x6] sm:$0x1]
        %v3040 = vsel %vm3014, %v3037, 0.0
        %3041 = vadd.xlane.f32.xlu0 %v3040
        %v3042 = vpop.xlane.xlu0 %3041
        %v3043 = vrcp.pop 64.0
        %v3044 = vmul.f32 %v3042, %v3043
        %v3045 = vsub.f32 %v3037, %v3044
        %v3046 = vmul.f32 %v3045, %v3045
        %v3047 = vsel %vm3014, %v3046, 0.0
        %3048 = vadd.xlane.f32.xlu0 %v3047
        %v3049 = vpop.xlane.xlu0 %3048
        %v3050 = vmul.f32 %v3049, %v3043
        %v3051 = vadd.f32 %v3050, 1e-05
        %v3052 = vrsqrt.pop %v3051
        %v3053 = vmul.f32 %v3045, %v3052
        %v3055 = vlaneseq
        %v3056 = vshrl.u32 %v3055, 7
        %v3057 = vsub.s32 0, %v3056
        %v3058 = vrot.slane %v3038, %v3057
        %v3060 = vmul.f32 %v3053, %v3058
        %v3062 = vlaneseq
        %v3063 = vshrl.u32 %v3062, 7
        %v3064 = vsub.s32 0, %v3063
        %v3065 = vrot.slane %v3039, %v3064
        %v3067 = vadd.f32 %v3060, %v3065
        %v3068 = vpack.c.bf16 %v3067, %v3067
        %v3069 = vld [vmem:[%s7] sm:$0xf]
        %v3070 = vld [vmem:[%s7 + $0x4] sm:$0xf]
        %v3071 = vld [vmem:[%s7 + $0x8] sm:$0xf]
        %v3072 = vld [vmem:[%s7 + $0xc] sm:$0xf]
        %v3073 = vld [vmem:[%s7 + $0x10] sm:$0xf]
        %v3074 = vld [vmem:[%s7 + $0x14] sm:$0xf]
        %v3075 = vld [vmem:[%s7 + $0x18] sm:$0xf]
        %v3076 = vld [vmem:[%s7 + $0x1c] sm:$0xf]
        %v3077 = vld [vmem:[%s2 + $0x7] sm:$0x1]
        %v3079 = vlaneseq
        %v3080 = vshrl.u32 %v3079, 7
        %v3081 = vsub.s32 0, %v3080
        %v3082 = vrot.slane %v3077, %v3081
        %v3092 = vunpack.c.l.b16 %v3069
        %v3093 = vunpack.c.l.b16 %v3070
        %v3094 = vunpack.c.l.b16 %v3071
        %v3095 = vunpack.c.l.b16 %v3072
        %v3096 = vunpack.c.l.b16 %v3073
        %v3097 = vunpack.c.l.b16 %v3074
        %v3098 = vunpack.c.l.b16 %v3075
        %v3099 = vunpack.c.l.b16 %v3076
        %v3100 = vpack.c.b16 %v3093, %v3092
        %v3101 = vpack.c.b16 %v3095, %v3094
        %v3102 = vpack.c.b16 %v3097, %v3096
        %v3103 = vpack.c.b16 %v3099, %v3098
        %v3109 = vsel %vm3014, %v3068, 0
        %3111 = vmatprep.subr.bf16.mxu0 0
        %3112 = vmatpush1.bf16.msra.mxu0 0
        %3113 = vmatprep.subr.bf16.mxu0 0
        %3114 = vmatpush1.bf16.msra.mxu0 0
        %3115 = vmatprep.subr.bf16.mxu0 0
        %3116 = vmatpush1.bf16.msra.mxu0 0
        %3117 = vmatprep.subr.bf16.mxu0 0
        %3118 = vmatpush1.bf16.msra.mxu0 0
        %3119 = vmatprep.subr.bf16.mxu0 0
        %3120 = vmatpush1.bf16.msra.mxu0 %v3103
        %3121 = vmatprep.subr.bf16.mxu0 0
        %3122 = vmatpush1.bf16.msra.mxu0 %v3102
        %3123 = vmatprep.subr.bf16.mxu0 0
        %3124 = vmatpush1.bf16.msra.mxu0 %v3101
        %3125 = vmatprep.subr.bf16.mxu0 0
        %3126 = vmatpush1.bf16.msra.mxu0 %v3100
        %3127 = vmatprep.subr.bf16.mxu0 0
        %3128 = vmatpush2.bf16.msra.mxu0 0
        %3129 = vmatprep.subr.bf16.mxu0 0
        %3130 = vmatpush2.bf16.msra.mxu0 0
        %3131 = vmatprep.subr.bf16.mxu0 0
        %3132 = vmatpush2.bf16.msra.mxu0 0
        %3133 = vmatprep.subr.bf16.mxu0 0
        %3134 = vmatpush2.bf16.msra.mxu0 0
        %3135 = vmatprep.subr.bf16.mxu0 0
        %3136 = vmatpush2.bf16.msra.mxu0 0
        %3137 = vmatprep.subr.bf16.mxu0 0
        %3138 = vmatpush2.bf16.msra.mxu0 0
        %3139 = vmatprep.subr.bf16.mxu0 0
        %3140 = vmatpush2.bf16.msra.mxu0 0
        %3141 = vmatprep.subr.bf16.mxu0 0
        %3142 = vmatpush2.bf16.msra.mxu0 0
        %3143 = vmatprep.mubr.bf16.mxu0 0
        %3144 = vmatmul.mubr.bf16.gmra.mxu0 %v3109
        %v3145 = vpop.f32.mrf.mxu0
        %v3146 = vadd.f32 %v3082, %v3145
        %v3147 = vpop.f32.mrf.mxu0
        %v3148 = vpop.f32.mrf.mxu0
        %v3149 = vpop.f32.mrf.mxu0
        %3150 = vdwg.mxu0
        %v3151 = vmul.f32 %v3146, 0.5
        %v3152 = vmul.f32 %v3146, 0.044715
        %v3153 = vmul.f32 %v3152, %v3146
        %v3154 = vmul.f32 %v3153, %v3146
        %v3155 = vadd.f32 %v3146, %v3154
        %v3156 = vmul.f32 %v3155, 0.7978846
        %v3157 = vtanh.pop %v3156
        %v3158 = vadd.f32 %v3157, 1.0
        %v3159 = vmul.f32 %v3151, %v3158
        %v3160 = vpack.c.bf16 %v3159, %v3159
        %v3161 = vld [vmem:[%s8] sm:$0xf]
        %v3162 = vld [vmem:[%s8 + $0x4] sm:$0xf]
        %v3163 = vld [vmem:[%s8 + $0x8] sm:$0xf]
        %v3164 = vld [vmem:[%s8 + $0xc] sm:$0xf]
        %v3165 = vld [vmem:[%s8 + $0x10] sm:$0xf]
        %v3166 = vld [vmem:[%s8 + $0x14] sm:$0xf]
        %v3167 = vld [vmem:[%s8 + $0x18] sm:$0xf]
        %v3168 = vld [vmem:[%s8 + $0x1c] sm:$0xf]
        %v3169 = vld [vmem:[%s8 + $0x20] sm:$0xf]
        %v3170 = vld [vmem:[%s8 + $0x24] sm:$0xf]
        %v3171 = vld [vmem:[%s8 + $0x28] sm:$0xf]
        %v3172 = vld [vmem:[%s8 + $0x2c] sm:$0xf]
        %v3173 = vld [vmem:[%s8 + $0x30] sm:$0xf]
        %v3174 = vld [vmem:[%s8 + $0x34] sm:$0xf]
        %v3175 = vld [vmem:[%s8 + $0x38] sm:$0xf]
        %v3176 = vld [vmem:[%s8 + $0x3c] sm:$0xf]
        %v3177 = vld [vmem:[%s2 + $0x8] sm:$0x1]
        %v3179 = vlaneseq
        %v3180 = vshrl.u32 %v3179, 7
        %v3181 = vsub.s32 0, %v3180
        %v3182 = vrot.slane %v3177, %v3181
        %v3200 = vunpack.c.l.b16 %v3161
        %v3201 = vunpack.c.l.b16 %v3162
        %v3202 = vunpack.c.l.b16 %v3163
        %v3203 = vunpack.c.l.b16 %v3164
        %v3204 = vunpack.c.l.b16 %v3165
        %v3205 = vunpack.c.l.b16 %v3166
        %v3206 = vunpack.c.l.b16 %v3167
        %v3207 = vunpack.c.l.b16 %v3168
        %v3208 = vunpack.c.l.b16 %v3169
        %v3209 = vunpack.c.l.b16 %v3170
        %v3210 = vunpack.c.l.b16 %v3171
        %v3211 = vunpack.c.l.b16 %v3172
        %v3212 = vunpack.c.l.b16 %v3173
        %v3213 = vunpack.c.l.b16 %v3174
        %v3214 = vunpack.c.l.b16 %v3175
        %v3215 = vunpack.c.l.b16 %v3176
        %v3216 = vpack.c.b16 %v3201, %v3200
        %v3217 = vpack.c.b16 %v3203, %v3202
        %v3218 = vpack.c.b16 %v3205, %v3204
        %v3219 = vpack.c.b16 %v3207, %v3206
        %v3220 = vpack.c.b16 %v3209, %v3208
        %v3221 = vpack.c.b16 %v3211, %v3210
        %v3222 = vpack.c.b16 %v3213, %v3212
        %v3223 = vpack.c.b16 %v3215, %v3214
        %3232 = vmatprep.subr.bf16.mxu0 0
        %3233 = vmatpush1.bf16.msra.mxu0 %v3223
        %3234 = vmatprep.subr.bf16.mxu0 0
        %3235 = vmatpush1.bf16.msra.mxu0 %v3222
        %3236 = vmatprep.subr.bf16.mxu0 0
        %3237 = vmatpush1.bf16.msra.mxu0 %v3221
        %3238 = vmatprep.subr.bf16.mxu0 0
        %3239 = vmatpush1.bf16.msra.mxu0 %v3220
        %3240 = vmatprep.subr.bf16.mxu0 0
        %3241 = vmatpush1.bf16.msra.mxu0 %v3219
        %3242 = vmatprep.subr.bf16.mxu0 0
        %3243 = vmatpush1.bf16.msra.mxu0 %v3218
        %3244 = vmatprep.subr.bf16.mxu0 0
        %3245 = vmatpush1.bf16.msra.mxu0 %v3217
        %3246 = vmatprep.subr.bf16.mxu0 0
        %3247 = vmatpush1.bf16.msra.mxu0 %v3216
        %3248 = vmatprep.subr.bf16.mxu0 0
        %3249 = vmatpush2.bf16.msra.mxu0 0
        %3250 = vmatprep.subr.bf16.mxu0 0
        %3251 = vmatpush2.bf16.msra.mxu0 0
        %3252 = vmatprep.subr.bf16.mxu0 0
        %3253 = vmatpush2.bf16.msra.mxu0 0
        %3254 = vmatprep.subr.bf16.mxu0 0
        %3255 = vmatpush2.bf16.msra.mxu0 0
        %3256 = vmatprep.subr.bf16.mxu0 0
        %3257 = vmatpush2.bf16.msra.mxu0 0
        %3258 = vmatprep.subr.bf16.mxu0 0
        %3259 = vmatpush2.bf16.msra.mxu0 0
        %3260 = vmatprep.subr.bf16.mxu0 0
        %3261 = vmatpush2.bf16.msra.mxu0 0
        %3262 = vmatprep.subr.bf16.mxu0 0
        %3263 = vmatpush2.bf16.msra.mxu0 0
        %3264 = vmatprep.mubr.bf16.mxu0 0
        %3265 = vmatmul.mubr.bf16.gmra.mxu0 %v3160
        %v3266 = vpop.f32.mrf.mxu0
        %v3267 = vadd.f32 %v3182, %v3266
        %v3268 = vpop.f32.mrf.mxu0
        %v3269 = vpop.f32.mrf.mxu0
        %v3270 = vpop.f32.mrf.mxu0
        %3271 = vdwg.mxu0
        %v3272 = vadd.f32 %v3037, %v3267
        %3273 = vst.msk [vmem:[%s338] sm:$0xff] %vm3014, %v3272
        %s3274 = sand.u32 %s230, 1
        %s3275 = scalar_lea.sflag [#allocation3], %s3274
        %s3276 = sand.u32 %s230, 1
        %s3277 = smul.addr %s3276, 8
        %s3278 = scalar_lea.vmem [#allocation2], %s3277
        // Predicated region
        $region57: #{tpu_custom_call.1} parent=55 // pred_check
          %p3279 = pneg %p240
        $region58: #{tpu_custom_call.1} parent=55 // pred_check_branch
          %3281 = sbr.rel (%p3279) target = $region60
        $region59: #{tpu_custom_call.1} parent=55 // pred_region
          %s3283 = ssub.s32 128, 128
          %3284 = vsyncadd %s3275, %s3283
          %s3285 = smul.addr %s23, 128
          %s3286 = scalar_lea.hbm %s9, %s3285
          %s3288 = sshll.u32 %s3278, 4
          %s3289 = int_to_ptr.vmem [resolvable:$true] %s3288
          %3291 = dma.vmem_to_hbm [thread:$0]  %s3289, 128, %s3286, %s3275
        $region60: #{tpu_custom_call.1} parent=55 // pred_fallthru
          _
      $region56: #{tpu_custom_call.1} parent=5 // pred_fallthru
        _
      %p3292 = scmp.le.s32.totalorder 2, %s18
      // Predicated region
      $region61: #{tpu_custom_call.1} parent=5 // pred_check
        %p3293 = pneg %p3292
      $region62: #{tpu_custom_call.1} parent=5 // pred_check_branch
        %3295 = sbr.rel (%p3293) target = $region64
      $region63: #{tpu_custom_call.1} parent=5 // pred_region
        %s3296 = ssub.s32 %s18, 2
        // Predicated region
        $region65: #{tpu_custom_call.1} parent=63 // pred_check
          %p3297 = pneg %p246
        $region66: #{tpu_custom_call.1} parent=63 // pred_check_branch
          %3299 = sbr.rel (%p3297) target = $region68
        $region67: #{tpu_custom_call.1} parent=63 // pred_region
          %s3300 = sand.u32 %s231, 1
          %s3301 = scalar_lea.sflag [#allocation3], %s3300
          %s3302 = sand.u32 %s231, 1
          %s3303 = smul.addr %s3302, 8
          %s3304 = scalar_lea.vmem [#allocation2], %s3303
          %3305 = dma.done %s3301, 128
        $region68: #{tpu_custom_call.1} parent=63 // pred_fallthru
          _
      $region64: #{tpu_custom_call.1} parent=5 // pred_fallthru
        _
    $region6: #{tpu_custom_call.1} parent=1 // loop_footer
      %s22 = sadd.s32 1, %s18
    $region7: #{tpu_custom_call.1} parent=1 // loop_footer_branch
      %17 = sbr.rel target = $region3
    $region8: #{tpu_custom_call.1} parent=1 // loop_exit
      _
    %3306 = vsyncpa [#allocation3], 1
    %s3307 = scalar_lea.sflag [#allocation3], 1
    %3308 = vsyncpa %s3307, 1

</llo_original>
